<compile_context>
chip_gen: v7x
topology: tpu7x:2x2x1
jax: 0.10.0
libtpu: 0.0.40
codegen_flags: <defaults>
</compile_context>

<pallas_src>
import jax
import jax.numpy as jnp
from jax.experimental import pallas as pl
from jax.experimental.pallas import tpu as pltpu


N1, N2, N3 = 240, 224, 192   # rows computed per layer (>= last valid row + 1)
C1_OFFS = (0, 1, 16, 17)     # x4d row offsets of the 4 merged conv1 GEMMs


# ------------------------------- the kernel --------------------------------

def _actor_kernel(x_ref, w1_ref, b1_ref, w2_ref, b2_ref, w3_ref, b3_ref,
                  wfc_ref, bfc_ref, probs_ref, hidden_ref, h1_ref, h2_ref):
    f32 = jnp.float32
    bf16 = jnp.bfloat16

    # Only the tail rows of h1 that conv2's off=17 slice can reach (row 240)
    # are never written by conv1; zero exactly that tail (finite-junk * zero
    # fc weight is safe, NaN/Inf * 0 is not).  h2 needs no tail zeroing: with
    # the replicated layout conv3 only reads rows [0, 224).
    h1_ref[N1:256, :] = jnp.zeros((256 - N1, 128), bf16)

    # ---- conv1 (k=8, s=4): 4 GEMMs (N1,256)@(256,128), one per row offset --
    acc = jnp.broadcast_to(b1_ref[...].astype(f32), (N1, 128))
    for i, off in enumerate(C1_OFFS):
        acc = acc + jnp.dot(x_ref[off:off + N1, :], w1_ref[i],
                            preferred_element_type=f32)
    h1_ref[0:N1, :] = jnp.maximum(acc, 0.0).astype(bf16)

    # ---- conv2 (k=4, s=2): 4 GEMMs (N2,128)@(128,64) -----------------------
    acc = jnp.broadcast_to(b2_ref[...].astype(f32), (N2, 64))
    for kh2 in range(2):
        for kw2 in range(2):
            off = kh2 * 16 + kw2
            acc = acc + jnp.dot(h1_ref[off:off + N2, :], w2_ref[kh2, kw2],
                                preferred_element_type=f32)
    v2 = jnp.maximum(acc, 0.0).astype(bf16)                        # (N2,64)

    # h2 in a kw-replicated layout: cols [0:64)=h2, [64:128)=h2 shifted one
    # row, [128:192)=shifted two, so each conv3 kh becomes ONE aligned GEMM.
    h2_ref[0:N2, 0:64] = v2
    h2_ref[N2:N2 + 8, 0:64] = jnp.zeros((8, 64), bf16)   # zero extension rows
    h2_ref[0:N2, 64:128] = h2_ref[1:N2 + 1, 0:64]
    h2_ref[0:N2, 128:192] = h2_ref[2:N2 + 2, 0:64]

    # ---- conv3 (k=3, s=1): 3 GEMMs (N3,192)@(192,64), 16-aligned offsets ---
    acc = jnp.broadcast_to(b3_ref[...].astype(f32), (N3, 64))
    for kh in range(3):
        off = kh * 16
        acc = acc + jnp.dot(h2_ref[off:off + N3, :], w3_ref[kh],
                            preferred_element_type=f32)
    h3 = jnp.maximum(acc, 0.0)                                     # (N3,64) f32

    # ---- fc (9216 -> 5) + softmax on the VPU -------------------------------
    # wfc is pre-permuted to h3's (row=spatial, col=channel) layout and zeroed
    # at padded rows, so the Linear is 5 masked dot-product reductions.
    hid = bfc_ref[...].astype(f32)                                 # (1, 5)
    lane = jax.lax.broadcasted_iota(jnp.int32, (1, 5), 1)
    for n in range(5):
        s_n = jnp.sum(h3 * wfc_ref[n].astype(f32))
        hid = hid + jnp.where(lane == n, s_n, 0.0)
    m = jnp.max(hid, axis=-1, keepdims=True)
    e = jnp.exp(hid - m)
    probs_ref[...] = e / jnp.sum(e, axis=-1, keepdims=True)
    hidden_ref[...] = hid


# ------------------------------ JAX wrapper ---------------------------------

@jax.jit
def actor_net_forward(params, x_chw):
    """params: output of prepare_params();  x_chw: (4, 124, 124) float32."""
    # Cast to bf16 FIRST so the space-to-depth transpose moves half the bytes.
    x = x_chw.astype(jnp.bfloat16)
    xp = jnp.pad(x, ((0, 0), (0, 4), (0, 4)))                      # (4,128,128)
    xr = xp.reshape(4, 16, 2, 4, 16, 2, 4)                         # ci,a,uh,rh,b,uw,rw
    x4d = xr.transpose(1, 4, 2, 5, 3, 6, 0).reshape(256, 256)      # row=a*16+b
    x4d = jnp.pad(x4d, ((0, 16), (0, 0)))                          # (272,256) bf16

    vmem = pl.BlockSpec(memory_space=pltpu.MemorySpace.VMEM)
    probs, hidden = pl.pallas_call(
        _actor_kernel,
        out_shape=(jax.ShapeDtypeStruct((1, 5), jnp.float32),
                   jax.ShapeDtypeStruct((1, 5), jnp.float32)),
        in_specs=[vmem] * 9,
        out_specs=(vmem, vmem),
        scratch_shapes=[pltpu.VMEM((256, 128), jnp.bfloat16),   # h1
                        pltpu.VMEM((N2 + 8, 192), jnp.bfloat16)],  # h2 (kw-replicated)
    )(x4d, params["w1"], params["b1"], params["w2"], params["b2"],
      params["w3"], params["b3"], params["wfc"], params["bfc"])

    # TODO(synk): torch.distributions.Categorical has no JAX/Pallas object
    # equivalent; return its `probs` (= softmax(hidden)) in its place.
    return probs[0], hidden[0]


def prepare_params(p):
    """One-time transform of PyTorch-layout params into kernel-ready form."""
    bf16 = jnp.bfloat16
    # conv1 (32,4,8,8): kh=4*qh+rh, kw=4*qw+rw -> per-tap (qh,qw, rh*16+rw*4+ci, co),
    # then merge all 16 (output-parity, macro-tap) blocks into 4 zero-padded
    # (256,128) GEMM weights, one per x4d row offset in C1_OFFS.
    w1t = p["conv1_w"].reshape(32, 4, 2, 4, 2, 4)                  # co,ci,qh,rh,qw,rw
    w1t = w1t.transpose(2, 4, 3, 5, 1, 0).reshape(2, 2, 64, 32)    # qh,qw,(rh rw ci),co
    off_idx = {o: i for i, o in enumerate(C1_OFFS)}
    w1 = jnp.zeros((4, 256, 128), jnp.float32)
    for ph in range(2):
        for pw in range(2):
            for qh in range(2):
                for qw in range(2):
                    sh, sw = ph + qh, pw + qw
                    oi = off_idx[(sh // 2) * 16 + (sw // 2)]
                    u = (sh % 2) * 2 + (sw % 2)                    # x4d phase block
                    c = (ph * 2 + pw) * 32                         # h1 parity block
                    w1 = w1.at[oi, u * 64:(u + 1) * 64, c:c + 32].set(w1t[qh, qw])
    w1 = w1.astype(bf16)
    b1 = jnp.tile(p["conv1_b"], 4).reshape(1, 128).astype(jnp.float32)

    # conv2 (64,32,4,4): concatenate the four parity taps of each (kh//2,kw//2)
    # along ci so conv2 is 4 GEMMs at K=128.
    w2 = p["conv2_w"].transpose(2, 3, 1, 0)                        # (kh,kw,ci,co)
    w2 = w2.reshape(2, 2, 2, 2, 32, 64).transpose(0, 2, 1, 3, 4, 5)
    w2 = w2.reshape(2, 2, 128, 64).astype(bf16)                    # (kh2,kw2,128,64)

    # conv3 (64,64,3,3): concatenate the three kw taps of each kh (matches the
    # kw-replicated h2 layout) so conv3 is 3 GEMMs at K=192.
    w3 = p["conv3_w"].transpose(2, 3, 1, 0).reshape(3, 192, 64).astype(bf16)

    # fc (5, 9216) with flatten order (c, h, w) -> (n, h*16+w, c), zero-padded
    # at h>=12 / w>=12 so junk activation rows contribute nothing.
    wfc = p["fc_w"].reshape(5, 64, 12, 12).transpose(0, 2, 3, 1)   # (5,12,12,64)
    wfc = jnp.pad(wfc, ((0, 0), (0, 4), (0, 4), (0, 0)))           # (5,16,16,64)
    wfc = wfc.reshape(5, 256, 64)[:, :N3, :].astype(bf16)          # (5,192,64)
    return {
        "w1": w1, "b1": b1,
        "w2": w2, "b2": p["conv2_b"].reshape(1, 64).astype(jnp.float32),
        "w3": w3, "b3": p["conv3_b"].reshape(1, 64).astype(jnp.float32),
        "wfc": wfc, "bfc": p["fc_b"].reshape(1, 5).astype(jnp.float32),
    }


def init_params(key):
    ks = jax.random.split(key, 7)

    def u(k, shape, bound):
        return jax.random.uniform(k, shape, jnp.float32, -bound, bound)

    p = {}
    # Conv layers: PyTorch default-style bounds (1/sqrt(fan_in)), PyTorch
    # layout (Cout, Cin, K, K).
    p["conv1_w"] = u(ks[0], (32, 4, 8, 8), 1.0 / (4 * 8 * 8) ** 0.5)
    p["conv1_b"] = u(ks[1], (32,), 1.0 / (4 * 8 * 8) ** 0.5)
    p["conv2_w"] = u(ks[2], (64, 32, 4, 4), 1.0 / (32 * 4 * 4) ** 0.5)
    p["conv2_b"] = u(ks[3], (64,), 1.0 / (32 * 4 * 4) ** 0.5)
    p["conv3_w"] = u(ks[4], (64, 64, 3, 3), 1.0 / (64 * 3 * 3) ** 0.5)
    p["conv3_b"] = u(ks[5], (64,), 1.0 / (64 * 3 * 3) ** 0.5)
    # init_weights: Linear weight ~ U(-3e-4, 3e-4), bias filled with 1e-4.
    p["fc_w"] = u(ks[6], (5, 64 * 12 * 12), 3 * 1e-4)
    p["fc_b"] = jnp.full((5,), 1e-4, jnp.float32)
    return p


def reference_forward(p, x_chw):
    """Pure-JAX reference of the PyTorch forward (f32, lax.conv)."""
    x = x_chw.astype(jnp.float32)[None]                            # (1,4,124,124)

    def conv(h, w, b, stride):
        y = jax.lax.conv_general_dilated(
            h, w, (stride, stride), "VALID",
            dimension_numbers=("NCHW", "OIHW", "NCHW"))
        return jax.nn.relu(y + b.reshape(1, -1, 1, 1))

    h = conv(x, p["conv1_w"], p["conv1_b"], 4)
    h = conv(h, p["conv2_w"], p["conv2_b"], 2)
    h = conv(h, p["conv3_w"], p["conv3_b"], 1)
    flat = h[0].reshape(-1)                                        # (9216,) C,H,W
    hidden = p["fc_w"] @ flat + p["fc_b"]
    probs = jax.nn.softmax(hidden)
    return probs, hidden


if __name__ == "__main__":
    key = jax.random.PRNGKey(0)
    pkey, xkey = jax.random.split(key)
    raw = init_params(pkey)
    params = prepare_params(raw)

    # Unbatched CHW input; spatial 124x124 is dictated by Linear(64*12*12, 5).
    x = jax.random.uniform(xkey, (4, 124, 124), jnp.float32)

    probs, hidden = actor_net_forward(params, x)
    jax.block_until_ready((probs, hidden))

    assert hidden.shape == (5,) and hidden.dtype == jnp.float32
    assert probs.shape == (5,)
    assert bool(jnp.all(jnp.isfinite(hidden)))
    assert bool(jnp.all(probs >= 0.0))
    assert bool(jnp.isclose(jnp.sum(probs), 1.0, atol=1e-5))

    # Pure-JAX reference check.  The spec fc init (U(+-3e-4)) makes `hidden`
    # ~1e-4, so validate layout math with a scaled-up fc weight where bf16
    # activation noise (<~1%) sits far below the tolerance.  The reference
    # uses the same bf16-rounded weights/input so only activation rounding
    # and accumulation order differ.
    raw_val = dict(raw)
    raw_val["fc_w"] = raw["fc_w"] * 100.0
    raw_val["fc_b"] = jnp.full((5,), 1e-2, jnp.float32)
    probs_k, hidden_k = actor_net_forward(prepare_params(raw_val), x)
    p_ref = {k: (v.astype(jnp.bfloat16).astype(jnp.float32) if k.endswith("_w") else v)
             for k, v in raw_val.items()}
    x_ref = x.astype(jnp.bfloat16).astype(jnp.float32)
    probs_r, hidden_r = reference_forward(p_ref, x_ref)
    tol = 5e-3 + 5e-2 * float(jnp.max(jnp.abs(hidden_r)))
    assert float(jnp.max(jnp.abs(hidden_k - hidden_r))) < tol, (
        hidden_k, hidden_r)

    print("KERNEL_OK")
</pallas_src>

<mosaic_0001>
module attributes {stable_mosaic.version = 11 : i64} {
  func.func @_actor_kernel(%arg0: memref<272x256xbf16, #tpu.memory_space<vmem>>, %arg1: memref<4x256x128xbf16, #tpu.memory_space<vmem>>, %arg2: memref<1x128xf32, #tpu.memory_space<vmem>>, %arg3: memref<2x2x128x64xbf16, #tpu.memory_space<vmem>>, %arg4: memref<1x64xf32, #tpu.memory_space<vmem>>, %arg5: memref<3x192x64xbf16, #tpu.memory_space<vmem>>, %arg6: memref<1x64xf32, #tpu.memory_space<vmem>>, %arg7: memref<5x192x64xbf16, #tpu.memory_space<vmem>>, %arg8: memref<1x5xf32, #tpu.memory_space<vmem>>, %arg9: memref<1x5xf32, #tpu.memory_space<vmem>>, %arg10: memref<1x5xf32, #tpu.memory_space<vmem>>, %arg11: memref<256x128xbf16, #tpu.memory_space<vmem>>, %arg12: memref<232x192xbf16, #tpu.memory_space<vmem>>) attributes {dimension_semantics = [], scalar_prefetch = 0 : i64, scratch_operands = 2 : i64, tpu.core_type = #tpu.core_type<tc>} {
    %cst = arith.constant 0.000000e+00 : bf16
    %0 = vector.broadcast %cst : bf16 to vector<16x128xbf16>
    %c240 = arith.constant 240 : index
    %c0 = arith.constant 0 : index
    %1 = vector.load %arg11[%c240, %c0] : memref<256x128xbf16, #tpu.memory_space<vmem>>, vector<16x128xbf16>
    tpu.vector_store %arg11[%c240, %c0], %0 {strides = array<i32>} : memref<256x128xbf16, #tpu.memory_space<vmem>>, vector<16x128xbf16>,
    %c0_0 = arith.constant 0 : index
    %c0_1 = arith.constant 0 : index
    %2 = vector.load %arg2[%c0_0, %c0_1] : memref<1x128xf32, #tpu.memory_space<vmem>>, vector<1x128xf32>
    %3 = vector.shape_cast %2 : vector<1x128xf32> to vector<1x128xf32>
    %4 = vector.broadcast %3 : vector<1x128xf32> to vector<240x128xf32>
    %c0_2 = arith.constant 0 : index
    %c0_3 = arith.constant 0 : index
    %5 = vector.load %arg0[%c0_2, %c0_3] : memref<272x256xbf16, #tpu.memory_space<vmem>>, vector<240x256xbf16>
    %c0_4 = arith.constant 0 : index
    %c0_5 = arith.constant 0 : index
    %c0_6 = arith.constant 0 : index
    %6 = vector.load %arg1[%c0_4, %c0_5, %c0_6] : memref<4x256x128xbf16, #tpu.memory_space<vmem>>, vector<1x256x128xbf16>
    %7 = vector.shape_cast %6 : vector<1x256x128xbf16> to vector<256x128xbf16>
    %cst_7 = arith.constant dense<0.000000e+00> : vector<240x128xf32>
    %8 = tpu.matmul %5, %7, %cst_7 {dimension_numbers = #tpu.dot_dimension_numbers<[1], [0], [0], [1], [0, 0, 1, 1], [], []>} : vector<240x256xbf16>, vector<256x128xbf16>, vector<240x128xf32> -> vector<240x128xf32>
    %9 = arith.addf %4, %8 : vector<240x128xf32>
    %c1 = arith.constant 1 : index
    %c0_8 = arith.constant 0 : index
    %10 = vector.load %arg0[%c1, %c0_8] : memref<272x256xbf16, #tpu.memory_space<vmem>>, vector<240x256xbf16>
    %c1_9 = arith.constant 1 : index
    %c0_10 = arith.constant 0 : index
    %c0_11 = arith.constant 0 : index
    %11 = vector.load %arg1[%c1_9, %c0_10, %c0_11] : memref<4x256x128xbf16, #tpu.memory_space<vmem>>, vector<1x256x128xbf16>
    %12 = vector.shape_cast %11 : vector<1x256x128xbf16> to vector<256x128xbf16>
    %cst_12 = arith.constant dense<0.000000e+00> : vector<240x128xf32>
    %13 = tpu.matmul %10, %12, %cst_12 {dimension_numbers = #tpu.dot_dimension_numbers<[1], [0], [0], [1], [0, 0, 1, 1], [], []>} : vector<240x256xbf16>, vector<256x128xbf16>, vector<240x128xf32> -> vector<240x128xf32>
    %14 = arith.addf %9, %13 : vector<240x128xf32>
    %c16 = arith.constant 16 : index
    %c0_13 = arith.constant 0 : index
    %15 = vector.load %arg0[%c16, %c0_13] : memref<272x256xbf16, #tpu.memory_space<vmem>>, vector<240x256xbf16>
    %c2 = arith.constant 2 : index
    %c0_14 = arith.constant 0 : index
    %c0_15 = arith.constant 0 : index
    %16 = vector.load %arg1[%c2, %c0_14, %c0_15] : memref<4x256x128xbf16, #tpu.memory_space<vmem>>, vector<1x256x128xbf16>
    %17 = vector.shape_cast %16 : vector<1x256x128xbf16> to vector<256x128xbf16>
    %cst_16 = arith.constant dense<0.000000e+00> : vector<240x128xf32>
    %18 = tpu.matmul %15, %17, %cst_16 {dimension_numbers = #tpu.dot_dimension_numbers<[1], [0], [0], [1], [0, 0, 1, 1], [], []>} : vector<240x256xbf16>, vector<256x128xbf16>, vector<240x128xf32> -> vector<240x128xf32>
    %19 = arith.addf %14, %18 : vector<240x128xf32>
    %c17 = arith.constant 17 : index
    %c0_17 = arith.constant 0 : index
    %20 = vector.load %arg0[%c17, %c0_17] : memref<272x256xbf16, #tpu.memory_space<vmem>>, vector<240x256xbf16>
    %c3 = arith.constant 3 : index
    %c0_18 = arith.constant 0 : index
    %c0_19 = arith.constant 0 : index
    %21 = vector.load %arg1[%c3, %c0_18, %c0_19] : memref<4x256x128xbf16, #tpu.memory_space<vmem>>, vector<1x256x128xbf16>
    %22 = vector.shape_cast %21 : vector<1x256x128xbf16> to vector<256x128xbf16>
    %cst_20 = arith.constant dense<0.000000e+00> : vector<240x128xf32>
    %23 = tpu.matmul %20, %22, %cst_20 {dimension_numbers = #tpu.dot_dimension_numbers<[1], [0], [0], [1], [0, 0, 1, 1], [], []>} : vector<240x256xbf16>, vector<256x128xbf16>, vector<240x128xf32> -> vector<240x128xf32>
    %24 = arith.addf %19, %23 : vector<240x128xf32>
    %cst_21 = arith.constant 0.000000e+00 : f32
    %25 = vector.broadcast %cst_21 : f32 to vector<240x128xf32>
    %26 = arith.maximumf %24, %25 : vector<240x128xf32>
    %27 = arith.truncf %26 : vector<240x128xf32> to vector<240x128xbf16>
    %c0_22 = arith.constant 0 : index
    %c0_23 = arith.constant 0 : index
    %28 = vector.load %arg11[%c0_22, %c0_23] : memref<256x128xbf16, #tpu.memory_space<vmem>>, vector<240x128xbf16>
    tpu.vector_store %arg11[%c0_22, %c0_23], %27 {strides = array<i32>} : memref<256x128xbf16, #tpu.memory_space<vmem>>, vector<240x128xbf16>,
    %c0_24 = arith.constant 0 : index
    %c0_25 = arith.constant 0 : index
    %29 = vector.load %arg4[%c0_24, %c0_25] : memref<1x64xf32, #tpu.memory_space<vmem>>, vector<1x64xf32>
    %30 = vector.shape_cast %29 : vector<1x64xf32> to vector<1x64xf32>
    %31 = vector.broadcast %30 : vector<1x64xf32> to vector<224x64xf32>
    %c0_26 = arith.constant 0 : index
    %c0_27 = arith.constant 0 : index
    %32 = vector.load %arg11[%c0_26, %c0_27] : memref<256x128xbf16, #tpu.memory_space<vmem>>, vector<224x128xbf16>
    %c0_28 = arith.constant 0 : index
    %c0_29 = arith.constant 0 : index
    %c0_30 = arith.constant 0 : index
    %c0_31 = arith.constant 0 : index
    %33 = vector.load %arg3[%c0_28, %c0_29, %c0_30, %c0_31] : memref<2x2x128x64xbf16, #tpu.memory_space<vmem>>, vector<1x1x128x64xbf16>
    %34 = vector.shape_cast %33 : vector<1x1x128x64xbf16> to vector<128x64xbf16>
    %cst_32 = arith.constant dense<0.000000e+00> : vector<224x64xf32>
    %35 = tpu.matmul %32, %34, %cst_32 {dimension_numbers = #tpu.dot_dimension_numbers<[1], [0], [0], [1], [0, 0, 1, 1], [], []>} : vector<224x128xbf16>, vector<128x64xbf16>, vector<224x64xf32> -> vector<224x64xf32>
    %36 = arith.addf %31, %35 : vector<224x64xf32>
    %c1_33 = arith.constant 1 : index
    %c0_34 = arith.constant 0 : index
    %37 = vector.load %arg11[%c1_33, %c0_34] : memref<256x128xbf16, #tpu.memory_space<vmem>>, vector<224x128xbf16>
    %c0_35 = arith.constant 0 : index
    %c1_36 = arith.constant 1 : index
    %c0_37 = arith.constant 0 : index
    %c0_38 = arith.constant 0 : index
    %38 = vector.load %arg3[%c0_35, %c1_36, %c0_37, %c0_38] : memref<2x2x128x64xbf16, #tpu.memory_space<vmem>>, vector<1x1x128x64xbf16>
    %39 = vector.shape_cast %38 : vector<1x1x128x64xbf16> to vector<128x64xbf16>
    %cst_39 = arith.constant dense<0.000000e+00> : vector<224x64xf32>
    %40 = tpu.matmul %37, %39, %cst_39 {dimension_numbers = #tpu.dot_dimension_numbers<[1], [0], [0], [1], [0, 0, 1, 1], [], []>} : vector<224x128xbf16>, vector<128x64xbf16>, vector<224x64xf32> -> vector<224x64xf32>
    %41 = arith.addf %36, %40 : vector<224x64xf32>
    %c16_40 = arith.constant 16 : index
    %c0_41 = arith.constant 0 : index
    %42 = vector.load %arg11[%c16_40, %c0_41] : memref<256x128xbf16, #tpu.memory_space<vmem>>, vector<224x128xbf16>
    %c1_42 = arith.constant 1 : index
    %c0_43 = arith.constant 0 : index
    %c0_44 = arith.constant 0 : index
    %c0_45 = arith.constant 0 : index
    %43 = vector.load %arg3[%c1_42, %c0_43, %c0_44, %c0_45] : memref<2x2x128x64xbf16, #tpu.memory_space<vmem>>, vector<1x1x128x64xbf16>
    %44 = vector.shape_cast %43 : vector<1x1x128x64xbf16> to vector<128x64xbf16>
    %cst_46 = arith.constant dense<0.000000e+00> : vector<224x64xf32>
    %45 = tpu.matmul %42, %44, %cst_46 {dimension_numbers = #tpu.dot_dimension_numbers<[1], [0], [0], [1], [0, 0, 1, 1], [], []>} : vector<224x128xbf16>, vector<128x64xbf16>, vector<224x64xf32> -> vector<224x64xf32>
    %46 = arith.addf %41, %45 : vector<224x64xf32>
    %c17_47 = arith.constant 17 : index
    %c0_48 = arith.constant 0 : index
    %47 = vector.load %arg11[%c17_47, %c0_48] : memref<256x128xbf16, #tpu.memory_space<vmem>>, vector<224x128xbf16>
    %c1_49 = arith.constant 1 : index
    %c1_50 = arith.constant 1 : index
    %c0_51 = arith.constant 0 : index
    %c0_52 = arith.constant 0 : index
    %48 = vector.load %arg3[%c1_49, %c1_50, %c0_51, %c0_52] : memref<2x2x128x64xbf16, #tpu.memory_space<vmem>>, vector<1x1x128x64xbf16>
    %49 = vector.shape_cast %48 : vector<1x1x128x64xbf16> to vector<128x64xbf16>
    %cst_53 = arith.constant dense<0.000000e+00> : vector<224x64xf32>
    %50 = tpu.matmul %47, %49, %cst_53 {dimension_numbers = #tpu.dot_dimension_numbers<[1], [0], [0], [1], [0, 0, 1, 1], [], []>} : vector<224x128xbf16>, vector<128x64xbf16>, vector<224x64xf32> -> vector<224x64xf32>
    %51 = arith.addf %46, %50 : vector<224x64xf32>
    %cst_54 = arith.constant 0.000000e+00 : f32
    %52 = vector.broadcast %cst_54 : f32 to vector<224x64xf32>
    %53 = arith.maximumf %51, %52 : vector<224x64xf32>
    %54 = arith.truncf %53 : vector<224x64xf32> to vector<224x64xbf16>
    %c0_55 = arith.constant 0 : index
    %c0_56 = arith.constant 0 : index
    %55 = vector.load %arg12[%c0_55, %c0_56] : memref<232x192xbf16, #tpu.memory_space<vmem>>, vector<224x64xbf16>
    tpu.vector_store %arg12[%c0_55, %c0_56], %54 {strides = array<i32>} : memref<232x192xbf16, #tpu.memory_space<vmem>>, vector<224x64xbf16>,
    %cst_57 = arith.constant 0.000000e+00 : bf16
    %56 = vector.broadcast %cst_57 : bf16 to vector<8x64xbf16>
    %c224 = arith.constant 224 : index
    %c0_58 = arith.constant 0 : index
    %57 = vector.load %arg12[%c224, %c0_58] : memref<232x192xbf16, #tpu.memory_space<vmem>>, vector<8x64xbf16>
    tpu.vector_store %arg12[%c224, %c0_58], %56 {strides = array<i32>} : memref<232x192xbf16, #tpu.memory_space<vmem>>, vector<8x64xbf16>,
    %c1_59 = arith.constant 1 : index
    %c0_60 = arith.constant 0 : index
    %58 = vector.load %arg12[%c1_59, %c0_60] : memref<232x192xbf16, #tpu.memory_space<vmem>>, vector<224x64xbf16>
    %c0_61 = arith.constant 0 : index
    %c64 = arith.constant 64 : index
    %59 = vector.load %arg12[%c0_61, %c64] : memref<232x192xbf16, #tpu.memory_space<vmem>>, vector<224x64xbf16>
    tpu.vector_store %arg12[%c0_61, %c64], %58 {strides = array<i32>} : memref<232x192xbf16, #tpu.memory_space<vmem>>, vector<224x64xbf16>,
    %c2_62 = arith.constant 2 : index
    %c0_63 = arith.constant 0 : index
    %60 = vector.load %arg12[%c2_62, %c0_63] : memref<232x192xbf16, #tpu.memory_space<vmem>>, vector<224x64xbf16>
    %c0_64 = arith.constant 0 : index
    %c128 = arith.constant 128 : index
    %61 = vector.load %arg12[%c0_64, %c128] : memref<232x192xbf16, #tpu.memory_space<vmem>>, vector<224x64xbf16>
    tpu.vector_store %arg12[%c0_64, %c128], %60 {strides = array<i32>} : memref<232x192xbf16, #tpu.memory_space<vmem>>, vector<224x64xbf16>,
    %c0_65 = arith.constant 0 : index
    %c0_66 = arith.constant 0 : index
    %62 = vector.load %arg6[%c0_65, %c0_66] : memref<1x64xf32, #tpu.memory_space<vmem>>, vector<1x64xf32>
    %63 = vector.shape_cast %62 : vector<1x64xf32> to vector<1x64xf32>
    %64 = vector.broadcast %63 : vector<1x64xf32> to vector<192x64xf32>
    %c0_67 = arith.constant 0 : index
    %c0_68 = arith.constant 0 : index
    %65 = vector.load %arg12[%c0_67, %c0_68] : memref<232x192xbf16, #tpu.memory_space<vmem>>, vector<192x192xbf16>
    %c0_69 = arith.constant 0 : index
    %c0_70 = arith.constant 0 : index
    %c0_71 = arith.constant 0 : index
    %66 = vector.load %arg5[%c0_69, %c0_70, %c0_71] : memref<3x192x64xbf16, #tpu.memory_space<vmem>>, vector<1x192x64xbf16>
    %67 = vector.shape_cast %66 : vector<1x192x64xbf16> to vector<192x64xbf16>
    %cst_72 = arith.constant dense<0.000000e+00> : vector<192x64xf32>
    %68 = tpu.matmul %65, %67, %cst_72 {dimension_numbers = #tpu.dot_dimension_numbers<[1], [0], [0], [1], [0, 0, 1, 1], [], []>} : vector<192x192xbf16>, vector<192x64xbf16>, vector<192x64xf32> -> vector<192x64xf32>
    %69 = arith.addf %64, %68 : vector<192x64xf32>
    %c16_73 = arith.constant 16 : index
    %c0_74 = arith.constant 0 : index
    %70 = vector.load %arg12[%c16_73, %c0_74] : memref<232x192xbf16, #tpu.memory_space<vmem>>, vector<192x192xbf16>
    %c1_75 = arith.constant 1 : index
    %c0_76 = arith.constant 0 : index
    %c0_77 = arith.constant 0 : index
    %71 = vector.load %arg5[%c1_75, %c0_76, %c0_77] : memref<3x192x64xbf16, #tpu.memory_space<vmem>>, vector<1x192x64xbf16>
    %72 = vector.shape_cast %71 : vector<1x192x64xbf16> to vector<192x64xbf16>
    %cst_78 = arith.constant dense<0.000000e+00> : vector<192x64xf32>
    %73 = tpu.matmul %70, %72, %cst_78 {dimension_numbers = #tpu.dot_dimension_numbers<[1], [0], [0], [1], [0, 0, 1, 1], [], []>} : vector<192x192xbf16>, vector<192x64xbf16>, vector<192x64xf32> -> vector<192x64xf32>
    %74 = arith.addf %69, %73 : vector<192x64xf32>
    %c32 = arith.constant 32 : index
    %c0_79 = arith.constant 0 : index
    %75 = vector.load %arg12[%c32, %c0_79] : memref<232x192xbf16, #tpu.memory_space<vmem>>, vector<192x192xbf16>
    %c2_80 = arith.constant 2 : index
    %c0_81 = arith.constant 0 : index
    %c0_82 = arith.constant 0 : index
    %76 = vector.load %arg5[%c2_80, %c0_81, %c0_82] : memref<3x192x64xbf16, #tpu.memory_space<vmem>>, vector<1x192x64xbf16>
    %77 = vector.shape_cast %76 : vector<1x192x64xbf16> to vector<192x64xbf16>
    %cst_83 = arith.constant dense<0.000000e+00> : vector<192x64xf32>
    %78 = tpu.matmul %75, %77, %cst_83 {dimension_numbers = #tpu.dot_dimension_numbers<[1], [0], [0], [1], [0, 0, 1, 1], [], []>} : vector<192x192xbf16>, vector<192x64xbf16>, vector<192x64xf32> -> vector<192x64xf32>
    %79 = arith.addf %74, %78 : vector<192x64xf32>
    %cst_84 = arith.constant 0.000000e+00 : f32
    %80 = vector.broadcast %cst_84 : f32 to vector<192x64xf32>
    %81 = arith.maximumf %79, %80 : vector<192x64xf32>
    %c0_85 = arith.constant 0 : index
    %c0_86 = arith.constant 0 : index
    %82 = vector.load %arg8[%c0_85, %c0_86] : memref<1x5xf32, #tpu.memory_space<vmem>>, vector<1x5xf32>
    %83 = tpu.iota {dimensions = array<i32: 1>} : vector<1x5xi32>
    %c0_87 = arith.constant 0 : index
    %c0_88 = arith.constant 0 : index
    %c0_89 = arith.constant 0 : index
    %84 = vector.load %arg7[%c0_87, %c0_88, %c0_89] : memref<5x192x64xbf16, #tpu.memory_space<vmem>>, vector<1x192x64xbf16>
    %85 = vector.shape_cast %84 : vector<1x192x64xbf16> to vector<192x64xbf16>
    %86 = arith.extf %85 : vector<192x64xbf16> to vector<192x64xf32>
    %87 = arith.mulf %81, %86 : vector<192x64xf32>
    %88 = vector.shape_cast %87 : vector<192x64xf32> to vector<1x192x64xf32>
    %cst_90 = arith.constant dense<0.000000e+00> : vector<1xf32>
    %89 = vector.multi_reduction <add>, %88, %cst_90 [1, 2] : vector<1x192x64xf32> to vector<1xf32>
    %90 = vector.shape_cast %89 : vector<1xf32> to vector<1x1x1xf32>
    %91 = vector.extract %90[0, 0, 0] : f32 from vector<1x1x1xf32>
    %c0_i32 = arith.constant 0 : i32
    %92 = vector.broadcast %c0_i32 : i32 to vector<1x5xi32>
    %93 = arith.cmpi eq, %83, %92 : vector<1x5xi32>
    %cst_91 = arith.constant 0.000000e+00 : f32
    %94 = vector.broadcast %91 : f32 to vector<1x5xf32>
    %95 = vector.broadcast %cst_91 : f32 to vector<1x5xf32>
    %96 = arith.select %93, %94, %95 : vector<1x5xi1>, vector<1x5xf32>
    %97 = arith.addf %82, %96 : vector<1x5xf32>
    %c1_92 = arith.constant 1 : index
    %c0_93 = arith.constant 0 : index
    %c0_94 = arith.constant 0 : index
    %98 = vector.load %arg7[%c1_92, %c0_93, %c0_94] : memref<5x192x64xbf16, #tpu.memory_space<vmem>>, vector<1x192x64xbf16>
    %99 = vector.shape_cast %98 : vector<1x192x64xbf16> to vector<192x64xbf16>
    %100 = arith.extf %99 : vector<192x64xbf16> to vector<192x64xf32>
    %101 = arith.mulf %81, %100 : vector<192x64xf32>
    %102 = vector.shape_cast %101 : vector<192x64xf32> to vector<1x192x64xf32>
    %cst_95 = arith.constant dense<0.000000e+00> : vector<1xf32>
    %103 = vector.multi_reduction <add>, %102, %cst_95 [1, 2] : vector<1x192x64xf32> to vector<1xf32>
    %104 = vector.shape_cast %103 : vector<1xf32> to vector<1x1x1xf32>
    %105 = vector.extract %104[0, 0, 0] : f32 from vector<1x1x1xf32>
    %c1_i32 = arith.constant 1 : i32
    %106 = vector.broadcast %c1_i32 : i32 to vector<1x5xi32>
    %107 = arith.cmpi eq, %83, %106 : vector<1x5xi32>
    %cst_96 = arith.constant 0.000000e+00 : f32
    %108 = vector.broadcast %105 : f32 to vector<1x5xf32>
    %109 = vector.broadcast %cst_96 : f32 to vector<1x5xf32>
    %110 = arith.select %107, %108, %109 : vector<1x5xi1>, vector<1x5xf32>
    %111 = arith.addf %97, %110 : vector<1x5xf32>
    %c2_97 = arith.constant 2 : index
    %c0_98 = arith.constant 0 : index
    %c0_99 = arith.constant 0 : index
    %112 = vector.load %arg7[%c2_97, %c0_98, %c0_99] : memref<5x192x64xbf16, #tpu.memory_space<vmem>>, vector<1x192x64xbf16>
    %113 = vector.shape_cast %112 : vector<1x192x64xbf16> to vector<192x64xbf16>
    %114 = arith.extf %113 : vector<192x64xbf16> to vector<192x64xf32>
    %115 = arith.mulf %81, %114 : vector<192x64xf32>
    %116 = vector.shape_cast %115 : vector<192x64xf32> to vector<1x192x64xf32>
    %cst_100 = arith.constant dense<0.000000e+00> : vector<1xf32>
    %117 = vector.multi_reduction <add>, %116, %cst_100 [1, 2] : vector<1x192x64xf32> to vector<1xf32>
    %118 = vector.shape_cast %117 : vector<1xf32> to vector<1x1x1xf32>
    %119 = vector.extract %118[0, 0, 0] : f32 from vector<1x1x1xf32>
    %c2_i32 = arith.constant 2 : i32
    %120 = vector.broadcast %c2_i32 : i32 to vector<1x5xi32>
    %121 = arith.cmpi eq, %83, %120 : vector<1x5xi32>
    %cst_101 = arith.constant 0.000000e+00 : f32
    %122 = vector.broadcast %119 : f32 to vector<1x5xf32>
    %123 = vector.broadcast %cst_101 : f32 to vector<1x5xf32>
    %124 = arith.select %121, %122, %123 : vector<1x5xi1>, vector<1x5xf32>
    %125 = arith.addf %111, %124 : vector<1x5xf32>
    %c3_102 = arith.constant 3 : index
    %c0_103 = arith.constant 0 : index
    %c0_104 = arith.constant 0 : index
    %126 = vector.load %arg7[%c3_102, %c0_103, %c0_104] : memref<5x192x64xbf16, #tpu.memory_space<vmem>>, vector<1x192x64xbf16>
    %127 = vector.shape_cast %126 : vector<1x192x64xbf16> to vector<192x64xbf16>
    %128 = arith.extf %127 : vector<192x64xbf16> to vector<192x64xf32>
    %129 = arith.mulf %81, %128 : vector<192x64xf32>
    %130 = vector.shape_cast %129 : vector<192x64xf32> to vector<1x192x64xf32>
    %cst_105 = arith.constant dense<0.000000e+00> : vector<1xf32>
    %131 = vector.multi_reduction <add>, %130, %cst_105 [1, 2] : vector<1x192x64xf32> to vector<1xf32>
    %132 = vector.shape_cast %131 : vector<1xf32> to vector<1x1x1xf32>
    %133 = vector.extract %132[0, 0, 0] : f32 from vector<1x1x1xf32>
    %c3_i32 = arith.constant 3 : i32
    %134 = vector.broadcast %c3_i32 : i32 to vector<1x5xi32>
    %135 = arith.cmpi eq, %83, %134 : vector<1x5xi32>
    %cst_106 = arith.constant 0.000000e+00 : f32
    %136 = vector.broadcast %133 : f32 to vector<1x5xf32>
    %137 = vector.broadcast %cst_106 : f32 to vector<1x5xf32>
    %138 = arith.select %135, %136, %137 : vector<1x5xi1>, vector<1x5xf32>
    %139 = arith.addf %125, %138 : vector<1x5xf32>
    %c4 = arith.constant 4 : index
    %c0_107 = arith.constant 0 : index
    %c0_108 = arith.constant 0 : index
    %140 = vector.load %arg7[%c4, %c0_107, %c0_108] : memref<5x192x64xbf16, #tpu.memory_space<vmem>>, vector<1x192x64xbf16>
    %141 = vector.shape_cast %140 : vector<1x192x64xbf16> to vector<192x64xbf16>
    %142 = arith.extf %141 : vector<192x64xbf16> to vector<192x64xf32>
    %143 = arith.mulf %81, %142 : vector<192x64xf32>
    %144 = vector.shape_cast %143 : vector<192x64xf32> to vector<1x192x64xf32>
    %cst_109 = arith.constant dense<0.000000e+00> : vector<1xf32>
    %145 = vector.multi_reduction <add>, %144, %cst_109 [1, 2] : vector<1x192x64xf32> to vector<1xf32>
    %146 = vector.shape_cast %145 : vector<1xf32> to vector<1x1x1xf32>
    %147 = vector.extract %146[0, 0, 0] : f32 from vector<1x1x1xf32>
    %c4_i32 = arith.constant 4 : i32
    %148 = vector.broadcast %c4_i32 : i32 to vector<1x5xi32>
    %149 = arith.cmpi eq, %83, %148 : vector<1x5xi32>
    %cst_110 = arith.constant 0.000000e+00 : f32
    %150 = vector.broadcast %147 : f32 to vector<1x5xf32>
    %151 = vector.broadcast %cst_110 : f32 to vector<1x5xf32>
    %152 = arith.select %149, %150, %151 : vector<1x5xi1>, vector<1x5xf32>
    %153 = arith.addf %139, %152 : vector<1x5xf32>
    %cst_111 = arith.constant dense<0xFF800000> : vector<1xf32>
    %154 = vector.multi_reduction <maximumf>, %153, %cst_111 [1] : vector<1x5xf32> to vector<1xf32>
    %155 = vector.shape_cast %154 : vector<1xf32> to vector<1x1xf32>
    %156 = vector.broadcast %155 : vector<1x1xf32> to vector<1x5xf32>
    %157 = arith.subf %153, %156 : vector<1x5xf32>
    %158 = math.exp %157 : vector<1x5xf32>
    %cst_112 = arith.constant dense<0.000000e+00> : vector<1xf32>
    %159 = vector.multi_reduction <add>, %158, %cst_112 [1] : vector<1x5xf32> to vector<1xf32>
    %160 = vector.shape_cast %159 : vector<1xf32> to vector<1x1xf32>
    %161 = vector.broadcast %160 : vector<1x1xf32> to vector<1x5xf32>
    %162 = arith.divf %158, %161 : vector<1x5xf32>
    %c0_113 = arith.constant 0 : index
    %c0_114 = arith.constant 0 : index
    %163 = vector.load %arg9[%c0_113, %c0_114] : memref<1x5xf32, #tpu.memory_space<vmem>>, vector<1x5xf32>
    tpu.vector_store %arg9[%c0_113, %c0_114], %162 {strides = array<i32>} : memref<1x5xf32, #tpu.memory_space<vmem>>, vector<1x5xf32>,
    %c0_115 = arith.constant 0 : index
    %c0_116 = arith.constant 0 : index
    %164 = vector.load %arg10[%c0_115, %c0_116] : memref<1x5xf32, #tpu.memory_space<vmem>>, vector<1x5xf32>
    tpu.vector_store %arg10[%c0_115, %c0_116], %153 {strides = array<i32>} : memref<1x5xf32, #tpu.memory_space<vmem>>, vector<1x5xf32>,
    return
  }
}

</mosaic_0001>

<llo_original>
// kernel: actor_net_forward.1
$region0: #{actor_net_forward.1}
  #allocation0 [shape = 'u32[]', space=smem, size = 0x4, offset = 0x4, fixed_abs, tag = 'smem constant byte address 0x4 - core index']
  #allocation1 [shape = 'u32[144,128]{1,0:T(1,128)}', space=vmem, size = 0x12000, scoped, tag = 'internal scratch']
  #allocation2 [shape = 'bf16[256,128]{1,0:T(16,128)(2,1)}', space=vmem, size = 0x10000, scoped, tag = 'scratch operand']
  #allocation3 [shape = 'bf16[232,192]{1,0:T(8,128)(2,1)}', space=vmem, size = 0x1d000, scoped, tag = 'scratch operand']
  %s0 = inlined_call_operand.vmem [shape: bf16[272,256], index: 0, kind: input, shape index: {}]
  %s1 = inlined_call_operand.vmem [shape: bf16[4,256,128], index: 1, kind: input, shape index: {}]
  %s2 = inlined_call_operand.vmem [shape: f32[1,128], index: 2, kind: input, shape index: {}]
  %s3 = inlined_call_operand.vmem [shape: bf16[2,2,128,64], index: 3, kind: input, shape index: {}]
  %s4 = inlined_call_operand.vmem [shape: f32[1,64], index: 4, kind: input, shape index: {}]
  %s5 = inlined_call_operand.vmem [shape: bf16[3,192,64], index: 5, kind: input, shape index: {}]
  %s6 = inlined_call_operand.vmem [shape: f32[1,64], index: 6, kind: input, shape index: {}]
  %s7 = inlined_call_operand.vmem [shape: bf16[5,192,64], index: 7, kind: input, shape index: {}]
  %s8 = inlined_call_operand.vmem [shape: f32[1,5], index: 8, kind: input, shape index: {}]
  %s9 = inlined_call_operand.hbm [shape: f32[1,5], index: 9, kind: output, shape index: {0}]
  %s10 = inlined_call_operand.hbm [shape: f32[1,5], index: 10, kind: output, shape index: {1}]
  %11 = xla_tuple %s9, %s10
  %s12 = sld [smem:[#allocation0]]
  $region54: #{actor_net_forward.1} parent=0
    _
  %s14 = ssub.s32 1, %s12
  %s15 = scalar_select 0, %s14, %s12
  $region1: #{actor_net_forward.1} parent=0
    #allocation4 [shape = 'u8[512]{0}', space=vmem, size = 0x400, scoped, tag = 'output window, operand 0, single buffered']
    #allocation5 [shape = 's32[1]{0}', space=sflag, size = 0x4, scoped, tag = 'scoped memory for actor_net_forward.1']
    #allocation6 [shape = 'u8[512]{0}', space=vmem, size = 0x400, scoped, tag = 'output window, operand 1, single buffered']
    #allocation7 [shape = 's32[1]{0}', space=sflag, size = 0x4, scoped, tag = 'scoped memory for actor_net_forward.1']
    %16 = vsyncpa [#allocation5], 0
    %17 = vsyncpa [#allocation7], 0
    // Predicated region
    $region2: #{actor_net_forward.1} parent=1 // pred_check
      _
    $region3: #{actor_net_forward.1} parent=1 // pred_check_branch
      %19 = sbr.rel (0) target = $region5
    $region4: #{actor_net_forward.1} parent=1 // pred_region
      _
    $region5: #{actor_net_forward.1} parent=1 // pred_fallthru
      _
    // Predicated region
    $region6: #{actor_net_forward.1} parent=1 // pred_check
      _
    $region7: #{actor_net_forward.1} parent=1 // pred_check_branch
      %21 = sbr.rel (0) target = $region9
    $region8: #{actor_net_forward.1} parent=1 // pred_region
      _
    $region9: #{actor_net_forward.1} parent=1 // pred_fallthru
      _
    // Predicated region
    $region10: #{actor_net_forward.1} parent=1 // pred_check
      _
    $region11: #{actor_net_forward.1} parent=1 // pred_check_branch
      %23 = sbr.rel (0) target = $region13
    $region12: #{actor_net_forward.1} parent=1 // pred_region
      _
    $region13: #{actor_net_forward.1} parent=1 // pred_fallthru
      _
    // Predicated region
    $region14: #{actor_net_forward.1} parent=1 // pred_check
      _
    $region15: #{actor_net_forward.1} parent=1 // pred_check_branch
      %25 = sbr.rel (0) target = $region17
    $region16: #{actor_net_forward.1} parent=1 // pred_region
      _
    $region17: #{actor_net_forward.1} parent=1 // pred_fallthru
      _
    // Predicated region
    $region18: #{actor_net_forward.1} parent=1 // pred_check
      _
    $region19: #{actor_net_forward.1} parent=1 // pred_check_branch
      %27 = sbr.rel (0) target = $region21
    $region20: #{actor_net_forward.1} parent=1 // pred_region
      _
    $region21: #{actor_net_forward.1} parent=1 // pred_fallthru
      _
    // Predicated region
    $region22: #{actor_net_forward.1} parent=1 // pred_check
      _
    $region23: #{actor_net_forward.1} parent=1 // pred_check_branch
      %29 = sbr.rel (0) target = $region25
    $region24: #{actor_net_forward.1} parent=1 // pred_region
      _
    $region25: #{actor_net_forward.1} parent=1 // pred_fallthru
      _
    // Predicated region
    $region26: #{actor_net_forward.1} parent=1 // pred_check
      _
    $region27: #{actor_net_forward.1} parent=1 // pred_check_branch
      %31 = sbr.rel (0) target = $region29
    $region28: #{actor_net_forward.1} parent=1 // pred_region
      _
    $region29: #{actor_net_forward.1} parent=1 // pred_fallthru
      _
    // Predicated region
    $region30: #{actor_net_forward.1} parent=1 // pred_check
      _
    $region31: #{actor_net_forward.1} parent=1 // pred_check_branch
      %33 = sbr.rel (0) target = $region33
    $region32: #{actor_net_forward.1} parent=1 // pred_region
      _
    $region33: #{actor_net_forward.1} parent=1 // pred_fallthru
      _
    // Predicated region
    $region34: #{actor_net_forward.1} parent=1 // pred_check
      _
    $region35: #{actor_net_forward.1} parent=1 // pred_check_branch
      %35 = sbr.rel (0) target = $region37
    $region36: #{actor_net_forward.1} parent=1 // pred_region
      _
    $region37: #{actor_net_forward.1} parent=1 // pred_fallthru
      _
    %37 = vst [vmem:[#allocation2 + $0x78] sm:$0xff] 0
    %v38 = vld [vmem:[%s2] sm:$0x1]
    %v40 = vlaneseq
    %v41 = vshrl.u32 %v40, 7
    %v42 = vsub.s32 0, %v41
    %v43 = vrot.slane %v38, %v42
    %v45 = vld [vmem:[%s0] sm:$0xff]
    %v46 = vld [vmem:[%s0 + $0x8] sm:$0xff]
    %v47 = vld [vmem:[%s0 + $0x10] sm:$0xff]
    %v48 = vld [vmem:[%s0 + $0x18] sm:$0xff]
    %v49 = vld [vmem:[%s0 + $0x20] sm:$0xff]
    %v50 = vld [vmem:[%s0 + $0x28] sm:$0xff]
    %v51 = vld [vmem:[%s0 + $0x30] sm:$0xff]
    %v52 = vld [vmem:[%s0 + $0x38] sm:$0xff]
    %v53 = vld [vmem:[%s0 + $0x40] sm:$0xff]
    %v54 = vld [vmem:[%s0 + $0x48] sm:$0xff]
    %v55 = vld [vmem:[%s0 + $0x50] sm:$0xff]
    %v56 = vld [vmem:[%s0 + $0x58] sm:$0xff]
    %v57 = vld [vmem:[%s0 + $0x60] sm:$0xff]
    %v58 = vld [vmem:[%s0 + $0x68] sm:$0xff]
    %v59 = vld [vmem:[%s0 + $0x70] sm:$0xff]
    %v60 = vld [vmem:[%s0 + $0x78] sm:$0xff]
    %v61 = vld [vmem:[%s0 + $0x80] sm:$0xff]
    %v62 = vld [vmem:[%s0 + $0x88] sm:$0xff]
    %v63 = vld [vmem:[%s0 + $0x90] sm:$0xff]
    %v64 = vld [vmem:[%s0 + $0x98] sm:$0xff]
    %v65 = vld [vmem:[%s0 + $0xa0] sm:$0xff]
    %v66 = vld [vmem:[%s0 + $0xa8] sm:$0xff]
    %v67 = vld [vmem:[%s0 + $0xb0] sm:$0xff]
    %v68 = vld [vmem:[%s0 + $0xb8] sm:$0xff]
    %v69 = vld [vmem:[%s0 + $0xc0] sm:$0xff]
    %v70 = vld [vmem:[%s0 + $0xc8] sm:$0xff]
    %v71 = vld [vmem:[%s0 + $0xd0] sm:$0xff]
    %v72 = vld [vmem:[%s0 + $0xd8] sm:$0xff]
    %v73 = vld [vmem:[%s0 + $0xe0] sm:$0xff]
    %v74 = vld [vmem:[%s0 + $0xe8] sm:$0xff]
    %v75 = vld [vmem:[%s1] sm:$0xf]
    %v76 = vld [vmem:[%s1 + $0x4] sm:$0xf]
    %v77 = vld [vmem:[%s1 + $0x8] sm:$0xf]
    %v78 = vld [vmem:[%s1 + $0xc] sm:$0xf]
    %v79 = vld [vmem:[%s1 + $0x10] sm:$0xf]
    %v80 = vld [vmem:[%s1 + $0x14] sm:$0xf]
    %v81 = vld [vmem:[%s1 + $0x18] sm:$0xf]
    %v82 = vld [vmem:[%s1 + $0x1c] sm:$0xf]
    %v83 = vld [vmem:[%s1 + $0x20] sm:$0xf]
    %v84 = vld [vmem:[%s1 + $0x24] sm:$0xf]
    %v85 = vld [vmem:[%s1 + $0x28] sm:$0xf]
    %v86 = vld [vmem:[%s1 + $0x2c] sm:$0xf]
    %v87 = vld [vmem:[%s1 + $0x30] sm:$0xf]
    %v88 = vld [vmem:[%s1 + $0x34] sm:$0xf]
    %v89 = vld [vmem:[%s1 + $0x38] sm:$0xf]
    %v90 = vld [vmem:[%s1 + $0x3c] sm:$0xf]
    %v91 = vld [vmem:[%s1 + $0x40] sm:$0xf]
    %v92 = vld [vmem:[%s1 + $0x44] sm:$0xf]
    %v93 = vld [vmem:[%s1 + $0x48] sm:$0xf]
    %v94 = vld [vmem:[%s1 + $0x4c] sm:$0xf]
    %v95 = vld [vmem:[%s1 + $0x50] sm:$0xf]
    %v96 = vld [vmem:[%s1 + $0x54] sm:$0xf]
    %v97 = vld [vmem:[%s1 + $0x58] sm:$0xf]
    %v98 = vld [vmem:[%s1 + $0x5c] sm:$0xf]
    %v99 = vld [vmem:[%s1 + $0x60] sm:$0xf]
    %v100 = vld [vmem:[%s1 + $0x64] sm:$0xf]
    %v101 = vld [vmem:[%s1 + $0x68] sm:$0xf]
    %v102 = vld [vmem:[%s1 + $0x6c] sm:$0xf]
    %v103 = vld [vmem:[%s1 + $0x70] sm:$0xf]
    %v104 = vld [vmem:[%s1 + $0x74] sm:$0xf]
    %v105 = vld [vmem:[%s1 + $0x78] sm:$0xf]
    %v106 = vld [vmem:[%s1 + $0x7c] sm:$0xf]
    %v137 = vunpack.c.l.b16 %v45
    %v138 = vunpack.c.h.b16 %v45
    %v139 = vunpack.c.l.b16 %v46
    %v140 = vunpack.c.h.b16 %v46
    %v141 = vunpack.c.l.b16 %v47
    %v142 = vunpack.c.h.b16 %v47
    %v143 = vunpack.c.l.b16 %v48
    %v144 = vunpack.c.h.b16 %v48
    %v145 = vunpack.c.l.b16 %v49
    %v146 = vunpack.c.h.b16 %v49
    %v147 = vunpack.c.l.b16 %v50
    %v148 = vunpack.c.h.b16 %v50
    %v149 = vunpack.c.l.b16 %v51
    %v150 = vunpack.c.h.b16 %v51
    %v151 = vunpack.c.l.b16 %v52
    %v152 = vunpack.c.h.b16 %v52
    %v153 = vunpack.c.l.b16 %v53
    %v154 = vunpack.c.h.b16 %v53
    %v155 = vunpack.c.l.b16 %v54
    %v156 = vunpack.c.h.b16 %v54
    %v157 = vunpack.c.l.b16 %v55
    %v158 = vunpack.c.h.b16 %v55
    %v159 = vunpack.c.l.b16 %v56
    %v160 = vunpack.c.h.b16 %v56
    %v161 = vunpack.c.l.b16 %v57
    %v162 = vunpack.c.h.b16 %v57
    %v163 = vunpack.c.l.b16 %v58
    %v164 = vunpack.c.h.b16 %v58
    %v165 = vunpack.c.l.b16 %v59
    %v166 = vunpack.c.h.b16 %v59
    %v167 = vunpack.c.l.b16 %v60
    %v168 = vunpack.c.h.b16 %v60
    %v169 = vunpack.c.l.b16 %v61
    %v170 = vunpack.c.h.b16 %v61
    %v171 = vunpack.c.l.b16 %v62
    %v172 = vunpack.c.h.b16 %v62
    %v173 = vunpack.c.l.b16 %v63
    %v174 = vunpack.c.h.b16 %v63
    %v175 = vunpack.c.l.b16 %v64
    %v176 = vunpack.c.h.b16 %v64
    %v177 = vunpack.c.l.b16 %v65
    %v178 = vunpack.c.h.b16 %v65
    %v179 = vunpack.c.l.b16 %v66
    %v180 = vunpack.c.h.b16 %v66
    %v181 = vunpack.c.l.b16 %v67
    %v182 = vunpack.c.h.b16 %v67
    %v183 = vunpack.c.l.b16 %v68
    %v184 = vunpack.c.h.b16 %v68
    %v185 = vunpack.c.l.b16 %v69
    %v186 = vunpack.c.h.b16 %v69
    %v187 = vunpack.c.l.b16 %v70
    %v188 = vunpack.c.h.b16 %v70
    %v189 = vunpack.c.l.b16 %v71
    %v190 = vunpack.c.h.b16 %v71
    %v191 = vunpack.c.l.b16 %v72
    %v192 = vunpack.c.h.b16 %v72
    %v193 = vunpack.c.l.b16 %v73
    %v194 = vunpack.c.h.b16 %v73
    %v195 = vunpack.c.l.b16 %v74
    %v196 = vunpack.c.h.b16 %v74
    %v197 = vpack.c.b16 %v139, %v137
    %v198 = vpack.c.b16 %v140, %v138
    %v199 = vpack.c.b16 %v143, %v141
    %v200 = vpack.c.b16 %v144, %v142
    %v201 = vpack.c.b16 %v147, %v145
    %v202 = vpack.c.b16 %v148, %v146
    %v203 = vpack.c.b16 %v151, %v149
    %v204 = vpack.c.b16 %v152, %v150
    %v205 = vpack.c.b16 %v155, %v153
    %v206 = vpack.c.b16 %v156, %v154
    %v207 = vpack.c.b16 %v159, %v157
    %v208 = vpack.c.b16 %v160, %v158
    %v209 = vpack.c.b16 %v163, %v161
    %v210 = vpack.c.b16 %v164, %v162
    %v211 = vpack.c.b16 %v167, %v165
    %v212 = vpack.c.b16 %v168, %v166
    %v213 = vpack.c.b16 %v171, %v169
    %v214 = vpack.c.b16 %v172, %v170
    %v215 = vpack.c.b16 %v175, %v173
    %v216 = vpack.c.b16 %v176, %v174
    %v217 = vpack.c.b16 %v179, %v177
    %v218 = vpack.c.b16 %v180, %v178
    %v219 = vpack.c.b16 %v183, %v181
    %v220 = vpack.c.b16 %v184, %v182
    %v221 = vpack.c.b16 %v187, %v185
    %v222 = vpack.c.b16 %v188, %v186
    %v223 = vpack.c.b16 %v191, %v189
    %v224 = vpack.c.b16 %v192, %v190
    %v225 = vpack.c.b16 %v195, %v193
    %v226 = vpack.c.b16 %v196, %v194
    %v289 = vunpack.c.l.b16 %v75
    %v290 = vunpack.c.l.b16 %v76
    %v291 = vunpack.c.l.b16 %v77
    %v292 = vunpack.c.l.b16 %v78
    %v293 = vunpack.c.l.b16 %v79
    %v294 = vunpack.c.l.b16 %v80
    %v295 = vunpack.c.l.b16 %v81
    %v296 = vunpack.c.l.b16 %v82
    %v297 = vunpack.c.l.b16 %v83
    %v298 = vunpack.c.l.b16 %v84
    %v299 = vunpack.c.l.b16 %v85
    %v300 = vunpack.c.l.b16 %v86
    %v301 = vunpack.c.l.b16 %v87
    %v302 = vunpack.c.l.b16 %v88
    %v303 = vunpack.c.l.b16 %v89
    %v304 = vunpack.c.l.b16 %v90
    %v305 = vunpack.c.l.b16 %v91
    %v306 = vunpack.c.l.b16 %v92
    %v307 = vunpack.c.l.b16 %v93
    %v308 = vunpack.c.l.b16 %v94
    %v309 = vunpack.c.l.b16 %v95
    %v310 = vunpack.c.l.b16 %v96
    %v311 = vunpack.c.l.b16 %v97
    %v312 = vunpack.c.l.b16 %v98
    %v313 = vunpack.c.l.b16 %v99
    %v314 = vunpack.c.l.b16 %v100
    %v315 = vunpack.c.l.b16 %v101
    %v316 = vunpack.c.l.b16 %v102
    %v317 = vunpack.c.l.b16 %v103
    %v318 = vunpack.c.l.b16 %v104
    %v319 = vunpack.c.l.b16 %v105
    %v320 = vunpack.c.l.b16 %v106
    %v321 = vpack.c.b16 %v290, %v289
    %v322 = vpack.c.b16 %v292, %v291
    %v323 = vpack.c.b16 %v294, %v293
    %v324 = vpack.c.b16 %v296, %v295
    %v325 = vpack.c.b16 %v298, %v297
    %v326 = vpack.c.b16 %v300, %v299
    %v327 = vpack.c.b16 %v302, %v301
    %v328 = vpack.c.b16 %v304, %v303
    %v329 = vpack.c.b16 %v306, %v305
    %v330 = vpack.c.b16 %v308, %v307
    %v331 = vpack.c.b16 %v310, %v309
    %v332 = vpack.c.b16 %v312, %v311
    %v333 = vpack.c.b16 %v314, %v313
    %v334 = vpack.c.b16 %v316, %v315
    %v335 = vpack.c.b16 %v318, %v317
    %v336 = vpack.c.b16 %v320, %v319
    %353 = vmatprep.subr.bf16.mxu0 0
    %354 = vmatpush1.bf16.msra.mxu0 %v321
    %355 = vmatprep.subr.bf16.mxu0 0
    %356 = vmatpush1.bf16.msra.mxu0 %v322
    %357 = vmatprep.subr.bf16.mxu0 0
    %358 = vmatpush1.bf16.msra.mxu0 %v323
    %359 = vmatprep.subr.bf16.mxu0 0
    %360 = vmatpush1.bf16.msra.mxu0 %v324
    %361 = vmatprep.subr.bf16.mxu0 0
    %362 = vmatpush1.bf16.msra.mxu0 %v325
    %363 = vmatprep.subr.bf16.mxu0 0
    %364 = vmatpush1.bf16.msra.mxu0 %v326
    %365 = vmatprep.subr.bf16.mxu0 0
    %366 = vmatpush1.bf16.msra.mxu0 %v327
    %367 = vmatprep.subr.bf16.mxu0 0
    %368 = vmatpush1.bf16.msra.mxu0 %v328
    %369 = vmatprep.subr.bf16.mxu0 0
    %370 = vmatpush1.bf16.msra.mxu0 %v329
    %371 = vmatprep.subr.bf16.mxu0 0
    %372 = vmatpush1.bf16.msra.mxu0 %v330
    %373 = vmatprep.subr.bf16.mxu0 0
    %374 = vmatpush1.bf16.msra.mxu0 %v331
    %375 = vmatprep.subr.bf16.mxu0 0
    %376 = vmatpush1.bf16.msra.mxu0 %v332
    %377 = vmatprep.subr.bf16.mxu0 0
    %378 = vmatpush1.bf16.msra.mxu0 %v333
    %379 = vmatprep.subr.bf16.mxu0 0
    %380 = vmatpush1.bf16.msra.mxu0 %v334
    %381 = vmatprep.subr.bf16.mxu0 0
    %382 = vmatpush1.bf16.msra.mxu0 %v335
    %383 = vmatprep.subr.bf16.mxu0 0
    %384 = vmatpush1.bf16.msra.mxu0 %v336
    %385 = vmatprep.mubr.bf16.mxu0 %v198
    %386 = vmatmul.mubr.bf16.gmra.mrb[0].mxu0 %v197
    %v387 = vpop.f32.mrb[0].mxu0
    %v388 = vadd.f32 0.0, %v387
    %v389 = vpop.f32.mrb[0].mxu0
    %v390 = vpop.f32.mrb[0].mxu0
    %v391 = vadd.f32 0.0, %v390
    %v392 = vpop.f32.mrb[0].mxu0
    %393 = vmatprep.mubr.bf16.mxu0 %v200
    %394 = vmatmul.mubr.bf16.gmra.mrb[0].mxu0 %v199
    %v395 = vpop.f32.mrb[0].mxu0
    %v396 = vadd.f32 0.0, %v395
    %v397 = vpop.f32.mrb[0].mxu0
    %v398 = vpop.f32.mrb[0].mxu0
    %v399 = vadd.f32 0.0, %v398
    %v400 = vpop.f32.mrb[0].mxu0
    %401 = vmatprep.mubr.bf16.mxu0 %v202
    %402 = vmatmul.mubr.bf16.gmra.mrb[0].mxu0 %v201
    %v403 = vpop.f32.mrb[0].mxu0
    %v404 = vadd.f32 0.0, %v403
    %v405 = vpop.f32.mrb[0].mxu0
    %v406 = vpop.f32.mrb[0].mxu0
    %v407 = vadd.f32 0.0, %v406
    %v408 = vpop.f32.mrb[0].mxu0
    %409 = vmatprep.mubr.bf16.mxu0 %v204
    %410 = vmatmul.mubr.bf16.gmra.mrb[0].mxu0 %v203
    %v411 = vpop.f32.mrb[0].mxu0
    %v412 = vadd.f32 0.0, %v411
    %v413 = vpop.f32.mrb[0].mxu0
    %v414 = vpop.f32.mrb[0].mxu0
    %v415 = vadd.f32 0.0, %v414
    %v416 = vpop.f32.mrb[0].mxu0
    %417 = vmatprep.mubr.bf16.mxu0 %v206
    %418 = vmatmul.mubr.bf16.gmra.mrb[0].mxu0 %v205
    %v419 = vpop.f32.mrb[0].mxu0
    %v420 = vadd.f32 0.0, %v419
    %v421 = vpop.f32.mrb[0].mxu0
    %v422 = vpop.f32.mrb[0].mxu0
    %v423 = vadd.f32 0.0, %v422
    %v424 = vpop.f32.mrb[0].mxu0
    %425 = vmatprep.mubr.bf16.mxu0 %v208
    %426 = vmatmul.mubr.bf16.gmra.mrb[0].mxu0 %v207
    %v427 = vpop.f32.mrb[0].mxu0
    %v428 = vadd.f32 0.0, %v427
    %v429 = vpop.f32.mrb[0].mxu0
    %v430 = vpop.f32.mrb[0].mxu0
    %v431 = vadd.f32 0.0, %v430
    %v432 = vpop.f32.mrb[0].mxu0
    %433 = vmatprep.mubr.bf16.mxu0 %v210
    %434 = vmatmul.mubr.bf16.gmra.mrb[0].mxu0 %v209
    %v435 = vpop.f32.mrb[0].mxu0
    %v436 = vadd.f32 0.0, %v435
    %v437 = vpop.f32.mrb[0].mxu0
    %v438 = vpop.f32.mrb[0].mxu0
    %v439 = vadd.f32 0.0, %v438
    %v440 = vpop.f32.mrb[0].mxu0
    %441 = vmatprep.mubr.bf16.mxu0 %v212
    %442 = vmatmul.mubr.bf16.gmra.mrb[0].mxu0 %v211
    %v443 = vpop.f32.mrb[0].mxu0
    %v444 = vadd.f32 0.0, %v443
    %v445 = vpop.f32.mrb[0].mxu0
    %v446 = vpop.f32.mrb[0].mxu0
    %v447 = vadd.f32 0.0, %v446
    %v448 = vpop.f32.mrb[0].mxu0
    %449 = vmatprep.mubr.bf16.mxu0 %v214
    %450 = vmatmul.mubr.bf16.gmra.mrb[0].mxu0 %v213
    %v451 = vpop.f32.mrb[0].mxu0
    %v452 = vadd.f32 0.0, %v451
    %v453 = vpop.f32.mrb[0].mxu0
    %v454 = vpop.f32.mrb[0].mxu0
    %v455 = vadd.f32 0.0, %v454
    %v456 = vpop.f32.mrb[0].mxu0
    %457 = vmatprep.mubr.bf16.mxu0 %v216
    %458 = vmatmul.mubr.bf16.gmra.mrb[0].mxu0 %v215
    %v459 = vpop.f32.mrb[0].mxu0
    %v460 = vadd.f32 0.0, %v459
    %v461 = vpop.f32.mrb[0].mxu0
    %v462 = vpop.f32.mrb[0].mxu0
    %v463 = vadd.f32 0.0, %v462
    %v464 = vpop.f32.mrb[0].mxu0
    %465 = vmatprep.mubr.bf16.mxu0 %v218
    %466 = vmatmul.mubr.bf16.gmra.mrb[0].mxu0 %v217
    %v467 = vpop.f32.mrb[0].mxu0
    %v468 = vadd.f32 0.0, %v467
    %v469 = vpop.f32.mrb[0].mxu0
    %v470 = vpop.f32.mrb[0].mxu0
    %v471 = vadd.f32 0.0, %v470
    %v472 = vpop.f32.mrb[0].mxu0
    %473 = vmatprep.mubr.bf16.mxu0 %v220
    %474 = vmatmul.mubr.bf16.gmra.mrb[0].mxu0 %v219
    %v475 = vpop.f32.mrb[0].mxu0
    %v476 = vadd.f32 0.0, %v475
    %v477 = vpop.f32.mrb[0].mxu0
    %v478 = vpop.f32.mrb[0].mxu0
    %v479 = vadd.f32 0.0, %v478
    %v480 = vpop.f32.mrb[0].mxu0
    %481 = vmatprep.mubr.bf16.mxu0 %v222
    %482 = vmatmul.mubr.bf16.gmra.mrb[0].mxu0 %v221
    %v483 = vpop.f32.mrb[0].mxu0
    %v484 = vadd.f32 0.0, %v483
    %v485 = vpop.f32.mrb[0].mxu0
    %v486 = vpop.f32.mrb[0].mxu0
    %v487 = vadd.f32 0.0, %v486
    %v488 = vpop.f32.mrb[0].mxu0
    %489 = vmatprep.mubr.bf16.mxu0 %v224
    %490 = vmatmul.mubr.bf16.gmra.mrb[0].mxu0 %v223
    %v491 = vpop.f32.mrb[0].mxu0
    %v492 = vadd.f32 0.0, %v491
    %v493 = vpop.f32.mrb[0].mxu0
    %v494 = vpop.f32.mrb[0].mxu0
    %v495 = vadd.f32 0.0, %v494
    %v496 = vpop.f32.mrb[0].mxu0
    %497 = vmatprep.mubr.bf16.mxu0 %v226
    %498 = vmatmul.mubr.bf16.gmra.mrb[0].mxu0 %v225
    %v499 = vpop.f32.mrb[0].mxu0
    %v500 = vadd.f32 0.0, %v499
    %v501 = vpop.f32.mrb[0].mxu0
    %v502 = vpop.f32.mrb[0].mxu0
    %v503 = vadd.f32 0.0, %v502
    %v504 = vpop.f32.mrb[0].mxu0
    %505 = vdwg.mxu0
    %v506 = vadd.f32 %v43, %v388
    %v507 = vadd.f32 %v43, %v391
    %v508 = vadd.f32 %v43, %v396
    %v509 = vadd.f32 %v43, %v399
    %v510 = vadd.f32 %v43, %v404
    %v511 = vadd.f32 %v43, %v407
    %v512 = vadd.f32 %v43, %v412
    %v513 = vadd.f32 %v43, %v415
    %v514 = vadd.f32 %v43, %v420
    %v515 = vadd.f32 %v43, %v423
    %v516 = vadd.f32 %v43, %v428
    %v517 = vadd.f32 %v43, %v431
    %v518 = vadd.f32 %v43, %v436
    %v519 = vadd.f32 %v43, %v439
    %v520 = vadd.f32 %v43, %v444
    %v521 = vadd.f32 %v43, %v447
    %v522 = vadd.f32 %v43, %v452
    %v523 = vadd.f32 %v43, %v455
    %v524 = vadd.f32 %v43, %v460
    %v525 = vadd.f32 %v43, %v463
    %v526 = vadd.f32 %v43, %v468
    %v527 = vadd.f32 %v43, %v471
    %v528 = vadd.f32 %v43, %v476
    %v529 = vadd.f32 %v43, %v479
    %v530 = vadd.f32 %v43, %v484
    %v531 = vadd.f32 %v43, %v487
    %v532 = vadd.f32 %v43, %v492
    %v533 = vadd.f32 %v43, %v495
    %v534 = vadd.f32 %v43, %v500
    %v535 = vadd.f32 %v43, %v503
    %v536 = vld [vmem:[%s0] sm:$0xff]
    %v537 = vld [vmem:[%s0 + $0x8] sm:$0xff]
    %v538 = vld [vmem:[%s0 + $0x10] sm:$0xff]
    %v539 = vld [vmem:[%s0 + $0x18] sm:$0xff]
    %v540 = vld [vmem:[%s0 + $0x20] sm:$0xff]
    %v541 = vld [vmem:[%s0 + $0x28] sm:$0xff]
    %v542 = vld [vmem:[%s0 + $0x30] sm:$0xff]
    %v543 = vld [vmem:[%s0 + $0x38] sm:$0xff]
    %v544 = vld [vmem:[%s0 + $0x40] sm:$0xff]
    %v545 = vld [vmem:[%s0 + $0x48] sm:$0xff]
    %v546 = vld [vmem:[%s0 + $0x50] sm:$0xff]
    %v547 = vld [vmem:[%s0 + $0x58] sm:$0xff]
    %v548 = vld [vmem:[%s0 + $0x60] sm:$0xff]
    %v549 = vld [vmem:[%s0 + $0x68] sm:$0xff]
    %v550 = vld [vmem:[%s0 + $0x70] sm:$0xff]
    %v551 = vld [vmem:[%s0 + $0x78] sm:$0xff]
    %v552 = vld [vmem:[%s0 + $0x80] sm:$0xff]
    %v553 = vld [vmem:[%s0 + $0x88] sm:$0xff]
    %v554 = vld [vmem:[%s0 + $0x90] sm:$0xff]
    %v555 = vld [vmem:[%s0 + $0x98] sm:$0xff]
    %v556 = vld [vmem:[%s0 + $0xa0] sm:$0xff]
    %v557 = vld [vmem:[%s0 + $0xa8] sm:$0xff]
    %v558 = vld [vmem:[%s0 + $0xb0] sm:$0xff]
    %v559 = vld [vmem:[%s0 + $0xb8] sm:$0xff]
    %v560 = vld [vmem:[%s0 + $0xc0] sm:$0xff]
    %v561 = vld [vmem:[%s0 + $0xc8] sm:$0xff]
    %v562 = vld [vmem:[%s0 + $0xd0] sm:$0xff]
    %v563 = vld [vmem:[%s0 + $0xd8] sm:$0xff]
    %v564 = vld [vmem:[%s0 + $0xe0] sm:$0xff]
    %v565 = vld [vmem:[%s0 + $0xe8] sm:$0xff]
    %v566 = vld [vmem:[%s0 + $0xf0] sm:$0x11]
    %s567 = scalar_lea.vmem %s1, 128
    %v568 = vld [vmem:[%s567] sm:$0xf]
    %v569 = vld [vmem:[%s567 + $0x4] sm:$0xf]
    %v570 = vld [vmem:[%s567 + $0x8] sm:$0xf]
    %v571 = vld [vmem:[%s567 + $0xc] sm:$0xf]
    %v572 = vld [vmem:[%s567 + $0x10] sm:$0xf]
    %v573 = vld [vmem:[%s567 + $0x14] sm:$0xf]
    %v574 = vld [vmem:[%s567 + $0x18] sm:$0xf]
    %v575 = vld [vmem:[%s567 + $0x1c] sm:$0xf]
    %v576 = vld [vmem:[%s567 + $0x20] sm:$0xf]
    %v577 = vld [vmem:[%s567 + $0x24] sm:$0xf]
    %v578 = vld [vmem:[%s567 + $0x28] sm:$0xf]
    %v579 = vld [vmem:[%s567 + $0x2c] sm:$0xf]
    %v580 = vld [vmem:[%s567 + $0x30] sm:$0xf]
    %v581 = vld [vmem:[%s567 + $0x34] sm:$0xf]
    %v582 = vld [vmem:[%s567 + $0x38] sm:$0xf]
    %v583 = vld [vmem:[%s567 + $0x3c] sm:$0xf]
    %v584 = vld [vmem:[%s567 + $0x40] sm:$0xf]
    %v585 = vld [vmem:[%s567 + $0x44] sm:$0xf]
    %v586 = vld [vmem:[%s567 + $0x48] sm:$0xf]
    %v587 = vld [vmem:[%s567 + $0x4c] sm:$0xf]
    %v588 = vld [vmem:[%s567 + $0x50] sm:$0xf]
    %v589 = vld [vmem:[%s567 + $0x54] sm:$0xf]
    %v590 = vld [vmem:[%s567 + $0x58] sm:$0xf]
    %v591 = vld [vmem:[%s567 + $0x5c] sm:$0xf]
    %v592 = vld [vmem:[%s567 + $0x60] sm:$0xf]
    %v593 = vld [vmem:[%s567 + $0x64] sm:$0xf]
    %v594 = vld [vmem:[%s567 + $0x68] sm:$0xf]
    %v595 = vld [vmem:[%s567 + $0x6c] sm:$0xf]
    %v596 = vld [vmem:[%s567 + $0x70] sm:$0xf]
    %v597 = vld [vmem:[%s567 + $0x74] sm:$0xf]
    %v598 = vld [vmem:[%s567 + $0x78] sm:$0xf]
    %v599 = vld [vmem:[%s567 + $0x7c] sm:$0xf]
    %v631 = vunpack.c.l.b16 %v536
    %v632 = vunpack.c.h.b16 %v536
    %v633 = vunpack.c.l.b16 %v537
    %v634 = vunpack.c.h.b16 %v537
    %v635 = vunpack.c.l.b16 %v538
    %v636 = vunpack.c.h.b16 %v538
    %v637 = vunpack.c.l.b16 %v539
    %v638 = vunpack.c.h.b16 %v539
    %v639 = vunpack.c.l.b16 %v540
    %v640 = vunpack.c.h.b16 %v540
    %v641 = vunpack.c.l.b16 %v541
    %v642 = vunpack.c.h.b16 %v541
    %v643 = vunpack.c.l.b16 %v542
    %v644 = vunpack.c.h.b16 %v542
    %v645 = vunpack.c.l.b16 %v543
    %v646 = vunpack.c.h.b16 %v543
    %v647 = vunpack.c.l.b16 %v544
    %v648 = vunpack.c.h.b16 %v544
    %v649 = vunpack.c.l.b16 %v545
    %v650 = vunpack.c.h.b16 %v545
    %v651 = vunpack.c.l.b16 %v546
    %v652 = vunpack.c.h.b16 %v546
    %v653 = vunpack.c.l.b16 %v547
    %v654 = vunpack.c.h.b16 %v547
    %v655 = vunpack.c.l.b16 %v548
    %v656 = vunpack.c.h.b16 %v548
    %v657 = vunpack.c.l.b16 %v549
    %v658 = vunpack.c.h.b16 %v549
    %v659 = vunpack.c.l.b16 %v550
    %v660 = vunpack.c.h.b16 %v550
    %v661 = vunpack.c.l.b16 %v551
    %v662 = vunpack.c.h.b16 %v551
    %v663 = vunpack.c.l.b16 %v552
    %v664 = vunpack.c.h.b16 %v552
    %v665 = vunpack.c.l.b16 %v553
    %v666 = vunpack.c.h.b16 %v553
    %v667 = vunpack.c.l.b16 %v554
    %v668 = vunpack.c.h.b16 %v554
    %v669 = vunpack.c.l.b16 %v555
    %v670 = vunpack.c.h.b16 %v555
    %v671 = vunpack.c.l.b16 %v556
    %v672 = vunpack.c.h.b16 %v556
    %v673 = vunpack.c.l.b16 %v557
    %v674 = vunpack.c.h.b16 %v557
    %v675 = vunpack.c.l.b16 %v558
    %v676 = vunpack.c.h.b16 %v558
    %v677 = vunpack.c.l.b16 %v559
    %v678 = vunpack.c.h.b16 %v559
    %v679 = vunpack.c.l.b16 %v560
    %v680 = vunpack.c.h.b16 %v560
    %v681 = vunpack.c.l.b16 %v561
    %v682 = vunpack.c.h.b16 %v561
    %v683 = vunpack.c.l.b16 %v562
    %v684 = vunpack.c.h.b16 %v562
    %v685 = vunpack.c.l.b16 %v563
    %v686 = vunpack.c.h.b16 %v563
    %v687 = vunpack.c.l.b16 %v564
    %v688 = vunpack.c.h.b16 %v564
    %v689 = vunpack.c.l.b16 %v565
    %v690 = vunpack.c.h.b16 %v565
    %v691 = vunpack.c.l.b16 %v566
    %v692 = vunpack.c.h.b16 %v566
    %v693 = vpack.c.b16 %v633, %v631
    %v694 = vpack.c.b16 %v634, %v632
    %v695 = vpack.c.b16 %v637, %v635
    %v696 = vpack.c.b16 %v638, %v636
    %v697 = vpack.c.b16 %v641, %v639
    %v698 = vpack.c.b16 %v642, %v640
    %v699 = vpack.c.b16 %v645, %v643
    %v700 = vpack.c.b16 %v646, %v644
    %v701 = vpack.c.b16 %v649, %v647
    %v702 = vpack.c.b16 %v650, %v648
    %v703 = vpack.c.b16 %v653, %v651
    %v704 = vpack.c.b16 %v654, %v652
    %v705 = vpack.c.b16 %v657, %v655
    %v706 = vpack.c.b16 %v658, %v656
    %v707 = vpack.c.b16 %v661, %v659
    %v708 = vpack.c.b16 %v662, %v660
    %v709 = vpack.c.b16 %v665, %v663
    %v710 = vpack.c.b16 %v666, %v664
    %v711 = vpack.c.b16 %v669, %v667
    %v712 = vpack.c.b16 %v670, %v668
    %v713 = vpack.c.b16 %v673, %v671
    %v714 = vpack.c.b16 %v674, %v672
    %v715 = vpack.c.b16 %v677, %v675
    %v716 = vpack.c.b16 %v678, %v676
    %v717 = vpack.c.b16 %v681, %v679
    %v718 = vpack.c.b16 %v682, %v680
    %v719 = vpack.c.b16 %v685, %v683
    %v720 = vpack.c.b16 %v686, %v684
    %v721 = vpack.c.b16 %v689, %v687
    %v722 = vpack.c.b16 %v690, %v688
    %v723 = vpack.c.b16 %v691, %v691
    %v724 = vpack.c.b16 %v692, %v692
    %vm725 = vsmask.f32 7424
    %v727 = vshrl.u32 %v693, 16
    %v729 = vshll.u32 %v693, 16
    %v731 = vrot.slane %v729, 1
    %v732 = vor.u32 %v727, %v731
    %v734 = vshll.u32 %v695, 16
    %v736 = vrot.slane %v734, 1
    %v737 = vsel %vm725, %v732, %v736
    %v739 = vshrl.u32 %v694, 16
    %v741 = vshll.u32 %v694, 16
    %v743 = vrot.slane %v741, 1
    %v744 = vor.u32 %v739, %v743
    %v746 = vshll.u32 %v696, 16
    %v748 = vrot.slane %v746, 1
    %v749 = vsel %vm725, %v744, %v748
    %v750 = vshrl.u32 %v695, 16
    %v752 = vor.u32 %v750, %v736
    %v754 = vshll.u32 %v697, 16
    %v756 = vrot.slane %v754, 1
    %v757 = vsel %vm725, %v752, %v756
    %v758 = vshrl.u32 %v696, 16
    %v760 = vor.u32 %v758, %v748
    %v762 = vshll.u32 %v698, 16
    %v764 = vrot.slane %v762, 1
    %v765 = vsel %vm725, %v760, %v764
    %v766 = vshrl.u32 %v697, 16
    %v768 = vor.u32 %v766, %v756
    %v770 = vshll.u32 %v699, 16
    %v772 = vrot.slane %v770, 1
    %v773 = vsel %vm725, %v768, %v772
    %v774 = vshrl.u32 %v698, 16
    %v776 = vor.u32 %v774, %v764
    %v778 = vshll.u32 %v700, 16
    %v780 = vrot.slane %v778, 1
    %v781 = vsel %vm725, %v776, %v780
    %v782 = vshrl.u32 %v699, 16
    %v784 = vor.u32 %v782, %v772
    %v786 = vshll.u32 %v701, 16
    %v788 = vrot.slane %v786, 1
    %v789 = vsel %vm725, %v784, %v788
    %v790 = vshrl.u32 %v700, 16
    %v792 = vor.u32 %v790, %v780
    %v794 = vshll.u32 %v702, 16
    %v796 = vrot.slane %v794, 1
    %v797 = vsel %vm725, %v792, %v796
    %v798 = vshrl.u32 %v701, 16
    %v800 = vor.u32 %v798, %v788
    %v802 = vshll.u32 %v703, 16
    %v804 = vrot.slane %v802, 1
    %v805 = vsel %vm725, %v800, %v804
    %v806 = vshrl.u32 %v702, 16
    %v808 = vor.u32 %v806, %v796
    %v810 = vshll.u32 %v704, 16
    %v812 = vrot.slane %v810, 1
    %v813 = vsel %vm725, %v808, %v812
    %v814 = vshrl.u32 %v703, 16
    %v816 = vor.u32 %v814, %v804
    %v818 = vshll.u32 %v705, 16
    %v820 = vrot.slane %v818, 1
    %v821 = vsel %vm725, %v816, %v820
    %v822 = vshrl.u32 %v704, 16
    %v824 = vor.u32 %v822, %v812
    %v826 = vshll.u32 %v706, 16
    %v828 = vrot.slane %v826, 1
    %v829 = vsel %vm725, %v824, %v828
    %v830 = vshrl.u32 %v705, 16
    %v832 = vor.u32 %v830, %v820
    %v834 = vshll.u32 %v707, 16
    %v836 = vrot.slane %v834, 1
    %v837 = vsel %vm725, %v832, %v836
    %v838 = vshrl.u32 %v706, 16
    %v840 = vor.u32 %v838, %v828
    %v842 = vshll.u32 %v708, 16
    %v844 = vrot.slane %v842, 1
    %v845 = vsel %vm725, %v840, %v844
    %v846 = vshrl.u32 %v707, 16
    %v848 = vor.u32 %v846, %v836
    %v850 = vshll.u32 %v709, 16
    %v852 = vrot.slane %v850, 1
    %v853 = vsel %vm725, %v848, %v852
    %v854 = vshrl.u32 %v708, 16
    %v856 = vor.u32 %v854, %v844
    %v858 = vshll.u32 %v710, 16
    %v860 = vrot.slane %v858, 1
    %v861 = vsel %vm725, %v856, %v860
    %v862 = vshrl.u32 %v709, 16
    %v864 = vor.u32 %v862, %v852
    %v866 = vshll.u32 %v711, 16
    %v868 = vrot.slane %v866, 1
    %v869 = vsel %vm725, %v864, %v868
    %v870 = vshrl.u32 %v710, 16
    %v872 = vor.u32 %v870, %v860
    %v874 = vshll.u32 %v712, 16
    %v876 = vrot.slane %v874, 1
    %v877 = vsel %vm725, %v872, %v876
    %v878 = vshrl.u32 %v711, 16
    %v880 = vor.u32 %v878, %v868
    %v882 = vshll.u32 %v713, 16
    %v884 = vrot.slane %v882, 1
    %v885 = vsel %vm725, %v880, %v884
    %v886 = vshrl.u32 %v712, 16
    %v888 = vor.u32 %v886, %v876
    %v890 = vshll.u32 %v714, 16
    %v892 = vrot.slane %v890, 1
    %v893 = vsel %vm725, %v888, %v892
    %v894 = vshrl.u32 %v713, 16
    %v896 = vor.u32 %v894, %v884
    %v898 = vshll.u32 %v715, 16
    %v900 = vrot.slane %v898, 1
    %v901 = vsel %vm725, %v896, %v900
    %v902 = vshrl.u32 %v714, 16
    %v904 = vor.u32 %v902, %v892
    %v906 = vshll.u32 %v716, 16
    %v908 = vrot.slane %v906, 1
    %v909 = vsel %vm725, %v904, %v908
    %v910 = vshrl.u32 %v715, 16
    %v912 = vor.u32 %v910, %v900
    %v914 = vshll.u32 %v717, 16
    %v916 = vrot.slane %v914, 1
    %v917 = vsel %vm725, %v912, %v916
    %v918 = vshrl.u32 %v716, 16
    %v920 = vor.u32 %v918, %v908
    %v922 = vshll.u32 %v718, 16
    %v924 = vrot.slane %v922, 1
    %v925 = vsel %vm725, %v920, %v924
    %v926 = vshrl.u32 %v717, 16
    %v928 = vor.u32 %v926, %v916
    %v930 = vshll.u32 %v719, 16
    %v932 = vrot.slane %v930, 1
    %v933 = vsel %vm725, %v928, %v932
    %v934 = vshrl.u32 %v718, 16
    %v936 = vor.u32 %v934, %v924
    %v938 = vshll.u32 %v720, 16
    %v940 = vrot.slane %v938, 1
    %v941 = vsel %vm725, %v936, %v940
    %v942 = vshrl.u32 %v719, 16
    %v944 = vor.u32 %v942, %v932
    %v946 = vshll.u32 %v721, 16
    %v948 = vrot.slane %v946, 1
    %v949 = vsel %vm725, %v944, %v948
    %v950 = vshrl.u32 %v720, 16
    %v952 = vor.u32 %v950, %v940
    %v954 = vshll.u32 %v722, 16
    %v956 = vrot.slane %v954, 1
    %v957 = vsel %vm725, %v952, %v956
    %v958 = vshrl.u32 %v721, 16
    %v960 = vor.u32 %v958, %v948
    %v962 = vshll.u32 %v723, 16
    %v964 = vrot.slane %v962, 1
    %v965 = vsel %vm725, %v960, %v964
    %v966 = vshrl.u32 %v722, 16
    %v968 = vor.u32 %v966, %v956
    %v970 = vshll.u32 %v724, 16
    %v972 = vrot.slane %v970, 1
    %v973 = vsel %vm725, %v968, %v972
    %v1036 = vunpack.c.l.b16 %v568
    %v1037 = vunpack.c.l.b16 %v569
    %v1038 = vunpack.c.l.b16 %v570
    %v1039 = vunpack.c.l.b16 %v571
    %v1040 = vunpack.c.l.b16 %v572
    %v1041 = vunpack.c.l.b16 %v573
    %v1042 = vunpack.c.l.b16 %v574
    %v1043 = vunpack.c.l.b16 %v575
    %v1044 = vunpack.c.l.b16 %v576
    %v1045 = vunpack.c.l.b16 %v577
    %v1046 = vunpack.c.l.b16 %v578
    %v1047 = vunpack.c.l.b16 %v579
    %v1048 = vunpack.c.l.b16 %v580
    %v1049 = vunpack.c.l.b16 %v581
    %v1050 = vunpack.c.l.b16 %v582
    %v1051 = vunpack.c.l.b16 %v583
    %v1052 = vunpack.c.l.b16 %v584
    %v1053 = vunpack.c.l.b16 %v585
    %v1054 = vunpack.c.l.b16 %v586
    %v1055 = vunpack.c.l.b16 %v587
    %v1056 = vunpack.c.l.b16 %v588
    %v1057 = vunpack.c.l.b16 %v589
    %v1058 = vunpack.c.l.b16 %v590
    %v1059 = vunpack.c.l.b16 %v591
    %v1060 = vunpack.c.l.b16 %v592
    %v1061 = vunpack.c.l.b16 %v593
    %v1062 = vunpack.c.l.b16 %v594
    %v1063 = vunpack.c.l.b16 %v595
    %v1064 = vunpack.c.l.b16 %v596
    %v1065 = vunpack.c.l.b16 %v597
    %v1066 = vunpack.c.l.b16 %v598
    %v1067 = vunpack.c.l.b16 %v599
    %v1068 = vpack.c.b16 %v1037, %v1036
    %v1069 = vpack.c.b16 %v1039, %v1038
    %v1070 = vpack.c.b16 %v1041, %v1040
    %v1071 = vpack.c.b16 %v1043, %v1042
    %v1072 = vpack.c.b16 %v1045, %v1044
    %v1073 = vpack.c.b16 %v1047, %v1046
    %v1074 = vpack.c.b16 %v1049, %v1048
    %v1075 = vpack.c.b16 %v1051, %v1050
    %v1076 = vpack.c.b16 %v1053, %v1052
    %v1077 = vpack.c.b16 %v1055, %v1054
    %v1078 = vpack.c.b16 %v1057, %v1056
    %v1079 = vpack.c.b16 %v1059, %v1058
    %v1080 = vpack.c.b16 %v1061, %v1060
    %v1081 = vpack.c.b16 %v1063, %v1062
    %v1082 = vpack.c.b16 %v1065, %v1064
    %v1083 = vpack.c.b16 %v1067, %v1066
    %1100 = vmatprep.subr.bf16.mxu0 0
    %1101 = vmatpush1.bf16.msra.mxu0 %v1068
    %1102 = vmatprep.subr.bf16.mxu0 0
    %1103 = vmatpush1.bf16.msra.mxu0 %v1069
    %1104 = vmatprep.subr.bf16.mxu0 0
    %1105 = vmatpush1.bf16.msra.mxu0 %v1070
    %1106 = vmatprep.subr.bf16.mxu0 0
    %1107 = vmatpush1.bf16.msra.mxu0 %v1071
    %1108 = vmatprep.subr.bf16.mxu0 0
    %1109 = vmatpush1.bf16.msra.mxu0 %v1072
    %1110 = vmatprep.subr.bf16.mxu0 0
    %1111 = vmatpush1.bf16.msra.mxu0 %v1073
    %1112 = vmatprep.subr.bf16.mxu0 0
    %1113 = vmatpush1.bf16.msra.mxu0 %v1074
    %1114 = vmatprep.subr.bf16.mxu0 0
    %1115 = vmatpush1.bf16.msra.mxu0 %v1075
    %1116 = vmatprep.subr.bf16.mxu0 0
    %1117 = vmatpush1.bf16.msra.mxu0 %v1076
    %1118 = vmatprep.subr.bf16.mxu0 0
    %1119 = vmatpush1.bf16.msra.mxu0 %v1077
    %1120 = vmatprep.subr.bf16.mxu0 0
    %1121 = vmatpush1.bf16.msra.mxu0 %v1078
    %1122 = vmatprep.subr.bf16.mxu0 0
    %1123 = vmatpush1.bf16.msra.mxu0 %v1079
    %1124 = vmatprep.subr.bf16.mxu0 0
    %1125 = vmatpush1.bf16.msra.mxu0 %v1080
    %1126 = vmatprep.subr.bf16.mxu0 0
    %1127 = vmatpush1.bf16.msra.mxu0 %v1081
    %1128 = vmatprep.subr.bf16.mxu0 0
    %1129 = vmatpush1.bf16.msra.mxu0 %v1082
    %1130 = vmatprep.subr.bf16.mxu0 0
    %1131 = vmatpush1.bf16.msra.mxu0 %v1083
    %1132 = vmatprep.mubr.bf16.mxu0 %v749
    %1133 = vmatmul.mubr.bf16.gmra.mrb[0].mxu0 %v737
    %v1134 = vpop.f32.mrb[0].mxu0
    %v1135 = vadd.f32 0.0, %v1134
    %v1136 = vpop.f32.mrb[0].mxu0
    %v1137 = vpop.f32.mrb[0].mxu0
    %v1138 = vadd.f32 0.0, %v1137
    %v1139 = vpop.f32.mrb[0].mxu0
    %1140 = vmatprep.mubr.bf16.mxu0 %v765
    %1141 = vmatmul.mubr.bf16.gmra.mrb[0].mxu0 %v757
    %v1142 = vpop.f32.mrb[0].mxu0
    %v1143 = vadd.f32 0.0, %v1142
    %v1144 = vpop.f32.mrb[0].mxu0
    %v1145 = vpop.f32.mrb[0].mxu0
    %v1146 = vadd.f32 0.0, %v1145
    %v1147 = vpop.f32.mrb[0].mxu0
    %1148 = vmatprep.mubr.bf16.mxu0 %v781
    %1149 = vmatmul.mubr.bf16.gmra.mrb[0].mxu0 %v773
    %v1150 = vpop.f32.mrb[0].mxu0
    %v1151 = vadd.f32 0.0, %v1150
    %v1152 = vpop.f32.mrb[0].mxu0
    %v1153 = vpop.f32.mrb[0].mxu0
    %v1154 = vadd.f32 0.0, %v1153
    %v1155 = vpop.f32.mrb[0].mxu0
    %1156 = vmatprep.mubr.bf16.mxu0 %v797
    %1157 = vmatmul.mubr.bf16.gmra.mrb[0].mxu0 %v789
    %v1158 = vpop.f32.mrb[0].mxu0
    %v1159 = vadd.f32 0.0, %v1158
    %v1160 = vpop.f32.mrb[0].mxu0
    %v1161 = vpop.f32.mrb[0].mxu0
    %v1162 = vadd.f32 0.0, %v1161
    %v1163 = vpop.f32.mrb[0].mxu0
    %1164 = vmatprep.mubr.bf16.mxu0 %v813
    %1165 = vmatmul.mubr.bf16.gmra.mrb[0].mxu0 %v805
    %v1166 = vpop.f32.mrb[0].mxu0
    %v1167 = vadd.f32 0.0, %v1166
    %v1168 = vpop.f32.mrb[0].mxu0
    %v1169 = vpop.f32.mrb[0].mxu0
    %v1170 = vadd.f32 0.0, %v1169
    %v1171 = vpop.f32.mrb[0].mxu0
    %1172 = vmatprep.mubr.bf16.mxu0 %v829
    %1173 = vmatmul.mubr.bf16.gmra.mrb[0].mxu0 %v821
    %v1174 = vpop.f32.mrb[0].mxu0
    %v1175 = vadd.f32 0.0, %v1174
    %v1176 = vpop.f32.mrb[0].mxu0
    %v1177 = vpop.f32.mrb[0].mxu0
    %v1178 = vadd.f32 0.0, %v1177
    %v1179 = vpop.f32.mrb[0].mxu0
    %1180 = vmatprep.mubr.bf16.mxu0 %v845
    %1181 = vmatmul.mubr.bf16.gmra.mrb[0].mxu0 %v837
    %v1182 = vpop.f32.mrb[0].mxu0
    %v1183 = vadd.f32 0.0, %v1182
    %v1184 = vpop.f32.mrb[0].mxu0
    %v1185 = vpop.f32.mrb[0].mxu0
    %v1186 = vadd.f32 0.0, %v1185
    %v1187 = vpop.f32.mrb[0].mxu0
    %1188 = vmatprep.mubr.bf16.mxu0 %v861
    %1189 = vmatmul.mubr.bf16.gmra.mrb[0].mxu0 %v853
    %v1190 = vpop.f32.mrb[0].mxu0
    %v1191 = vadd.f32 0.0, %v1190
    %v1192 = vpop.f32.mrb[0].mxu0
    %v1193 = vpop.f32.mrb[0].mxu0
    %v1194 = vadd.f32 0.0, %v1193
    %v1195 = vpop.f32.mrb[0].mxu0
    %1196 = vmatprep.mubr.bf16.mxu0 %v877
    %1197 = vmatmul.mubr.bf16.gmra.mrb[0].mxu0 %v869
    %v1198 = vpop.f32.mrb[0].mxu0
    %v1199 = vadd.f32 0.0, %v1198
    %v1200 = vpop.f32.mrb[0].mxu0
    %v1201 = vpop.f32.mrb[0].mxu0
    %v1202 = vadd.f32 0.0, %v1201
    %v1203 = vpop.f32.mrb[0].mxu0
    %1204 = vmatprep.mubr.bf16.mxu0 %v893
    %1205 = vmatmul.mubr.bf16.gmra.mrb[0].mxu0 %v885
    %v1206 = vpop.f32.mrb[0].mxu0
    %v1207 = vadd.f32 0.0, %v1206
    %v1208 = vpop.f32.mrb[0].mxu0
    %v1209 = vpop.f32.mrb[0].mxu0
    %v1210 = vadd.f32 0.0, %v1209
    %v1211 = vpop.f32.mrb[0].mxu0
    %1212 = vmatprep.mubr.bf16.mxu0 %v909
    %1213 = vmatmul.mubr.bf16.gmra.mrb[0].mxu0 %v901
    %v1214 = vpop.f32.mrb[0].mxu0
    %v1215 = vadd.f32 0.0, %v1214
    %v1216 = vpop.f32.mrb[0].mxu0
    %v1217 = vpop.f32.mrb[0].mxu0
    %v1218 = vadd.f32 0.0, %v1217
    %v1219 = vpop.f32.mrb[0].mxu0
    %1220 = vmatprep.mubr.bf16.mxu0 %v925
    %1221 = vmatmul.mubr.bf16.gmra.mrb[0].mxu0 %v917
    %v1222 = vpop.f32.mrb[0].mxu0
    %v1223 = vadd.f32 0.0, %v1222
    %v1224 = vpop.f32.mrb[0].mxu0
    %v1225 = vpop.f32.mrb[0].mxu0
    %v1226 = vadd.f32 0.0, %v1225
    %v1227 = vpop.f32.mrb[0].mxu0
    %1228 = vmatprep.mubr.bf16.mxu0 %v941
    %1229 = vmatmul.mubr.bf16.gmra.mrb[0].mxu0 %v933
    %v1230 = vpop.f32.mrb[0].mxu0
    %v1231 = vadd.f32 0.0, %v1230
    %v1232 = vpop.f32.mrb[0].mxu0
    %v1233 = vpop.f32.mrb[0].mxu0
    %v1234 = vadd.f32 0.0, %v1233
    %v1235 = vpop.f32.mrb[0].mxu0
    %1236 = vmatprep.mubr.bf16.mxu0 %v957
    %1237 = vmatmul.mubr.bf16.gmra.mrb[0].mxu0 %v949
    %v1238 = vpop.f32.mrb[0].mxu0
    %v1239 = vadd.f32 0.0, %v1238
    %v1240 = vpop.f32.mrb[0].mxu0
    %v1241 = vpop.f32.mrb[0].mxu0
    %v1242 = vadd.f32 0.0, %v1241
    %v1243 = vpop.f32.mrb[0].mxu0
    %1244 = vmatprep.mubr.bf16.mxu0 %v973
    %1245 = vmatmul.mubr.bf16.gmra.mrb[0].mxu0 %v965
    %v1246 = vpop.f32.mrb[0].mxu0
    %v1247 = vadd.f32 0.0, %v1246
    %v1248 = vpop.f32.mrb[0].mxu0
    %v1249 = vpop.f32.mrb[0].mxu0
    %v1250 = vadd.f32 0.0, %v1249
    %v1251 = vpop.f32.mrb[0].mxu0
    %1252 = vdwg.mxu0
    %v1253 = vadd.f32 %v506, %v1135
    %v1254 = vadd.f32 %v507, %v1138
    %v1255 = vadd.f32 %v508, %v1143
    %v1256 = vadd.f32 %v509, %v1146
    %v1257 = vadd.f32 %v510, %v1151
    %v1258 = vadd.f32 %v511, %v1154
    %v1259 = vadd.f32 %v512, %v1159
    %v1260 = vadd.f32 %v513, %v1162
    %v1261 = vadd.f32 %v514, %v1167
    %v1262 = vadd.f32 %v515, %v1170
    %v1263 = vadd.f32 %v516, %v1175
    %v1264 = vadd.f32 %v517, %v1178
    %v1265 = vadd.f32 %v518, %v1183
    %v1266 = vadd.f32 %v519, %v1186
    %v1267 = vadd.f32 %v520, %v1191
    %v1268 = vadd.f32 %v521, %v1194
    %v1269 = vadd.f32 %v522, %v1199
    %v1270 = vadd.f32 %v523, %v1202
    %v1271 = vadd.f32 %v524, %v1207
    %v1272 = vadd.f32 %v525, %v1210
    %v1273 = vadd.f32 %v526, %v1215
    %v1274 = vadd.f32 %v527, %v1218
    %v1275 = vadd.f32 %v528, %v1223
    %v1276 = vadd.f32 %v529, %v1226
    %v1277 = vadd.f32 %v530, %v1231
    %v1278 = vadd.f32 %v531, %v1234
    %v1279 = vadd.f32 %v532, %v1239
    %v1280 = vadd.f32 %v533, %v1242
    %v1281 = vadd.f32 %v534, %v1247
    %v1282 = vadd.f32 %v535, %v1250
    %v1283 = vld [vmem:[%s0 + $0x10] sm:$0xff]
    %v1284 = vld [vmem:[%s0 + $0x18] sm:$0xff]
    %v1285 = vld [vmem:[%s0 + $0x20] sm:$0xff]
    %v1286 = vld [vmem:[%s0 + $0x28] sm:$0xff]
    %v1287 = vld [vmem:[%s0 + $0x30] sm:$0xff]
    %v1288 = vld [vmem:[%s0 + $0x38] sm:$0xff]
    %v1289 = vld [vmem:[%s0 + $0x40] sm:$0xff]
    %v1290 = vld [vmem:[%s0 + $0x48] sm:$0xff]
    %v1291 = vld [vmem:[%s0 + $0x50] sm:$0xff]
    %v1292 = vld [vmem:[%s0 + $0x58] sm:$0xff]
    %v1293 = vld [vmem:[%s0 + $0x60] sm:$0xff]
    %v1294 = vld [vmem:[%s0 + $0x68] sm:$0xff]
    %v1295 = vld [vmem:[%s0 + $0x70] sm:$0xff]
    %v1296 = vld [vmem:[%s0 + $0x78] sm:$0xff]
    %v1297 = vld [vmem:[%s0 + $0x80] sm:$0xff]
    %v1298 = vld [vmem:[%s0 + $0x88] sm:$0xff]
    %v1299 = vld [vmem:[%s0 + $0x90] sm:$0xff]
    %v1300 = vld [vmem:[%s0 + $0x98] sm:$0xff]
    %v1301 = vld [vmem:[%s0 + $0xa0] sm:$0xff]
    %v1302 = vld [vmem:[%s0 + $0xa8] sm:$0xff]
    %v1303 = vld [vmem:[%s0 + $0xb0] sm:$0xff]
    %v1304 = vld [vmem:[%s0 + $0xb8] sm:$0xff]
    %v1305 = vld [vmem:[%s0 + $0xc0] sm:$0xff]
    %v1306 = vld [vmem:[%s0 + $0xc8] sm:$0xff]
    %v1307 = vld [vmem:[%s0 + $0xd0] sm:$0xff]
    %v1308 = vld [vmem:[%s0 + $0xd8] sm:$0xff]
    %v1309 = vld [vmem:[%s0 + $0xe0] sm:$0xff]
    %v1310 = vld [vmem:[%s0 + $0xe8] sm:$0xff]
    %v1311 = vld [vmem:[%s0 + $0xf0] sm:$0xff]
    %v1312 = vld [vmem:[%s0 + $0xf8] sm:$0xff]
    %s1313 = scalar_lea.vmem %s1, 256
    %v1314 = vld [vmem:[%s1313] sm:$0xf]
    %v1315 = vld [vmem:[%s1313 + $0x4] sm:$0xf]
    %v1316 = vld [vmem:[%s1313 + $0x8] sm:$0xf]
    %v1317 = vld [vmem:[%s1313 + $0xc] sm:$0xf]
    %v1318 = vld [vmem:[%s1313 + $0x10] sm:$0xf]
    %v1319 = vld [vmem:[%s1313 + $0x14] sm:$0xf]
    %v1320 = vld [vmem:[%s1313 + $0x18] sm:$0xf]
    %v1321 = vld [vmem:[%s1313 + $0x1c] sm:$0xf]
    %v1322 = vld [vmem:[%s1313 + $0x20] sm:$0xf]
    %v1323 = vld [vmem:[%s1313 + $0x24] sm:$0xf]
    %v1324 = vld [vmem:[%s1313 + $0x28] sm:$0xf]
    %v1325 = vld [vmem:[%s1313 + $0x2c] sm:$0xf]
    %v1326 = vld [vmem:[%s1313 + $0x30] sm:$0xf]
    %v1327 = vld [vmem:[%s1313 + $0x34] sm:$0xf]
    %v1328 = vld [vmem:[%s1313 + $0x38] sm:$0xf]
    %v1329 = vld [vmem:[%s1313 + $0x3c] sm:$0xf]
    %v1330 = vld [vmem:[%s1313 + $0x40] sm:$0xf]
    %v1331 = vld [vmem:[%s1313 + $0x44] sm:$0xf]
    %v1332 = vld [vmem:[%s1313 + $0x48] sm:$0xf]
    %v1333 = vld [vmem:[%s1313 + $0x4c] sm:$0xf]
    %v1334 = vld [vmem:[%s1313 + $0x50] sm:$0xf]
    %v1335 = vld [vmem:[%s1313 + $0x54] sm:$0xf]
    %v1336 = vld [vmem:[%s1313 + $0x58] sm:$0xf]
    %v1337 = vld [vmem:[%s1313 + $0x5c] sm:$0xf]
    %v1338 = vld [vmem:[%s1313 + $0x60] sm:$0xf]
    %v1339 = vld [vmem:[%s1313 + $0x64] sm:$0xf]
    %v1340 = vld [vmem:[%s1313 + $0x68] sm:$0xf]
    %v1341 = vld [vmem:[%s1313 + $0x6c] sm:$0xf]
    %v1342 = vld [vmem:[%s1313 + $0x70] sm:$0xf]
    %v1343 = vld [vmem:[%s1313 + $0x74] sm:$0xf]
    %v1344 = vld [vmem:[%s1313 + $0x78] sm:$0xf]
    %v1345 = vld [vmem:[%s1313 + $0x7c] sm:$0xf]
    %v1376 = vunpack.c.l.b16 %v1283
    %v1377 = vunpack.c.h.b16 %v1283
    %v1378 = vunpack.c.l.b16 %v1284
    %v1379 = vunpack.c.h.b16 %v1284
    %v1380 = vunpack.c.l.b16 %v1285
    %v1381 = vunpack.c.h.b16 %v1285
    %v1382 = vunpack.c.l.b16 %v1286
    %v1383 = vunpack.c.h.b16 %v1286
    %v1384 = vunpack.c.l.b16 %v1287
    %v1385 = vunpack.c.h.b16 %v1287
    %v1386 = vunpack.c.l.b16 %v1288
    %v1387 = vunpack.c.h.b16 %v1288
    %v1388 = vunpack.c.l.b16 %v1289
    %v1389 = vunpack.c.h.b16 %v1289
    %v1390 = vunpack.c.l.b16 %v1290
    %v1391 = vunpack.c.h.b16 %v1290
    %v1392 = vunpack.c.l.b16 %v1291
    %v1393 = vunpack.c.h.b16 %v1291
    %v1394 = vunpack.c.l.b16 %v1292
    %v1395 = vunpack.c.h.b16 %v1292
    %v1396 = vunpack.c.l.b16 %v1293
    %v1397 = vunpack.c.h.b16 %v1293
    %v1398 = vunpack.c.l.b16 %v1294
    %v1399 = vunpack.c.h.b16 %v1294
    %v1400 = vunpack.c.l.b16 %v1295
    %v1401 = vunpack.c.h.b16 %v1295
    %v1402 = vunpack.c.l.b16 %v1296
    %v1403 = vunpack.c.h.b16 %v1296
    %v1404 = vunpack.c.l.b16 %v1297
    %v1405 = vunpack.c.h.b16 %v1297
    %v1406 = vunpack.c.l.b16 %v1298
    %v1407 = vunpack.c.h.b16 %v1298
    %v1408 = vunpack.c.l.b16 %v1299
    %v1409 = vunpack.c.h.b16 %v1299
    %v1410 = vunpack.c.l.b16 %v1300
    %v1411 = vunpack.c.h.b16 %v1300
    %v1412 = vunpack.c.l.b16 %v1301
    %v1413 = vunpack.c.h.b16 %v1301
    %v1414 = vunpack.c.l.b16 %v1302
    %v1415 = vunpack.c.h.b16 %v1302
    %v1416 = vunpack.c.l.b16 %v1303
    %v1417 = vunpack.c.h.b16 %v1303
    %v1418 = vunpack.c.l.b16 %v1304
    %v1419 = vunpack.c.h.b16 %v1304
    %v1420 = vunpack.c.l.b16 %v1305
    %v1421 = vunpack.c.h.b16 %v1305
    %v1422 = vunpack.c.l.b16 %v1306
    %v1423 = vunpack.c.h.b16 %v1306
    %v1424 = vunpack.c.l.b16 %v1307
    %v1425 = vunpack.c.h.b16 %v1307
    %v1426 = vunpack.c.l.b16 %v1308
    %v1427 = vunpack.c.h.b16 %v1308
    %v1428 = vunpack.c.l.b16 %v1309
    %v1429 = vunpack.c.h.b16 %v1309
    %v1430 = vunpack.c.l.b16 %v1310
    %v1431 = vunpack.c.h.b16 %v1310
    %v1432 = vunpack.c.l.b16 %v1311
    %v1433 = vunpack.c.h.b16 %v1311
    %v1434 = vunpack.c.l.b16 %v1312
    %v1435 = vunpack.c.h.b16 %v1312
    %v1436 = vpack.c.b16 %v1378, %v1376
    %v1437 = vpack.c.b16 %v1379, %v1377
    %v1438 = vpack.c.b16 %v1382, %v1380
    %v1439 = vpack.c.b16 %v1383, %v1381
    %v1440 = vpack.c.b16 %v1386, %v1384
    %v1441 = vpack.c.b16 %v1387, %v1385
    %v1442 = vpack.c.b16 %v1390, %v1388
    %v1443 = vpack.c.b16 %v1391, %v1389
    %v1444 = vpack.c.b16 %v1394, %v1392
    %v1445 = vpack.c.b16 %v1395, %v1393
    %v1446 = vpack.c.b16 %v1398, %v1396
    %v1447 = vpack.c.b16 %v1399, %v1397
    %v1448 = vpack.c.b16 %v1402, %v1400
    %v1449 = vpack.c.b16 %v1403, %v1401
    %v1450 = vpack.c.b16 %v1406, %v1404
    %v1451 = vpack.c.b16 %v1407, %v1405
    %v1452 = vpack.c.b16 %v1410, %v1408
    %v1453 = vpack.c.b16 %v1411, %v1409
    %v1454 = vpack.c.b16 %v1414, %v1412
    %v1455 = vpack.c.b16 %v1415, %v1413
    %v1456 = vpack.c.b16 %v1418, %v1416
    %v1457 = vpack.c.b16 %v1419, %v1417
    %v1458 = vpack.c.b16 %v1422, %v1420
    %v1459 = vpack.c.b16 %v1423, %v1421
    %v1460 = vpack.c.b16 %v1426, %v1424
    %v1461 = vpack.c.b16 %v1427, %v1425
    %v1462 = vpack.c.b16 %v1430, %v1428
    %v1463 = vpack.c.b16 %v1431, %v1429
    %v1464 = vpack.c.b16 %v1434, %v1432
    %v1465 = vpack.c.b16 %v1435, %v1433
    %v1528 = vunpack.c.l.b16 %v1314
    %v1529 = vunpack.c.l.b16 %v1315
    %v1530 = vunpack.c.l.b16 %v1316
    %v1531 = vunpack.c.l.b16 %v1317
    %v1532 = vunpack.c.l.b16 %v1318
    %v1533 = vunpack.c.l.b16 %v1319
    %v1534 = vunpack.c.l.b16 %v1320
    %v1535 = vunpack.c.l.b16 %v1321
    %v1536 = vunpack.c.l.b16 %v1322
    %v1537 = vunpack.c.l.b16 %v1323
    %v1538 = vunpack.c.l.b16 %v1324
    %v1539 = vunpack.c.l.b16 %v1325
    %v1540 = vunpack.c.l.b16 %v1326
    %v1541 = vunpack.c.l.b16 %v1327
    %v1542 = vunpack.c.l.b16 %v1328
    %v1543 = vunpack.c.l.b16 %v1329
    %v1544 = vunpack.c.l.b16 %v1330
    %v1545 = vunpack.c.l.b16 %v1331
    %v1546 = vunpack.c.l.b16 %v1332
    %v1547 = vunpack.c.l.b16 %v1333
    %v1548 = vunpack.c.l.b16 %v1334
    %v1549 = vunpack.c.l.b16 %v1335
    %v1550 = vunpack.c.l.b16 %v1336
    %v1551 = vunpack.c.l.b16 %v1337
    %v1552 = vunpack.c.l.b16 %v1338
    %v1553 = vunpack.c.l.b16 %v1339
    %v1554 = vunpack.c.l.b16 %v1340
    %v1555 = vunpack.c.l.b16 %v1341
    %v1556 = vunpack.c.l.b16 %v1342
    %v1557 = vunpack.c.l.b16 %v1343
    %v1558 = vunpack.c.l.b16 %v1344
    %v1559 = vunpack.c.l.b16 %v1345
    %v1560 = vpack.c.b16 %v1529, %v1528
    %v1561 = vpack.c.b16 %v1531, %v1530
    %v1562 = vpack.c.b16 %v1533, %v1532
    %v1563 = vpack.c.b16 %v1535, %v1534
    %v1564 = vpack.c.b16 %v1537, %v1536
    %v1565 = vpack.c.b16 %v1539, %v1538
    %v1566 = vpack.c.b16 %v1541, %v1540
    %v1567 = vpack.c.b16 %v1543, %v1542
    %v1568 = vpack.c.b16 %v1545, %v1544
    %v1569 = vpack.c.b16 %v1547, %v1546
    %v1570 = vpack.c.b16 %v1549, %v1548
    %v1571 = vpack.c.b16 %v1551, %v1550
    %v1572 = vpack.c.b16 %v1553, %v1552
    %v1573 = vpack.c.b16 %v1555, %v1554
    %v1574 = vpack.c.b16 %v1557, %v1556
    %v1575 = vpack.c.b16 %v1559, %v1558
    %1592 = vmatprep.subr.bf16.mxu0 0
    %1593 = vmatpush1.bf16.msra.mxu0 %v1560
    %1594 = vmatprep.subr.bf16.mxu0 0
    %1595 = vmatpush1.bf16.msra.mxu0 %v1561
    %1596 = vmatprep.subr.bf16.mxu0 0
    %1597 = vmatpush1.bf16.msra.mxu0 %v1562
    %1598 = vmatprep.subr.bf16.mxu0 0
    %1599 = vmatpush1.bf16.msra.mxu0 %v1563
    %1600 = vmatprep.subr.bf16.mxu0 0
    %1601 = vmatpush1.bf16.msra.mxu0 %v1564
    %1602 = vmatprep.subr.bf16.mxu0 0
    %1603 = vmatpush1.bf16.msra.mxu0 %v1565
    %1604 = vmatprep.subr.bf16.mxu0 0
    %1605 = vmatpush1.bf16.msra.mxu0 %v1566
    %1606 = vmatprep.subr.bf16.mxu0 0
    %1607 = vmatpush1.bf16.msra.mxu0 %v1567
    %1608 = vmatprep.subr.bf16.mxu0 0
    %1609 = vmatpush1.bf16.msra.mxu0 %v1568
    %1610 = vmatprep.subr.bf16.mxu0 0
    %1611 = vmatpush1.bf16.msra.mxu0 %v1569
    %1612 = vmatprep.subr.bf16.mxu0 0
    %1613 = vmatpush1.bf16.msra.mxu0 %v1570
    %1614 = vmatprep.subr.bf16.mxu0 0
    %1615 = vmatpush1.bf16.msra.mxu0 %v1571
    %1616 = vmatprep.subr.bf16.mxu0 0
    %1617 = vmatpush1.bf16.msra.mxu0 %v1572
    %1618 = vmatprep.subr.bf16.mxu0 0
    %1619 = vmatpush1.bf16.msra.mxu0 %v1573
    %1620 = vmatprep.subr.bf16.mxu0 0
    %1621 = vmatpush1.bf16.msra.mxu0 %v1574
    %1622 = vmatprep.subr.bf16.mxu0 0
    %1623 = vmatpush1.bf16.msra.mxu0 %v1575
    %1624 = vmatprep.mubr.bf16.mxu0 %v1437
    %1625 = vmatmul.mubr.bf16.gmra.mrb[0].mxu0 %v1436
    %v1626 = vpop.f32.mrb[0].mxu0
    %v1627 = vadd.f32 0.0, %v1626
    %v1628 = vpop.f32.mrb[0].mxu0
    %v1629 = vpop.f32.mrb[0].mxu0
    %v1630 = vadd.f32 0.0, %v1629
    %v1631 = vpop.f32.mrb[0].mxu0
    %1632 = vmatprep.mubr.bf16.mxu0 %v1439
    %1633 = vmatmul.mubr.bf16.gmra.mrb[0].mxu0 %v1438
    %v1634 = vpop.f32.mrb[0].mxu0
    %v1635 = vadd.f32 0.0, %v1634
    %v1636 = vpop.f32.mrb[0].mxu0
    %v1637 = vpop.f32.mrb[0].mxu0
    %v1638 = vadd.f32 0.0, %v1637
    %v1639 = vpop.f32.mrb[0].mxu0
    %1640 = vmatprep.mubr.bf16.mxu0 %v1441
    %1641 = vmatmul.mubr.bf16.gmra.mrb[0].mxu0 %v1440
    %v1642 = vpop.f32.mrb[0].mxu0
    %v1643 = vadd.f32 0.0, %v1642
    %v1644 = vpop.f32.mrb[0].mxu0
    %v1645 = vpop.f32.mrb[0].mxu0
    %v1646 = vadd.f32 0.0, %v1645
    %v1647 = vpop.f32.mrb[0].mxu0
    %1648 = vmatprep.mubr.bf16.mxu0 %v1443
    %1649 = vmatmul.mubr.bf16.gmra.mrb[0].mxu0 %v1442
    %v1650 = vpop.f32.mrb[0].mxu0
    %v1651 = vadd.f32 0.0, %v1650
    %v1652 = vpop.f32.mrb[0].mxu0
    %v1653 = vpop.f32.mrb[0].mxu0
    %v1654 = vadd.f32 0.0, %v1653
    %v1655 = vpop.f32.mrb[0].mxu0
    %1656 = vmatprep.mubr.bf16.mxu0 %v1445
    %1657 = vmatmul.mubr.bf16.gmra.mrb[0].mxu0 %v1444
    %v1658 = vpop.f32.mrb[0].mxu0
    %v1659 = vadd.f32 0.0, %v1658
    %v1660 = vpop.f32.mrb[0].mxu0
    %v1661 = vpop.f32.mrb[0].mxu0
    %v1662 = vadd.f32 0.0, %v1661
    %v1663 = vpop.f32.mrb[0].mxu0
    %1664 = vmatprep.mubr.bf16.mxu0 %v1447
    %1665 = vmatmul.mubr.bf16.gmra.mrb[0].mxu0 %v1446
    %v1666 = vpop.f32.mrb[0].mxu0
    %v1667 = vadd.f32 0.0, %v1666
    %v1668 = vpop.f32.mrb[0].mxu0
    %v1669 = vpop.f32.mrb[0].mxu0
    %v1670 = vadd.f32 0.0, %v1669
    %v1671 = vpop.f32.mrb[0].mxu0
    %1672 = vmatprep.mubr.bf16.mxu0 %v1449
    %1673 = vmatmul.mubr.bf16.gmra.mrb[0].mxu0 %v1448
    %v1674 = vpop.f32.mrb[0].mxu0
    %v1675 = vadd.f32 0.0, %v1674
    %v1676 = vpop.f32.mrb[0].mxu0
    %v1677 = vpop.f32.mrb[0].mxu0
    %v1678 = vadd.f32 0.0, %v1677
    %v1679 = vpop.f32.mrb[0].mxu0
    %1680 = vmatprep.mubr.bf16.mxu0 %v1451
    %1681 = vmatmul.mubr.bf16.gmra.mrb[0].mxu0 %v1450
    %v1682 = vpop.f32.mrb[0].mxu0
    %v1683 = vadd.f32 0.0, %v1682
    %v1684 = vpop.f32.mrb[0].mxu0
    %v1685 = vpop.f32.mrb[0].mxu0
    %v1686 = vadd.f32 0.0, %v1685
    %v1687 = vpop.f32.mrb[0].mxu0
    %1688 = vmatprep.mubr.bf16.mxu0 %v1453
    %1689 = vmatmul.mubr.bf16.gmra.mrb[0].mxu0 %v1452
    %v1690 = vpop.f32.mrb[0].mxu0
    %v1691 = vadd.f32 0.0, %v1690
    %v1692 = vpop.f32.mrb[0].mxu0
    %v1693 = vpop.f32.mrb[0].mxu0
    %v1694 = vadd.f32 0.0, %v1693
    %v1695 = vpop.f32.mrb[0].mxu0
    %1696 = vmatprep.mubr.bf16.mxu0 %v1455
    %1697 = vmatmul.mubr.bf16.gmra.mrb[0].mxu0 %v1454
    %v1698 = vpop.f32.mrb[0].mxu0
    %v1699 = vadd.f32 0.0, %v1698
    %v1700 = vpop.f32.mrb[0].mxu0
    %v1701 = vpop.f32.mrb[0].mxu0
    %v1702 = vadd.f32 0.0, %v1701
    %v1703 = vpop.f32.mrb[0].mxu0
    %1704 = vmatprep.mubr.bf16.mxu0 %v1457
    %1705 = vmatmul.mubr.bf16.gmra.mrb[0].mxu0 %v1456
    %v1706 = vpop.f32.mrb[0].mxu0
    %v1707 = vadd.f32 0.0, %v1706
    %v1708 = vpop.f32.mrb[0].mxu0
    %v1709 = vpop.f32.mrb[0].mxu0
    %v1710 = vadd.f32 0.0, %v1709
    %v1711 = vpop.f32.mrb[0].mxu0
    %1712 = vmatprep.mubr.bf16.mxu0 %v1459
    %1713 = vmatmul.mubr.bf16.gmra.mrb[0].mxu0 %v1458
    %v1714 = vpop.f32.mrb[0].mxu0
    %v1715 = vadd.f32 0.0, %v1714
    %v1716 = vpop.f32.mrb[0].mxu0
    %v1717 = vpop.f32.mrb[0].mxu0
    %v1718 = vadd.f32 0.0, %v1717
    %v1719 = vpop.f32.mrb[0].mxu0
    %1720 = vmatprep.mubr.bf16.mxu0 %v1461
    %1721 = vmatmul.mubr.bf16.gmra.mrb[0].mxu0 %v1460
    %v1722 = vpop.f32.mrb[0].mxu0
    %v1723 = vadd.f32 0.0, %v1722
    %v1724 = vpop.f32.mrb[0].mxu0
    %v1725 = vpop.f32.mrb[0].mxu0
    %v1726 = vadd.f32 0.0, %v1725
    %v1727 = vpop.f32.mrb[0].mxu0
    %1728 = vmatprep.mubr.bf16.mxu0 %v1463
    %1729 = vmatmul.mubr.bf16.gmra.mrb[0].mxu0 %v1462
    %v1730 = vpop.f32.mrb[0].mxu0
    %v1731 = vadd.f32 0.0, %v1730
    %v1732 = vpop.f32.mrb[0].mxu0
    %v1733 = vpop.f32.mrb[0].mxu0
    %v1734 = vadd.f32 0.0, %v1733
    %v1735 = vpop.f32.mrb[0].mxu0
    %1736 = vmatprep.mubr.bf16.mxu0 %v1465
    %1737 = vmatmul.mubr.bf16.gmra.mrb[0].mxu0 %v1464
    %v1738 = vpop.f32.mrb[0].mxu0
    %v1739 = vadd.f32 0.0, %v1738
    %v1740 = vpop.f32.mrb[0].mxu0
    %v1741 = vpop.f32.mrb[0].mxu0
    %v1742 = vadd.f32 0.0, %v1741
    %v1743 = vpop.f32.mrb[0].mxu0
    %1744 = vdwg.mxu0
    %v1745 = vadd.f32 %v1253, %v1627
    %v1746 = vadd.f32 %v1254, %v1630
    %v1747 = vadd.f32 %v1255, %v1635
    %v1748 = vadd.f32 %v1256, %v1638
    %v1749 = vadd.f32 %v1257, %v1643
    %v1750 = vadd.f32 %v1258, %v1646
    %v1751 = vadd.f32 %v1259, %v1651
    %v1752 = vadd.f32 %v1260, %v1654
    %v1753 = vadd.f32 %v1261, %v1659
    %v1754 = vadd.f32 %v1262, %v1662
    %v1755 = vadd.f32 %v1263, %v1667
    %v1756 = vadd.f32 %v1264, %v1670
    %v1757 = vadd.f32 %v1265, %v1675
    %v1758 = vadd.f32 %v1266, %v1678
    %v1759 = vadd.f32 %v1267, %v1683
    %v1760 = vadd.f32 %v1268, %v1686
    %v1761 = vadd.f32 %v1269, %v1691
    %v1762 = vadd.f32 %v1270, %v1694
    %v1763 = vadd.f32 %v1271, %v1699
    %v1764 = vadd.f32 %v1272, %v1702
    %v1765 = vadd.f32 %v1273, %v1707
    %v1766 = vadd.f32 %v1274, %v1710
    %v1767 = vadd.f32 %v1275, %v1715
    %v1768 = vadd.f32 %v1276, %v1718
    %v1769 = vadd.f32 %v1277, %v1723
    %v1770 = vadd.f32 %v1278, %v1726
    %v1771 = vadd.f32 %v1279, %v1731
    %v1772 = vadd.f32 %v1280, %v1734
    %v1773 = vadd.f32 %v1281, %v1739
    %v1774 = vadd.f32 %v1282, %v1742
    %v1775 = vld [vmem:[%s0 + $0x10] sm:$0xff]
    %v1776 = vld [vmem:[%s0 + $0x18] sm:$0xff]
    %v1777 = vld [vmem:[%s0 + $0x20] sm:$0xff]
    %v1778 = vld [vmem:[%s0 + $0x28] sm:$0xff]
    %v1779 = vld [vmem:[%s0 + $0x30] sm:$0xff]
    %v1780 = vld [vmem:[%s0 + $0x38] sm:$0xff]
    %v1781 = vld [vmem:[%s0 + $0x40] sm:$0xff]
    %v1782 = vld [vmem:[%s0 + $0x48] sm:$0xff]
    %v1783 = vld [vmem:[%s0 + $0x50] sm:$0xff]
    %v1784 = vld [vmem:[%s0 + $0x58] sm:$0xff]
    %v1785 = vld [vmem:[%s0 + $0x60] sm:$0xff]
    %v1786 = vld [vmem:[%s0 + $0x68] sm:$0xff]
    %v1787 = vld [vmem:[%s0 + $0x70] sm:$0xff]
    %v1788 = vld [vmem:[%s0 + $0x78] sm:$0xff]
    %v1789 = vld [vmem:[%s0 + $0x80] sm:$0xff]
    %v1790 = vld [vmem:[%s0 + $0x88] sm:$0xff]
    %v1791 = vld [vmem:[%s0 + $0x90] sm:$0xff]
    %v1792 = vld [vmem:[%s0 + $0x98] sm:$0xff]
    %v1793 = vld [vmem:[%s0 + $0xa0] sm:$0xff]
    %v1794 = vld [vmem:[%s0 + $0xa8] sm:$0xff]
    %v1795 = vld [vmem:[%s0 + $0xb0] sm:$0xff]
    %v1796 = vld [vmem:[%s0 + $0xb8] sm:$0xff]
    %v1797 = vld [vmem:[%s0 + $0xc0] sm:$0xff]
    %v1798 = vld [vmem:[%s0 + $0xc8] sm:$0xff]
    %v1799 = vld [vmem:[%s0 + $0xd0] sm:$0xff]
    %v1800 = vld [vmem:[%s0 + $0xd8] sm:$0xff]
    %v1801 = vld [vmem:[%s0 + $0xe0] sm:$0xff]
    %v1802 = vld [vmem:[%s0 + $0xe8] sm:$0xff]
    %v1803 = vld [vmem:[%s0 + $0xf0] sm:$0xff]
    %v1804 = vld [vmem:[%s0 + $0xf8] sm:$0xff]
    %v1805 = vld [vmem:[%s0 + $0x100] sm:$0x11]
    %s1806 = scalar_lea.vmem %s1, 384
    %v1807 = vld [vmem:[%s1806] sm:$0xf]
    %v1808 = vld [vmem:[%s1806 + $0x4] sm:$0xf]
    %v1809 = vld [vmem:[%s1806 + $0x8] sm:$0xf]
    %v1810 = vld [vmem:[%s1806 + $0xc] sm:$0xf]
    %v1811 = vld [vmem:[%s1806 + $0x10] sm:$0xf]
    %v1812 = vld [vmem:[%s1806 + $0x14] sm:$0xf]
    %v1813 = vld [vmem:[%s1806 + $0x18] sm:$0xf]
    %v1814 = vld [vmem:[%s1806 + $0x1c] sm:$0xf]
    %v1815 = vld [vmem:[%s1806 + $0x20] sm:$0xf]
    %v1816 = vld [vmem:[%s1806 + $0x24] sm:$0xf]
    %v1817 = vld [vmem:[%s1806 + $0x28] sm:$0xf]
    %v1818 = vld [vmem:[%s1806 + $0x2c] sm:$0xf]
    %v1819 = vld [vmem:[%s1806 + $0x30] sm:$0xf]
    %v1820 = vld [vmem:[%s1806 + $0x34] sm:$0xf]
    %v1821 = vld [vmem:[%s1806 + $0x38] sm:$0xf]
    %v1822 = vld [vmem:[%s1806 + $0x3c] sm:$0xf]
    %v1823 = vld [vmem:[%s1806 + $0x40] sm:$0xf]
    %v1824 = vld [vmem:[%s1806 + $0x44] sm:$0xf]
    %v1825 = vld [vmem:[%s1806 + $0x48] sm:$0xf]
    %v1826 = vld [vmem:[%s1806 + $0x4c] sm:$0xf]
    %v1827 = vld [vmem:[%s1806 + $0x50] sm:$0xf]
    %v1828 = vld [vmem:[%s1806 + $0x54] sm:$0xf]
    %v1829 = vld [vmem:[%s1806 + $0x58] sm:$0xf]
    %v1830 = vld [vmem:[%s1806 + $0x5c] sm:$0xf]
    %v1831 = vld [vmem:[%s1806 + $0x60] sm:$0xf]
    %v1832 = vld [vmem:[%s1806 + $0x64] sm:$0xf]
    %v1833 = vld [vmem:[%s1806 + $0x68] sm:$0xf]
    %v1834 = vld [vmem:[%s1806 + $0x6c] sm:$0xf]
    %v1835 = vld [vmem:[%s1806 + $0x70] sm:$0xf]
    %v1836 = vld [vmem:[%s1806 + $0x74] sm:$0xf]
    %v1837 = vld [vmem:[%s1806 + $0x78] sm:$0xf]
    %v1838 = vld [vmem:[%s1806 + $0x7c] sm:$0xf]
    %v1870 = vunpack.c.l.b16 %v1775
    %v1871 = vunpack.c.h.b16 %v1775
    %v1872 = vunpack.c.l.b16 %v1776
    %v1873 = vunpack.c.h.b16 %v1776
    %v1874 = vunpack.c.l.b16 %v1777
    %v1875 = vunpack.c.h.b16 %v1777
    %v1876 = vunpack.c.l.b16 %v1778
    %v1877 = vunpack.c.h.b16 %v1778
    %v1878 = vunpack.c.l.b16 %v1779
    %v1879 = vunpack.c.h.b16 %v1779
    %v1880 = vunpack.c.l.b16 %v1780
    %v1881 = vunpack.c.h.b16 %v1780
    %v1882 = vunpack.c.l.b16 %v1781
    %v1883 = vunpack.c.h.b16 %v1781
    %v1884 = vunpack.c.l.b16 %v1782
    %v1885 = vunpack.c.h.b16 %v1782
    %v1886 = vunpack.c.l.b16 %v1783
    %v1887 = vunpack.c.h.b16 %v1783
    %v1888 = vunpack.c.l.b16 %v1784
    %v1889 = vunpack.c.h.b16 %v1784
    %v1890 = vunpack.c.l.b16 %v1785
    %v1891 = vunpack.c.h.b16 %v1785
    %v1892 = vunpack.c.l.b16 %v1786
    %v1893 = vunpack.c.h.b16 %v1786
    %v1894 = vunpack.c.l.b16 %v1787
    %v1895 = vunpack.c.h.b16 %v1787
    %v1896 = vunpack.c.l.b16 %v1788
    %v1897 = vunpack.c.h.b16 %v1788
    %v1898 = vunpack.c.l.b16 %v1789
    %v1899 = vunpack.c.h.b16 %v1789
    %v1900 = vunpack.c.l.b16 %v1790
    %v1901 = vunpack.c.h.b16 %v1790
    %v1902 = vunpack.c.l.b16 %v1791
    %v1903 = vunpack.c.h.b16 %v1791
    %v1904 = vunpack.c.l.b16 %v1792
    %v1905 = vunpack.c.h.b16 %v1792
    %v1906 = vunpack.c.l.b16 %v1793
    %v1907 = vunpack.c.h.b16 %v1793
    %v1908 = vunpack.c.l.b16 %v1794
    %v1909 = vunpack.c.h.b16 %v1794
    %v1910 = vunpack.c.l.b16 %v1795
    %v1911 = vunpack.c.h.b16 %v1795
    %v1912 = vunpack.c.l.b16 %v1796
    %v1913 = vunpack.c.h.b16 %v1796
    %v1914 = vunpack.c.l.b16 %v1797
    %v1915 = vunpack.c.h.b16 %v1797
    %v1916 = vunpack.c.l.b16 %v1798
    %v1917 = vunpack.c.h.b16 %v1798
    %v1918 = vunpack.c.l.b16 %v1799
    %v1919 = vunpack.c.h.b16 %v1799
    %v1920 = vunpack.c.l.b16 %v1800
    %v1921 = vunpack.c.h.b16 %v1800
    %v1922 = vunpack.c.l.b16 %v1801
    %v1923 = vunpack.c.h.b16 %v1801
    %v1924 = vunpack.c.l.b16 %v1802
    %v1925 = vunpack.c.h.b16 %v1802
    %v1926 = vunpack.c.l.b16 %v1803
    %v1927 = vunpack.c.h.b16 %v1803
    %v1928 = vunpack.c.l.b16 %v1804
    %v1929 = vunpack.c.h.b16 %v1804
    %v1930 = vunpack.c.l.b16 %v1805
    %v1931 = vunpack.c.h.b16 %v1805
    %v1932 = vpack.c.b16 %v1872, %v1870
    %v1933 = vpack.c.b16 %v1873, %v1871
    %v1934 = vpack.c.b16 %v1876, %v1874
    %v1935 = vpack.c.b16 %v1877, %v1875
    %v1936 = vpack.c.b16 %v1880, %v1878
    %v1937 = vpack.c.b16 %v1881, %v1879
    %v1938 = vpack.c.b16 %v1884, %v1882
    %v1939 = vpack.c.b16 %v1885, %v1883
    %v1940 = vpack.c.b16 %v1888, %v1886
    %v1941 = vpack.c.b16 %v1889, %v1887
    %v1942 = vpack.c.b16 %v1892, %v1890
    %v1943 = vpack.c.b16 %v1893, %v1891
    %v1944 = vpack.c.b16 %v1896, %v1894
    %v1945 = vpack.c.b16 %v1897, %v1895
    %v1946 = vpack.c.b16 %v1900, %v1898
    %v1947 = vpack.c.b16 %v1901, %v1899
    %v1948 = vpack.c.b16 %v1904, %v1902
    %v1949 = vpack.c.b16 %v1905, %v1903
    %v1950 = vpack.c.b16 %v1908, %v1906
    %v1951 = vpack.c.b16 %v1909, %v1907
    %v1952 = vpack.c.b16 %v1912, %v1910
    %v1953 = vpack.c.b16 %v1913, %v1911
    %v1954 = vpack.c.b16 %v1916, %v1914
    %v1955 = vpack.c.b16 %v1917, %v1915
    %v1956 = vpack.c.b16 %v1920, %v1918
    %v1957 = vpack.c.b16 %v1921, %v1919
    %v1958 = vpack.c.b16 %v1924, %v1922
    %v1959 = vpack.c.b16 %v1925, %v1923
    %v1960 = vpack.c.b16 %v1928, %v1926
    %v1961 = vpack.c.b16 %v1929, %v1927
    %v1962 = vpack.c.b16 %v1930, %v1930
    %v1963 = vpack.c.b16 %v1931, %v1931
    %v1965 = vshrl.u32 %v1932, 16
    %v1967 = vshll.u32 %v1932, 16
    %v1969 = vrot.slane %v1967, 1
    %v1970 = vor.u32 %v1965, %v1969
    %v1972 = vshll.u32 %v1934, 16
    %v1974 = vrot.slane %v1972, 1
    %v1975 = vsel %vm725, %v1970, %v1974
    %v1977 = vshrl.u32 %v1933, 16
    %v1979 = vshll.u32 %v1933, 16
    %v1981 = vrot.slane %v1979, 1
    %v1982 = vor.u32 %v1977, %v1981
    %v1984 = vshll.u32 %v1935, 16
    %v1986 = vrot.slane %v1984, 1
    %v1987 = vsel %vm725, %v1982, %v1986
    %v1988 = vshrl.u32 %v1934, 16
    %v1990 = vor.u32 %v1988, %v1974
    %v1992 = vshll.u32 %v1936, 16
    %v1994 = vrot.slane %v1992, 1
    %v1995 = vsel %vm725, %v1990, %v1994
    %v1996 = vshrl.u32 %v1935, 16
    %v1998 = vor.u32 %v1996, %v1986
    %v2000 = vshll.u32 %v1937, 16
    %v2002 = vrot.slane %v2000, 1
    %v2003 = vsel %vm725, %v1998, %v2002
    %v2004 = vshrl.u32 %v1936, 16
    %v2006 = vor.u32 %v2004, %v1994
    %v2008 = vshll.u32 %v1938, 16
    %v2010 = vrot.slane %v2008, 1
    %v2011 = vsel %vm725, %v2006, %v2010
    %v2012 = vshrl.u32 %v1937, 16
    %v2014 = vor.u32 %v2012, %v2002
    %v2016 = vshll.u32 %v1939, 16
    %v2018 = vrot.slane %v2016, 1
    %v2019 = vsel %vm725, %v2014, %v2018
    %v2020 = vshrl.u32 %v1938, 16
    %v2022 = vor.u32 %v2020, %v2010
    %v2024 = vshll.u32 %v1940, 16
    %v2026 = vrot.slane %v2024, 1
    %v2027 = vsel %vm725, %v2022, %v2026
    %v2028 = vshrl.u32 %v1939, 16
    %v2030 = vor.u32 %v2028, %v2018
    %v2032 = vshll.u32 %v1941, 16
    %v2034 = vrot.slane %v2032, 1
    %v2035 = vsel %vm725, %v2030, %v2034
    %v2036 = vshrl.u32 %v1940, 16
    %v2038 = vor.u32 %v2036, %v2026
    %v2040 = vshll.u32 %v1942, 16
    %v2042 = vrot.slane %v2040, 1
    %v2043 = vsel %vm725, %v2038, %v2042
    %v2044 = vshrl.u32 %v1941, 16
    %v2046 = vor.u32 %v2044, %v2034
    %v2048 = vshll.u32 %v1943, 16
    %v2050 = vrot.slane %v2048, 1
    %v2051 = vsel %vm725, %v2046, %v2050
    %v2052 = vshrl.u32 %v1942, 16
    %v2054 = vor.u32 %v2052, %v2042
    %v2056 = vshll.u32 %v1944, 16
    %v2058 = vrot.slane %v2056, 1
    %v2059 = vsel %vm725, %v2054, %v2058
    %v2060 = vshrl.u32 %v1943, 16
    %v2062 = vor.u32 %v2060, %v2050
    %v2064 = vshll.u32 %v1945, 16
    %v2066 = vrot.slane %v2064, 1
    %v2067 = vsel %vm725, %v2062, %v2066
    %v2068 = vshrl.u32 %v1944, 16
    %v2070 = vor.u32 %v2068, %v2058
    %v2072 = vshll.u32 %v1946, 16
    %v2074 = vrot.slane %v2072, 1
    %v2075 = vsel %vm725, %v2070, %v2074
    %v2076 = vshrl.u32 %v1945, 16
    %v2078 = vor.u32 %v2076, %v2066
    %v2080 = vshll.u32 %v1947, 16
    %v2082 = vrot.slane %v2080, 1
    %v2083 = vsel %vm725, %v2078, %v2082
    %v2084 = vshrl.u32 %v1946, 16
    %v2086 = vor.u32 %v2084, %v2074
    %v2088 = vshll.u32 %v1948, 16
    %v2090 = vrot.slane %v2088, 1
    %v2091 = vsel %vm725, %v2086, %v2090
    %v2092 = vshrl.u32 %v1947, 16
    %v2094 = vor.u32 %v2092, %v2082
    %v2096 = vshll.u32 %v1949, 16
    %v2098 = vrot.slane %v2096, 1
    %v2099 = vsel %vm725, %v2094, %v2098
    %v2100 = vshrl.u32 %v1948, 16
    %v2102 = vor.u32 %v2100, %v2090
    %v2104 = vshll.u32 %v1950, 16
    %v2106 = vrot.slane %v2104, 1
    %v2107 = vsel %vm725, %v2102, %v2106
    %v2108 = vshrl.u32 %v1949, 16
    %v2110 = vor.u32 %v2108, %v2098
    %v2112 = vshll.u32 %v1951, 16
    %v2114 = vrot.slane %v2112, 1
    %v2115 = vsel %vm725, %v2110, %v2114
    %v2116 = vshrl.u32 %v1950, 16
    %v2118 = vor.u32 %v2116, %v2106
    %v2120 = vshll.u32 %v1952, 16
    %v2122 = vrot.slane %v2120, 1
    %v2123 = vsel %vm725, %v2118, %v2122
    %v2124 = vshrl.u32 %v1951, 16
    %v2126 = vor.u32 %v2124, %v2114
    %v2128 = vshll.u32 %v1953, 16
    %v2130 = vrot.slane %v2128, 1
    %v2131 = vsel %vm725, %v2126, %v2130
    %v2132 = vshrl.u32 %v1952, 16
    %v2134 = vor.u32 %v2132, %v2122
    %v2136 = vshll.u32 %v1954, 16
    %v2138 = vrot.slane %v2136, 1
    %v2139 = vsel %vm725, %v2134, %v2138
    %v2140 = vshrl.u32 %v1953, 16
    %v2142 = vor.u32 %v2140, %v2130
    %v2144 = vshll.u32 %v1955, 16
    %v2146 = vrot.slane %v2144, 1
    %v2147 = vsel %vm725, %v2142, %v2146
    %v2148 = vshrl.u32 %v1954, 16
    %v2150 = vor.u32 %v2148, %v2138
    %v2152 = vshll.u32 %v1956, 16
    %v2154 = vrot.slane %v2152, 1
    %v2155 = vsel %vm725, %v2150, %v2154
    %v2156 = vshrl.u32 %v1955, 16
    %v2158 = vor.u32 %v2156, %v2146
    %v2160 = vshll.u32 %v1957, 16
    %v2162 = vrot.slane %v2160, 1
    %v2163 = vsel %vm725, %v2158, %v2162
    %v2164 = vshrl.u32 %v1956, 16
    %v2166 = vor.u32 %v2164, %v2154
    %v2168 = vshll.u32 %v1958, 16
    %v2170 = vrot.slane %v2168, 1
    %v2171 = vsel %vm725, %v2166, %v2170
    %v2172 = vshrl.u32 %v1957, 16
    %v2174 = vor.u32 %v2172, %v2162
    %v2176 = vshll.u32 %v1959, 16
    %v2178 = vrot.slane %v2176, 1
    %v2179 = vsel %vm725, %v2174, %v2178
    %v2180 = vshrl.u32 %v1958, 16
    %v2182 = vor.u32 %v2180, %v2170
    %v2184 = vshll.u32 %v1960, 16
    %v2186 = vrot.slane %v2184, 1
    %v2187 = vsel %vm725, %v2182, %v2186
    %v2188 = vshrl.u32 %v1959, 16
    %v2190 = vor.u32 %v2188, %v2178
    %v2192 = vshll.u32 %v1961, 16
    %v2194 = vrot.slane %v2192, 1
    %v2195 = vsel %vm725, %v2190, %v2194
    %v2196 = vshrl.u32 %v1960, 16
    %v2198 = vor.u32 %v2196, %v2186
    %v2200 = vshll.u32 %v1962, 16
    %v2202 = vrot.slane %v2200, 1
    %v2203 = vsel %vm725, %v2198, %v2202
    %v2204 = vshrl.u32 %v1961, 16
    %v2206 = vor.u32 %v2204, %v2194
    %v2208 = vshll.u32 %v1963, 16
    %v2210 = vrot.slane %v2208, 1
    %v2211 = vsel %vm725, %v2206, %v2210
    %v2274 = vunpack.c.l.b16 %v1807
    %v2275 = vunpack.c.l.b16 %v1808
    %v2276 = vunpack.c.l.b16 %v1809
    %v2277 = vunpack.c.l.b16 %v1810
    %v2278 = vunpack.c.l.b16 %v1811
    %v2279 = vunpack.c.l.b16 %v1812
    %v2280 = vunpack.c.l.b16 %v1813
    %v2281 = vunpack.c.l.b16 %v1814
    %v2282 = vunpack.c.l.b16 %v1815
    %v2283 = vunpack.c.l.b16 %v1816
    %v2284 = vunpack.c.l.b16 %v1817
    %v2285 = vunpack.c.l.b16 %v1818
    %v2286 = vunpack.c.l.b16 %v1819
    %v2287 = vunpack.c.l.b16 %v1820
    %v2288 = vunpack.c.l.b16 %v1821
    %v2289 = vunpack.c.l.b16 %v1822
    %v2290 = vunpack.c.l.b16 %v1823
    %v2291 = vunpack.c.l.b16 %v1824
    %v2292 = vunpack.c.l.b16 %v1825
    %v2293 = vunpack.c.l.b16 %v1826
    %v2294 = vunpack.c.l.b16 %v1827
    %v2295 = vunpack.c.l.b16 %v1828
    %v2296 = vunpack.c.l.b16 %v1829
    %v2297 = vunpack.c.l.b16 %v1830
    %v2298 = vunpack.c.l.b16 %v1831
    %v2299 = vunpack.c.l.b16 %v1832
    %v2300 = vunpack.c.l.b16 %v1833
    %v2301 = vunpack.c.l.b16 %v1834
    %v2302 = vunpack.c.l.b16 %v1835
    %v2303 = vunpack.c.l.b16 %v1836
    %v2304 = vunpack.c.l.b16 %v1837
    %v2305 = vunpack.c.l.b16 %v1838
    %v2306 = vpack.c.b16 %v2275, %v2274
    %v2307 = vpack.c.b16 %v2277, %v2276
    %v2308 = vpack.c.b16 %v2279, %v2278
    %v2309 = vpack.c.b16 %v2281, %v2280
    %v2310 = vpack.c.b16 %v2283, %v2282
    %v2311 = vpack.c.b16 %v2285, %v2284
    %v2312 = vpack.c.b16 %v2287, %v2286
    %v2313 = vpack.c.b16 %v2289, %v2288
    %v2314 = vpack.c.b16 %v2291, %v2290
    %v2315 = vpack.c.b16 %v2293, %v2292
    %v2316 = vpack.c.b16 %v2295, %v2294
    %v2317 = vpack.c.b16 %v2297, %v2296
    %v2318 = vpack.c.b16 %v2299, %v2298
    %v2319 = vpack.c.b16 %v2301, %v2300
    %v2320 = vpack.c.b16 %v2303, %v2302
    %v2321 = vpack.c.b16 %v2305, %v2304
    %2338 = vmatprep.subr.bf16.mxu0 0
    %2339 = vmatpush1.bf16.msra.mxu0 %v2306
    %2340 = vmatprep.subr.bf16.mxu0 0
    %2341 = vmatpush1.bf16.msra.mxu0 %v2307
    %2342 = vmatprep.subr.bf16.mxu0 0
    %2343 = vmatpush1.bf16.msra.mxu0 %v2308
    %2344 = vmatprep.subr.bf16.mxu0 0
    %2345 = vmatpush1.bf16.msra.mxu0 %v2309
    %2346 = vmatprep.subr.bf16.mxu0 0
    %2347 = vmatpush1.bf16.msra.mxu0 %v2310
    %2348 = vmatprep.subr.bf16.mxu0 0
    %2349 = vmatpush1.bf16.msra.mxu0 %v2311
    %2350 = vmatprep.subr.bf16.mxu0 0
    %2351 = vmatpush1.bf16.msra.mxu0 %v2312
    %2352 = vmatprep.subr.bf16.mxu0 0
    %2353 = vmatpush1.bf16.msra.mxu0 %v2313
    %2354 = vmatprep.subr.bf16.mxu0 0
    %2355 = vmatpush1.bf16.msra.mxu0 %v2314
    %2356 = vmatprep.subr.bf16.mxu0 0
    %2357 = vmatpush1.bf16.msra.mxu0 %v2315
    %2358 = vmatprep.subr.bf16.mxu0 0
    %2359 = vmatpush1.bf16.msra.mxu0 %v2316
    %2360 = vmatprep.subr.bf16.mxu0 0
    %2361 = vmatpush1.bf16.msra.mxu0 %v2317
    %2362 = vmatprep.subr.bf16.mxu0 0
    %2363 = vmatpush1.bf16.msra.mxu0 %v2318
    %2364 = vmatprep.subr.bf16.mxu0 0
    %2365 = vmatpush1.bf16.msra.mxu0 %v2319
    %2366 = vmatprep.subr.bf16.mxu0 0
    %2367 = vmatpush1.bf16.msra.mxu0 %v2320
    %2368 = vmatprep.subr.bf16.mxu0 0
    %2369 = vmatpush1.bf16.msra.mxu0 %v2321
    %2370 = vmatprep.mubr.bf16.mxu0 %v1987
    %2371 = vmatmul.mubr.bf16.gmra.mrb[0].mxu0 %v1975
    %v2372 = vpop.f32.mrb[0].mxu0
    %v2373 = vadd.f32 0.0, %v2372
    %v2374 = vpop.f32.mrb[0].mxu0
    %v2375 = vpop.f32.mrb[0].mxu0
    %v2376 = vadd.f32 0.0, %v2375
    %v2377 = vpop.f32.mrb[0].mxu0
    %2378 = vmatprep.mubr.bf16.mxu0 %v2003
    %2379 = vmatmul.mubr.bf16.gmra.mrb[0].mxu0 %v1995
    %v2380 = vpop.f32.mrb[0].mxu0
    %v2381 = vadd.f32 0.0, %v2380
    %v2382 = vpop.f32.mrb[0].mxu0
    %v2383 = vpop.f32.mrb[0].mxu0
    %v2384 = vadd.f32 0.0, %v2383
    %v2385 = vpop.f32.mrb[0].mxu0
    %2386 = vmatprep.mubr.bf16.mxu0 %v2019
    %2387 = vmatmul.mubr.bf16.gmra.mrb[0].mxu0 %v2011
    %v2388 = vpop.f32.mrb[0].mxu0
    %v2389 = vadd.f32 0.0, %v2388
    %v2390 = vpop.f32.mrb[0].mxu0
    %v2391 = vpop.f32.mrb[0].mxu0
    %v2392 = vadd.f32 0.0, %v2391
    %v2393 = vpop.f32.mrb[0].mxu0
    %2394 = vmatprep.mubr.bf16.mxu0 %v2035
    %2395 = vmatmul.mubr.bf16.gmra.mrb[0].mxu0 %v2027
    %v2396 = vpop.f32.mrb[0].mxu0
    %v2397 = vadd.f32 0.0, %v2396
    %v2398 = vpop.f32.mrb[0].mxu0
    %v2399 = vpop.f32.mrb[0].mxu0
    %v2400 = vadd.f32 0.0, %v2399
    %v2401 = vpop.f32.mrb[0].mxu0
    %2402 = vmatprep.mubr.bf16.mxu0 %v2051
    %2403 = vmatmul.mubr.bf16.gmra.mrb[0].mxu0 %v2043
    %v2404 = vpop.f32.mrb[0].mxu0
    %v2405 = vadd.f32 0.0, %v2404
    %v2406 = vpop.f32.mrb[0].mxu0
    %v2407 = vpop.f32.mrb[0].mxu0
    %v2408 = vadd.f32 0.0, %v2407
    %v2409 = vpop.f32.mrb[0].mxu0
    %2410 = vmatprep.mubr.bf16.mxu0 %v2067
    %2411 = vmatmul.mubr.bf16.gmra.mrb[0].mxu0 %v2059
    %v2412 = vpop.f32.mrb[0].mxu0
    %v2413 = vadd.f32 0.0, %v2412
    %v2414 = vpop.f32.mrb[0].mxu0
    %v2415 = vpop.f32.mrb[0].mxu0
    %v2416 = vadd.f32 0.0, %v2415
    %v2417 = vpop.f32.mrb[0].mxu0
    %2418 = vmatprep.mubr.bf16.mxu0 %v2083
    %2419 = vmatmul.mubr.bf16.gmra.mrb[0].mxu0 %v2075
    %v2420 = vpop.f32.mrb[0].mxu0
    %v2421 = vadd.f32 0.0, %v2420
    %v2422 = vpop.f32.mrb[0].mxu0
    %v2423 = vpop.f32.mrb[0].mxu0
    %v2424 = vadd.f32 0.0, %v2423
    %v2425 = vpop.f32.mrb[0].mxu0
    %2426 = vmatprep.mubr.bf16.mxu0 %v2099
    %2427 = vmatmul.mubr.bf16.gmra.mrb[0].mxu0 %v2091
    %v2428 = vpop.f32.mrb[0].mxu0
    %v2429 = vadd.f32 0.0, %v2428
    %v2430 = vpop.f32.mrb[0].mxu0
    %v2431 = vpop.f32.mrb[0].mxu0
    %v2432 = vadd.f32 0.0, %v2431
    %v2433 = vpop.f32.mrb[0].mxu0
    %2434 = vmatprep.mubr.bf16.mxu0 %v2115
    %2435 = vmatmul.mubr.bf16.gmra.mrb[0].mxu0 %v2107
    %v2436 = vpop.f32.mrb[0].mxu0
    %v2437 = vadd.f32 0.0, %v2436
    %v2438 = vpop.f32.mrb[0].mxu0
    %v2439 = vpop.f32.mrb[0].mxu0
    %v2440 = vadd.f32 0.0, %v2439
    %v2441 = vpop.f32.mrb[0].mxu0
    %2442 = vmatprep.mubr.bf16.mxu0 %v2131
    %2443 = vmatmul.mubr.bf16.gmra.mrb[0].mxu0 %v2123
    %v2444 = vpop.f32.mrb[0].mxu0
    %v2445 = vadd.f32 0.0, %v2444
    %v2446 = vpop.f32.mrb[0].mxu0
    %v2447 = vpop.f32.mrb[0].mxu0
    %v2448 = vadd.f32 0.0, %v2447
    %v2449 = vpop.f32.mrb[0].mxu0
    %2450 = vmatprep.mubr.bf16.mxu0 %v2147
    %2451 = vmatmul.mubr.bf16.gmra.mrb[0].mxu0 %v2139
    %v2452 = vpop.f32.mrb[0].mxu0
    %v2453 = vadd.f32 0.0, %v2452
    %v2454 = vpop.f32.mrb[0].mxu0
    %v2455 = vpop.f32.mrb[0].mxu0
    %v2456 = vadd.f32 0.0, %v2455
    %v2457 = vpop.f32.mrb[0].mxu0
    %2458 = vmatprep.mubr.bf16.mxu0 %v2163
    %2459 = vmatmul.mubr.bf16.gmra.mrb[0].mxu0 %v2155
    %v2460 = vpop.f32.mrb[0].mxu0
    %v2461 = vadd.f32 0.0, %v2460
    %v2462 = vpop.f32.mrb[0].mxu0
    %v2463 = vpop.f32.mrb[0].mxu0
    %v2464 = vadd.f32 0.0, %v2463
    %v2465 = vpop.f32.mrb[0].mxu0
    %2466 = vmatprep.mubr.bf16.mxu0 %v2179
    %2467 = vmatmul.mubr.bf16.gmra.mrb[0].mxu0 %v2171
    %v2468 = vpop.f32.mrb[0].mxu0
    %v2469 = vadd.f32 0.0, %v2468
    %v2470 = vpop.f32.mrb[0].mxu0
    %v2471 = vpop.f32.mrb[0].mxu0
    %v2472 = vadd.f32 0.0, %v2471
    %v2473 = vpop.f32.mrb[0].mxu0
    %2474 = vmatprep.mubr.bf16.mxu0 %v2195
    %2475 = vmatmul.mubr.bf16.gmra.mrb[0].mxu0 %v2187
    %v2476 = vpop.f32.mrb[0].mxu0
    %v2477 = vadd.f32 0.0, %v2476
    %v2478 = vpop.f32.mrb[0].mxu0
    %v2479 = vpop.f32.mrb[0].mxu0
    %v2480 = vadd.f32 0.0, %v2479
    %v2481 = vpop.f32.mrb[0].mxu0
    %2482 = vmatprep.mubr.bf16.mxu0 %v2211
    %2483 = vmatmul.mubr.bf16.gmra.mrb[0].mxu0 %v2203
    %v2484 = vpop.f32.mrb[0].mxu0
    %v2485 = vadd.f32 0.0, %v2484
    %v2486 = vpop.f32.mrb[0].mxu0
    %v2487 = vpop.f32.mrb[0].mxu0
    %v2488 = vadd.f32 0.0, %v2487
    %v2489 = vpop.f32.mrb[0].mxu0
    %2490 = vdwg.mxu0
    %v2491 = vadd.f32 %v1745, %v2373
    %v2492 = vadd.f32 %v1746, %v2376
    %v2493 = vadd.f32 %v1747, %v2381
    %v2494 = vadd.f32 %v1748, %v2384
    %v2495 = vadd.f32 %v1749, %v2389
    %v2496 = vadd.f32 %v1750, %v2392
    %v2497 = vadd.f32 %v1751, %v2397
    %v2498 = vadd.f32 %v1752, %v2400
    %v2499 = vadd.f32 %v1753, %v2405
    %v2500 = vadd.f32 %v1754, %v2408
    %v2501 = vadd.f32 %v1755, %v2413
    %v2502 = vadd.f32 %v1756, %v2416
    %v2503 = vadd.f32 %v1757, %v2421
    %v2504 = vadd.f32 %v1758, %v2424
    %v2505 = vadd.f32 %v1759, %v2429
    %v2506 = vadd.f32 %v1760, %v2432
    %v2507 = vadd.f32 %v1761, %v2437
    %v2508 = vadd.f32 %v1762, %v2440
    %v2509 = vadd.f32 %v1763, %v2445
    %v2510 = vadd.f32 %v1764, %v2448
    %v2511 = vadd.f32 %v1765, %v2453
    %v2512 = vadd.f32 %v1766, %v2456
    %v2513 = vadd.f32 %v1767, %v2461
    %v2514 = vadd.f32 %v1768, %v2464
    %v2515 = vadd.f32 %v1769, %v2469
    %v2516 = vadd.f32 %v1770, %v2472
    %v2517 = vadd.f32 %v1771, %v2477
    %v2518 = vadd.f32 %v1772, %v2480
    %v2519 = vadd.f32 %v1773, %v2485
    %v2520 = vadd.f32 %v1774, %v2488
    %v2521 = vmax.f32 %v2491, 0.0
    %v2522 = vmax.f32 %v2492, 0.0
    %v2523 = vmax.f32 %v2493, 0.0
    %v2524 = vmax.f32 %v2494, 0.0
    %v2525 = vmax.f32 %v2495, 0.0
    %v2526 = vmax.f32 %v2496, 0.0
    %v2527 = vmax.f32 %v2497, 0.0
    %v2528 = vmax.f32 %v2498, 0.0
    %v2529 = vmax.f32 %v2499, 0.0
    %v2530 = vmax.f32 %v2500, 0.0
    %v2531 = vmax.f32 %v2501, 0.0
    %v2532 = vmax.f32 %v2502, 0.0
    %v2533 = vmax.f32 %v2503, 0.0
    %v2534 = vmax.f32 %v2504, 0.0
    %v2535 = vmax.f32 %v2505, 0.0
    %v2536 = vmax.f32 %v2506, 0.0
    %v2537 = vmax.f32 %v2507, 0.0
    %v2538 = vmax.f32 %v2508, 0.0
    %v2539 = vmax.f32 %v2509, 0.0
    %v2540 = vmax.f32 %v2510, 0.0
    %v2541 = vmax.f32 %v2511, 0.0
    %v2542 = vmax.f32 %v2512, 0.0
    %v2543 = vmax.f32 %v2513, 0.0
    %v2544 = vmax.f32 %v2514, 0.0
    %v2545 = vmax.f32 %v2515, 0.0
    %v2546 = vmax.f32 %v2516, 0.0
    %v2547 = vmax.f32 %v2517, 0.0
    %v2548 = vmax.f32 %v2518, 0.0
    %v2549 = vmax.f32 %v2519, 0.0
    %v2550 = vmax.f32 %v2520, 0.0
    %v2551 = vpack.c.bf16 %v2522, %v2521
    %v2552 = vpack.c.bf16 %v2524, %v2523
    %v2553 = vpack.c.bf16 %v2526, %v2525
    %v2554 = vpack.c.bf16 %v2528, %v2527
    %v2555 = vpack.c.bf16 %v2530, %v2529
    %v2556 = vpack.c.bf16 %v2532, %v2531
    %v2557 = vpack.c.bf16 %v2534, %v2533
    %v2558 = vpack.c.bf16 %v2536, %v2535
    %v2559 = vpack.c.bf16 %v2538, %v2537
    %v2560 = vpack.c.bf16 %v2540, %v2539
    %v2561 = vpack.c.bf16 %v2542, %v2541
    %v2562 = vpack.c.bf16 %v2544, %v2543
    %v2563 = vpack.c.bf16 %v2546, %v2545
    %v2564 = vpack.c.bf16 %v2548, %v2547
    %v2565 = vpack.c.bf16 %v2550, %v2549
    %2566 = vst [vmem:[#allocation2] sm:$0xff] %v2551
    %2567 = vst [vmem:[#allocation2 + $0x8] sm:$0xff] %v2552
    %2568 = vst [vmem:[#allocation2 + $0x10] sm:$0xff] %v2553
    %2569 = vst [vmem:[#allocation2 + $0x18] sm:$0xff] %v2554
    %2570 = vst [vmem:[#allocation2 + $0x20] sm:$0xff] %v2555
    %2571 = vst [vmem:[#allocation2 + $0x28] sm:$0xff] %v2556
    %2572 = vst [vmem:[#allocation2 + $0x30] sm:$0xff] %v2557
    %2573 = vst [vmem:[#allocation2 + $0x38] sm:$0xff] %v2558
    %2574 = vst [vmem:[#allocation2 + $0x40] sm:$0xff] %v2559
    %2575 = vst [vmem:[#allocation2 + $0x48] sm:$0xff] %v2560
    %2576 = vst [vmem:[#allocation2 + $0x50] sm:$0xff] %v2561
    %2577 = vst [vmem:[#allocation2 + $0x58] sm:$0xff] %v2562
    %2578 = vst [vmem:[#allocation2 + $0x60] sm:$0xff] %v2563
    %2579 = vst [vmem:[#allocation2 + $0x68] sm:$0xff] %v2564
    %2580 = vst [vmem:[#allocation2 + $0x70] sm:$0xff] %v2565
    %v2581 = vld [vmem:[%s4] sm:$0x1]
    %v2583 = vlaneseq
    %v2584 = vshrl.u32 %v2583, 7
    %v2585 = vsub.s32 0, %v2584
    %v2586 = vrot.slane %v2581, %v2585
    %v2588 = vld [vmem:[#allocation2] sm:$0xff]
    %v2589 = vld [vmem:[#allocation2 + $0x8] sm:$0xff]
    %v2590 = vld [vmem:[#allocation2 + $0x10] sm:$0xff]
    %v2591 = vld [vmem:[#allocation2 + $0x18] sm:$0xff]
    %v2592 = vld [vmem:[#allocation2 + $0x20] sm:$0xff]
    %v2593 = vld [vmem:[#allocation2 + $0x28] sm:$0xff]
    %v2594 = vld [vmem:[#allocation2 + $0x30] sm:$0xff]
    %v2595 = vld [vmem:[#allocation2 + $0x38] sm:$0xff]
    %v2596 = vld [vmem:[#allocation2 + $0x40] sm:$0xff]
    %v2597 = vld [vmem:[#allocation2 + $0x48] sm:$0xff]
    %v2598 = vld [vmem:[#allocation2 + $0x50] sm:$0xff]
    %v2599 = vld [vmem:[#allocation2 + $0x58] sm:$0xff]
    %v2600 = vld [vmem:[#allocation2 + $0x60] sm:$0xff]
    %v2601 = vld [vmem:[#allocation2 + $0x68] sm:$0xff]
    %v2602 = vld [vmem:[%s3] sm:$0xf]
    %v2603 = vld [vmem:[%s3 + $0x4] sm:$0xf]
    %v2604 = vld [vmem:[%s3 + $0x8] sm:$0xf]
    %v2605 = vld [vmem:[%s3 + $0xc] sm:$0xf]
    %v2606 = vld [vmem:[%s3 + $0x10] sm:$0xf]
    %v2607 = vld [vmem:[%s3 + $0x14] sm:$0xf]
    %v2608 = vld [vmem:[%s3 + $0x18] sm:$0xf]
    %v2609 = vld [vmem:[%s3 + $0x1c] sm:$0xf]
    %v2610 = vld [vmem:[%s3 + $0x20] sm:$0xf]
    %v2611 = vld [vmem:[%s3 + $0x24] sm:$0xf]
    %v2612 = vld [vmem:[%s3 + $0x28] sm:$0xf]
    %v2613 = vld [vmem:[%s3 + $0x2c] sm:$0xf]
    %v2614 = vld [vmem:[%s3 + $0x30] sm:$0xf]
    %v2615 = vld [vmem:[%s3 + $0x34] sm:$0xf]
    %v2616 = vld [vmem:[%s3 + $0x38] sm:$0xf]
    %v2617 = vld [vmem:[%s3 + $0x3c] sm:$0xf]
    %v2634 = vunpack.c.l.b16 %v2602
    %v2635 = vunpack.c.l.b16 %v2603
    %v2636 = vunpack.c.l.b16 %v2604
    %v2637 = vunpack.c.l.b16 %v2605
    %v2638 = vunpack.c.l.b16 %v2606
    %v2639 = vunpack.c.l.b16 %v2607
    %v2640 = vunpack.c.l.b16 %v2608
    %v2641 = vunpack.c.l.b16 %v2609
    %v2642 = vunpack.c.l.b16 %v2610
    %v2643 = vunpack.c.l.b16 %v2611
    %v2644 = vunpack.c.l.b16 %v2612
    %v2645 = vunpack.c.l.b16 %v2613
    %v2646 = vunpack.c.l.b16 %v2614
    %v2647 = vunpack.c.l.b16 %v2615
    %v2648 = vunpack.c.l.b16 %v2616
    %v2649 = vunpack.c.l.b16 %v2617
    %v2650 = vpack.c.b16 %v2635, %v2634
    %v2651 = vpack.c.b16 %v2637, %v2636
    %v2652 = vpack.c.b16 %v2639, %v2638
    %v2653 = vpack.c.b16 %v2641, %v2640
    %v2654 = vpack.c.b16 %v2643, %v2642
    %v2655 = vpack.c.b16 %v2645, %v2644
    %v2656 = vpack.c.b16 %v2647, %v2646
    %v2657 = vpack.c.b16 %v2649, %v2648
    %2666 = vmatprep.subr.bf16.mxu0 0
    %2667 = vmatpush1.bf16.msra.mxu0 %v2650
    %2668 = vmatprep.subr.bf16.mxu0 0
    %2669 = vmatpush1.bf16.msra.mxu0 %v2651
    %2670 = vmatprep.subr.bf16.mxu0 0
    %2671 = vmatpush1.bf16.msra.mxu0 %v2652
    %2672 = vmatprep.subr.bf16.mxu0 0
    %2673 = vmatpush1.bf16.msra.mxu0 %v2653
    %2674 = vmatprep.subr.bf16.mxu0 0
    %2675 = vmatpush1.bf16.msra.mxu0 %v2654
    %2676 = vmatprep.subr.bf16.mxu0 0
    %2677 = vmatpush1.bf16.msra.mxu0 %v2655
    %2678 = vmatprep.subr.bf16.mxu0 0
    %2679 = vmatpush1.bf16.msra.mxu0 %v2656
    %2680 = vmatprep.subr.bf16.mxu0 0
    %2681 = vmatpush1.bf16.msra.mxu0 %v2657
    %2682 = vmatprep.subr.bf16.mxu0 0
    %2683 = vmatpush1.bf16.msra.mxu0 0
    %2684 = vmatprep.subr.bf16.mxu0 0
    %2685 = vmatpush1.bf16.msra.mxu0 0
    %2686 = vmatprep.subr.bf16.mxu0 0
    %2687 = vmatpush1.bf16.msra.mxu0 0
    %2688 = vmatprep.subr.bf16.mxu0 0
    %2689 = vmatpush1.bf16.msra.mxu0 0
    %2690 = vmatprep.subr.bf16.mxu0 0
    %2691 = vmatpush1.bf16.msra.mxu0 0
    %2692 = vmatprep.subr.bf16.mxu0 0
    %2693 = vmatpush1.bf16.msra.mxu0 0
    %2694 = vmatprep.subr.bf16.mxu0 0
    %2695 = vmatpush1.bf16.msra.mxu0 0
    %2696 = vmatprep.subr.bf16.mxu0 0
    %2697 = vmatpush1.bf16.msra.mxu0 0
    %2698 = vmatprep.mubr.bf16.mxu0 0
    %2699 = vmatmul.mubr.bf16.gmra.mrb[0].mxu0 %v2588
    %v2700 = vpop.f32.mrb[0].mxu0
    %v2701 = vadd.f32 0.0, %v2700
    %v2702 = vpop.f32.mrb[0].mxu0
    %v2703 = vpop.f32.mrb[0].mxu0
    %v2704 = vadd.f32 0.0, %v2703
    %v2705 = vpop.f32.mrb[0].mxu0
    %2706 = vmatprep.mubr.bf16.mxu0 0
    %2707 = vmatmul.mubr.bf16.gmra.mrb[0].mxu0 %v2589
    %v2708 = vpop.f32.mrb[0].mxu0
    %v2709 = vadd.f32 0.0, %v2708
    %v2710 = vpop.f32.mrb[0].mxu0
    %v2711 = vpop.f32.mrb[0].mxu0
    %v2712 = vadd.f32 0.0, %v2711
    %v2713 = vpop.f32.mrb[0].mxu0
    %2714 = vmatprep.mubr.bf16.mxu0 0
    %2715 = vmatmul.mubr.bf16.gmra.mrb[0].mxu0 %v2590
    %v2716 = vpop.f32.mrb[0].mxu0
    %v2717 = vadd.f32 0.0, %v2716
    %v2718 = vpop.f32.mrb[0].mxu0
    %v2719 = vpop.f32.mrb[0].mxu0
    %v2720 = vadd.f32 0.0, %v2719
    %v2721 = vpop.f32.mrb[0].mxu0
    %2722 = vmatprep.mubr.bf16.mxu0 0
    %2723 = vmatmul.mubr.bf16.gmra.mrb[0].mxu0 %v2591
    %v2724 = vpop.f32.mrb[0].mxu0
    %v2725 = vadd.f32 0.0, %v2724
    %v2726 = vpop.f32.mrb[0].mxu0
    %v2727 = vpop.f32.mrb[0].mxu0
    %v2728 = vadd.f32 0.0, %v2727
    %v2729 = vpop.f32.mrb[0].mxu0
    %2730 = vmatprep.mubr.bf16.mxu0 0
    %2731 = vmatmul.mubr.bf16.gmra.mrb[0].mxu0 %v2592
    %v2732 = vpop.f32.mrb[0].mxu0
    %v2733 = vadd.f32 0.0, %v2732
    %v2734 = vpop.f32.mrb[0].mxu0
    %v2735 = vpop.f32.mrb[0].mxu0
    %v2736 = vadd.f32 0.0, %v2735
    %v2737 = vpop.f32.mrb[0].mxu0
    %2738 = vmatprep.mubr.bf16.mxu0 0
    %2739 = vmatmul.mubr.bf16.gmra.mrb[0].mxu0 %v2593
    %v2740 = vpop.f32.mrb[0].mxu0
    %v2741 = vadd.f32 0.0, %v2740
    %v2742 = vpop.f32.mrb[0].mxu0
    %v2743 = vpop.f32.mrb[0].mxu0
    %v2744 = vadd.f32 0.0, %v2743
    %v2745 = vpop.f32.mrb[0].mxu0
    %2746 = vmatprep.mubr.bf16.mxu0 0
    %2747 = vmatmul.mubr.bf16.gmra.mrb[0].mxu0 %v2594
    %v2748 = vpop.f32.mrb[0].mxu0
    %v2749 = vadd.f32 0.0, %v2748
    %v2750 = vpop.f32.mrb[0].mxu0
    %v2751 = vpop.f32.mrb[0].mxu0
    %v2752 = vadd.f32 0.0, %v2751
    %v2753 = vpop.f32.mrb[0].mxu0
    %2754 = vmatprep.mubr.bf16.mxu0 0
    %2755 = vmatmul.mubr.bf16.gmra.mrb[0].mxu0 %v2595
    %v2756 = vpop.f32.mrb[0].mxu0
    %v2757 = vadd.f32 0.0, %v2756
    %v2758 = vpop.f32.mrb[0].mxu0
    %v2759 = vpop.f32.mrb[0].mxu0
    %v2760 = vadd.f32 0.0, %v2759
    %v2761 = vpop.f32.mrb[0].mxu0
    %2762 = vmatprep.mubr.bf16.mxu0 0
    %2763 = vmatmul.mubr.bf16.gmra.mrb[0].mxu0 %v2596
    %v2764 = vpop.f32.mrb[0].mxu0
    %v2765 = vadd.f32 0.0, %v2764
    %v2766 = vpop.f32.mrb[0].mxu0
    %v2767 = vpop.f32.mrb[0].mxu0
    %v2768 = vadd.f32 0.0, %v2767
    %v2769 = vpop.f32.mrb[0].mxu0
    %2770 = vmatprep.mubr.bf16.mxu0 0
    %2771 = vmatmul.mubr.bf16.gmra.mrb[0].mxu0 %v2597
    %v2772 = vpop.f32.mrb[0].mxu0
    %v2773 = vadd.f32 0.0, %v2772
    %v2774 = vpop.f32.mrb[0].mxu0
    %v2775 = vpop.f32.mrb[0].mxu0
    %v2776 = vadd.f32 0.0, %v2775
    %v2777 = vpop.f32.mrb[0].mxu0
    %2778 = vmatprep.mubr.bf16.mxu0 0
    %2779 = vmatmul.mubr.bf16.gmra.mrb[0].mxu0 %v2598
    %v2780 = vpop.f32.mrb[0].mxu0
    %v2781 = vadd.f32 0.0, %v2780
    %v2782 = vpop.f32.mrb[0].mxu0
    %v2783 = vpop.f32.mrb[0].mxu0
    %v2784 = vadd.f32 0.0, %v2783
    %v2785 = vpop.f32.mrb[0].mxu0
    %2786 = vmatprep.mubr.bf16.mxu0 0
    %2787 = vmatmul.mubr.bf16.gmra.mrb[0].mxu0 %v2599
    %v2788 = vpop.f32.mrb[0].mxu0
    %v2789 = vadd.f32 0.0, %v2788
    %v2790 = vpop.f32.mrb[0].mxu0
    %v2791 = vpop.f32.mrb[0].mxu0
    %v2792 = vadd.f32 0.0, %v2791
    %v2793 = vpop.f32.mrb[0].mxu0
    %2794 = vmatprep.mubr.bf16.mxu0 0
    %2795 = vmatmul.mubr.bf16.gmra.mrb[0].mxu0 %v2600
    %v2796 = vpop.f32.mrb[0].mxu0
    %v2797 = vadd.f32 0.0, %v2796
    %v2798 = vpop.f32.mrb[0].mxu0
    %v2799 = vpop.f32.mrb[0].mxu0
    %v2800 = vadd.f32 0.0, %v2799
    %v2801 = vpop.f32.mrb[0].mxu0
    %2802 = vmatprep.mubr.bf16.mxu0 0
    %2803 = vmatmul.mubr.bf16.gmra.mrb[0].mxu0 %v2601
    %v2804 = vpop.f32.mrb[0].mxu0
    %v2805 = vadd.f32 0.0, %v2804
    %v2806 = vpop.f32.mrb[0].mxu0
    %v2807 = vpop.f32.mrb[0].mxu0
    %v2808 = vadd.f32 0.0, %v2807
    %v2809 = vpop.f32.mrb[0].mxu0
    %2810 = vdwg.mxu0
    %v2811 = vadd.f32 %v2586, %v2701
    %v2812 = vadd.f32 %v2586, %v2704
    %v2813 = vadd.f32 %v2586, %v2709
    %v2814 = vadd.f32 %v2586, %v2712
    %v2815 = vadd.f32 %v2586, %v2717
    %v2816 = vadd.f32 %v2586, %v2720
    %v2817 = vadd.f32 %v2586, %v2725
    %v2818 = vadd.f32 %v2586, %v2728
    %v2819 = vadd.f32 %v2586, %v2733
    %v2820 = vadd.f32 %v2586, %v2736
    %v2821 = vadd.f32 %v2586, %v2741
    %v2822 = vadd.f32 %v2586, %v2744
    %v2823 = vadd.f32 %v2586, %v2749
    %v2824 = vadd.f32 %v2586, %v2752
    %v2825 = vadd.f32 %v2586, %v2757
    %v2826 = vadd.f32 %v2586, %v2760
    %v2827 = vadd.f32 %v2586, %v2765
    %v2828 = vadd.f32 %v2586, %v2768
    %v2829 = vadd.f32 %v2586, %v2773
    %v2830 = vadd.f32 %v2586, %v2776
    %v2831 = vadd.f32 %v2586, %v2781
    %v2832 = vadd.f32 %v2586, %v2784
    %v2833 = vadd.f32 %v2586, %v2789
    %v2834 = vadd.f32 %v2586, %v2792
    %v2835 = vadd.f32 %v2586, %v2797
    %v2836 = vadd.f32 %v2586, %v2800
    %v2837 = vadd.f32 %v2586, %v2805
    %v2838 = vadd.f32 %v2586, %v2808
    %v2839 = vld [vmem:[#allocation2] sm:$0xff]
    %v2840 = vld [vmem:[#allocation2 + $0x8] sm:$0xff]
    %v2841 = vld [vmem:[#allocation2 + $0x10] sm:$0xff]
    %v2842 = vld [vmem:[#allocation2 + $0x18] sm:$0xff]
    %v2843 = vld [vmem:[#allocation2 + $0x20] sm:$0xff]
    %v2844 = vld [vmem:[#allocation2 + $0x28] sm:$0xff]
    %v2845 = vld [vmem:[#allocation2 + $0x30] sm:$0xff]
    %v2846 = vld [vmem:[#allocation2 + $0x38] sm:$0xff]
    %v2847 = vld [vmem:[#allocation2 + $0x40] sm:$0xff]
    %v2848 = vld [vmem:[#allocation2 + $0x48] sm:$0xff]
    %v2849 = vld [vmem:[#allocation2 + $0x50] sm:$0xff]
    %v2850 = vld [vmem:[#allocation2 + $0x58] sm:$0xff]
    %v2851 = vld [vmem:[#allocation2 + $0x60] sm:$0xff]
    %v2852 = vld [vmem:[#allocation2 + $0x68] sm:$0xff]
    %v2853 = vld [vmem:[#allocation2 + $0x70] sm:$0x1]
    %s2854 = scalar_lea.vmem %s3, 64
    %v2855 = vld [vmem:[%s2854] sm:$0xf]
    %v2856 = vld [vmem:[%s2854 + $0x4] sm:$0xf]
    %v2857 = vld [vmem:[%s2854 + $0x8] sm:$0xf]
    %v2858 = vld [vmem:[%s2854 + $0xc] sm:$0xf]
    %v2859 = vld [vmem:[%s2854 + $0x10] sm:$0xf]
    %v2860 = vld [vmem:[%s2854 + $0x14] sm:$0xf]
    %v2861 = vld [vmem:[%s2854 + $0x18] sm:$0xf]
    %v2862 = vld [vmem:[%s2854 + $0x1c] sm:$0xf]
    %v2863 = vld [vmem:[%s2854 + $0x20] sm:$0xf]
    %v2864 = vld [vmem:[%s2854 + $0x24] sm:$0xf]
    %v2865 = vld [vmem:[%s2854 + $0x28] sm:$0xf]
    %v2866 = vld [vmem:[%s2854 + $0x2c] sm:$0xf]
    %v2867 = vld [vmem:[%s2854 + $0x30] sm:$0xf]
    %v2868 = vld [vmem:[%s2854 + $0x34] sm:$0xf]
    %v2869 = vld [vmem:[%s2854 + $0x38] sm:$0xf]
    %v2870 = vld [vmem:[%s2854 + $0x3c] sm:$0xf]
    %v2872 = vshrl.u32 %v2839, 16
    %v2874 = vshll.u32 %v2839, 16
    %v2876 = vrot.slane %v2874, 1
    %v2877 = vor.u32 %v2872, %v2876
    %v2879 = vshll.u32 %v2840, 16
    %v2881 = vrot.slane %v2879, 1
    %v2882 = vsel %vm725, %v2877, %v2881
    %v2883 = vshrl.u32 %v2840, 16
    %v2885 = vor.u32 %v2883, %v2881
    %v2887 = vshll.u32 %v2841, 16
    %v2889 = vrot.slane %v2887, 1
    %v2890 = vsel %vm725, %v2885, %v2889
    %v2891 = vshrl.u32 %v2841, 16
    %v2893 = vor.u32 %v2891, %v2889
    %v2895 = vshll.u32 %v2842, 16
    %v2897 = vrot.slane %v2895, 1
    %v2898 = vsel %vm725, %v2893, %v2897
    %v2899 = vshrl.u32 %v2842, 16
    %v2901 = vor.u32 %v2899, %v2897
    %v2903 = vshll.u32 %v2843, 16
    %v2905 = vrot.slane %v2903, 1
    %v2906 = vsel %vm725, %v2901, %v2905
    %v2907 = vshrl.u32 %v2843, 16
    %v2909 = vor.u32 %v2907, %v2905
    %v2911 = vshll.u32 %v2844, 16
    %v2913 = vrot.slane %v2911, 1
    %v2914 = vsel %vm725, %v2909, %v2913
    %v2915 = vshrl.u32 %v2844, 16
    %v2917 = vor.u32 %v2915, %v2913
    %v2919 = vshll.u32 %v2845, 16
    %v2921 = vrot.slane %v2919, 1
    %v2922 = vsel %vm725, %v2917, %v2921
    %v2923 = vshrl.u32 %v2845, 16
    %v2925 = vor.u32 %v2923, %v2921
    %v2927 = vshll.u32 %v2846, 16
    %v2929 = vrot.slane %v2927, 1
    %v2930 = vsel %vm725, %v2925, %v2929
    %v2931 = vshrl.u32 %v2846, 16
    %v2933 = vor.u32 %v2931, %v2929
    %v2935 = vshll.u32 %v2847, 16
    %v2937 = vrot.slane %v2935, 1
    %v2938 = vsel %vm725, %v2933, %v2937
    %v2939 = vshrl.u32 %v2847, 16
    %v2941 = vor.u32 %v2939, %v2937
    %v2943 = vshll.u32 %v2848, 16
    %v2945 = vrot.slane %v2943, 1
    %v2946 = vsel %vm725, %v2941, %v2945
    %v2947 = vshrl.u32 %v2848, 16
    %v2949 = vor.u32 %v2947, %v2945
    %v2951 = vshll.u32 %v2849, 16
    %v2953 = vrot.slane %v2951, 1
    %v2954 = vsel %vm725, %v2949, %v2953
    %v2955 = vshrl.u32 %v2849, 16
    %v2957 = vor.u32 %v2955, %v2953
    %v2959 = vshll.u32 %v2850, 16
    %v2961 = vrot.slane %v2959, 1
    %v2962 = vsel %vm725, %v2957, %v2961
    %v2963 = vshrl.u32 %v2850, 16
    %v2965 = vor.u32 %v2963, %v2961
    %v2967 = vshll.u32 %v2851, 16
    %v2969 = vrot.slane %v2967, 1
    %v2970 = vsel %vm725, %v2965, %v2969
    %v2971 = vshrl.u32 %v2851, 16
    %v2973 = vor.u32 %v2971, %v2969
    %v2975 = vshll.u32 %v2852, 16
    %v2977 = vrot.slane %v2975, 1
    %v2978 = vsel %vm725, %v2973, %v2977
    %v2979 = vshrl.u32 %v2852, 16
    %v2981 = vor.u32 %v2979, %v2977
    %v2983 = vshll.u32 %v2853, 16
    %v2985 = vrot.slane %v2983, 1
    %v2986 = vsel %vm725, %v2981, %v2985
    %v3017 = vunpack.c.l.b16 %v2855
    %v3018 = vunpack.c.l.b16 %v2856
    %v3019 = vunpack.c.l.b16 %v2857
    %v3020 = vunpack.c.l.b16 %v2858
    %v3021 = vunpack.c.l.b16 %v2859
    %v3022 = vunpack.c.l.b16 %v2860
    %v3023 = vunpack.c.l.b16 %v2861
    %v3024 = vunpack.c.l.b16 %v2862
    %v3025 = vunpack.c.l.b16 %v2863
    %v3026 = vunpack.c.l.b16 %v2864
    %v3027 = vunpack.c.l.b16 %v2865
    %v3028 = vunpack.c.l.b16 %v2866
    %v3029 = vunpack.c.l.b16 %v2867
    %v3030 = vunpack.c.l.b16 %v2868
    %v3031 = vunpack.c.l.b16 %v2869
    %v3032 = vunpack.c.l.b16 %v2870
    %v3033 = vpack.c.b16 %v3018, %v3017
    %v3034 = vpack.c.b16 %v3020, %v3019
    %v3035 = vpack.c.b16 %v3022, %v3021
    %v3036 = vpack.c.b16 %v3024, %v3023
    %v3037 = vpack.c.b16 %v3026, %v3025
    %v3038 = vpack.c.b16 %v3028, %v3027
    %v3039 = vpack.c.b16 %v3030, %v3029
    %v3040 = vpack.c.b16 %v3032, %v3031
    %3049 = vmatprep.subr.bf16.mxu0 0
    %3050 = vmatpush1.bf16.msra.mxu0 %v3033
    %3051 = vmatprep.subr.bf16.mxu0 0
    %3052 = vmatpush1.bf16.msra.mxu0 %v3034
    %3053 = vmatprep.subr.bf16.mxu0 0
    %3054 = vmatpush1.bf16.msra.mxu0 %v3035
    %3055 = vmatprep.subr.bf16.mxu0 0
    %3056 = vmatpush1.bf16.msra.mxu0 %v3036
    %3057 = vmatprep.subr.bf16.mxu0 0
    %3058 = vmatpush1.bf16.msra.mxu0 %v3037
    %3059 = vmatprep.subr.bf16.mxu0 0
    %3060 = vmatpush1.bf16.msra.mxu0 %v3038
    %3061 = vmatprep.subr.bf16.mxu0 0
    %3062 = vmatpush1.bf16.msra.mxu0 %v3039
    %3063 = vmatprep.subr.bf16.mxu0 0
    %3064 = vmatpush1.bf16.msra.mxu0 %v3040
    %3065 = vmatprep.subr.bf16.mxu0 0
    %3066 = vmatpush1.bf16.msra.mxu0 0
    %3067 = vmatprep.subr.bf16.mxu0 0
    %3068 = vmatpush1.bf16.msra.mxu0 0
    %3069 = vmatprep.subr.bf16.mxu0 0
    %3070 = vmatpush1.bf16.msra.mxu0 0
    %3071 = vmatprep.subr.bf16.mxu0 0
    %3072 = vmatpush1.bf16.msra.mxu0 0
    %3073 = vmatprep.subr.bf16.mxu0 0
    %3074 = vmatpush1.bf16.msra.mxu0 0
    %3075 = vmatprep.subr.bf16.mxu0 0
    %3076 = vmatpush1.bf16.msra.mxu0 0
    %3077 = vmatprep.subr.bf16.mxu0 0
    %3078 = vmatpush1.bf16.msra.mxu0 0
    %3079 = vmatprep.subr.bf16.mxu0 0
    %3080 = vmatpush1.bf16.msra.mxu0 0
    %3081 = vmatprep.mubr.bf16.mxu0 0
    %3082 = vmatmul.mubr.bf16.gmra.mrb[0].mxu0 %v2882
    %v3083 = vpop.f32.mrb[0].mxu0
    %v3084 = vadd.f32 0.0, %v3083
    %v3085 = vpop.f32.mrb[0].mxu0
    %v3086 = vpop.f32.mrb[0].mxu0
    %v3087 = vadd.f32 0.0, %v3086
    %v3088 = vpop.f32.mrb[0].mxu0
    %3089 = vmatprep.mubr.bf16.mxu0 0
    %3090 = vmatmul.mubr.bf16.gmra.mrb[0].mxu0 %v2890
    %v3091 = vpop.f32.mrb[0].mxu0
    %v3092 = vadd.f32 0.0, %v3091
    %v3093 = vpop.f32.mrb[0].mxu0
    %v3094 = vpop.f32.mrb[0].mxu0
    %v3095 = vadd.f32 0.0, %v3094
    %v3096 = vpop.f32.mrb[0].mxu0
    %3097 = vmatprep.mubr.bf16.mxu0 0
    %3098 = vmatmul.mubr.bf16.gmra.mrb[0].mxu0 %v2898
    %v3099 = vpop.f32.mrb[0].mxu0
    %v3100 = vadd.f32 0.0, %v3099
    %v3101 = vpop.f32.mrb[0].mxu0
    %v3102 = vpop.f32.mrb[0].mxu0
    %v3103 = vadd.f32 0.0, %v3102
    %v3104 = vpop.f32.mrb[0].mxu0
    %3105 = vmatprep.mubr.bf16.mxu0 0
    %3106 = vmatmul.mubr.bf16.gmra.mrb[0].mxu0 %v2906
    %v3107 = vpop.f32.mrb[0].mxu0
    %v3108 = vadd.f32 0.0, %v3107
    %v3109 = vpop.f32.mrb[0].mxu0
    %v3110 = vpop.f32.mrb[0].mxu0
    %v3111 = vadd.f32 0.0, %v3110
    %v3112 = vpop.f32.mrb[0].mxu0
    %3113 = vmatprep.mubr.bf16.mxu0 0
    %3114 = vmatmul.mubr.bf16.gmra.mrb[0].mxu0 %v2914
    %v3115 = vpop.f32.mrb[0].mxu0
    %v3116 = vadd.f32 0.0, %v3115
    %v3117 = vpop.f32.mrb[0].mxu0
    %v3118 = vpop.f32.mrb[0].mxu0
    %v3119 = vadd.f32 0.0, %v3118
    %v3120 = vpop.f32.mrb[0].mxu0
    %3121 = vmatprep.mubr.bf16.mxu0 0
    %3122 = vmatmul.mubr.bf16.gmra.mrb[0].mxu0 %v2922
    %v3123 = vpop.f32.mrb[0].mxu0
    %v3124 = vadd.f32 0.0, %v3123
    %v3125 = vpop.f32.mrb[0].mxu0
    %v3126 = vpop.f32.mrb[0].mxu0
    %v3127 = vadd.f32 0.0, %v3126
    %v3128 = vpop.f32.mrb[0].mxu0
    %3129 = vmatprep.mubr.bf16.mxu0 0
    %3130 = vmatmul.mubr.bf16.gmra.mrb[0].mxu0 %v2930
    %v3131 = vpop.f32.mrb[0].mxu0
    %v3132 = vadd.f32 0.0, %v3131
    %v3133 = vpop.f32.mrb[0].mxu0
    %v3134 = vpop.f32.mrb[0].mxu0
    %v3135 = vadd.f32 0.0, %v3134
    %v3136 = vpop.f32.mrb[0].mxu0
    %3137 = vmatprep.mubr.bf16.mxu0 0
    %3138 = vmatmul.mubr.bf16.gmra.mrb[0].mxu0 %v2938
    %v3139 = vpop.f32.mrb[0].mxu0
    %v3140 = vadd.f32 0.0, %v3139
    %v3141 = vpop.f32.mrb[0].mxu0
    %v3142 = vpop.f32.mrb[0].mxu0
    %v3143 = vadd.f32 0.0, %v3142
    %v3144 = vpop.f32.mrb[0].mxu0
    %3145 = vmatprep.mubr.bf16.mxu0 0
    %3146 = vmatmul.mubr.bf16.gmra.mrb[0].mxu0 %v2946
    %v3147 = vpop.f32.mrb[0].mxu0
    %v3148 = vadd.f32 0.0, %v3147
    %v3149 = vpop.f32.mrb[0].mxu0
    %v3150 = vpop.f32.mrb[0].mxu0
    %v3151 = vadd.f32 0.0, %v3150
    %v3152 = vpop.f32.mrb[0].mxu0
    %3153 = vmatprep.mubr.bf16.mxu0 0
    %3154 = vmatmul.mubr.bf16.gmra.mrb[0].mxu0 %v2954
    %v3155 = vpop.f32.mrb[0].mxu0
    %v3156 = vadd.f32 0.0, %v3155
    %v3157 = vpop.f32.mrb[0].mxu0
    %v3158 = vpop.f32.mrb[0].mxu0
    %v3159 = vadd.f32 0.0, %v3158
    %v3160 = vpop.f32.mrb[0].mxu0
    %3161 = vmatprep.mubr.bf16.mxu0 0
    %3162 = vmatmul.mubr.bf16.gmra.mrb[0].mxu0 %v2962
    %v3163 = vpop.f32.mrb[0].mxu0
    %v3164 = vadd.f32 0.0, %v3163
    %v3165 = vpop.f32.mrb[0].mxu0
    %v3166 = vpop.f32.mrb[0].mxu0
    %v3167 = vadd.f32 0.0, %v3166
    %v3168 = vpop.f32.mrb[0].mxu0
    %3169 = vmatprep.mubr.bf16.mxu0 0
    %3170 = vmatmul.mubr.bf16.gmra.mrb[0].mxu0 %v2970
    %v3171 = vpop.f32.mrb[0].mxu0
    %v3172 = vadd.f32 0.0, %v3171
    %v3173 = vpop.f32.mrb[0].mxu0
    %v3174 = vpop.f32.mrb[0].mxu0
    %v3175 = vadd.f32 0.0, %v3174
    %v3176 = vpop.f32.mrb[0].mxu0
    %3177 = vmatprep.mubr.bf16.mxu0 0
    %3178 = vmatmul.mubr.bf16.gmra.mrb[0].mxu0 %v2978
    %v3179 = vpop.f32.mrb[0].mxu0
    %v3180 = vadd.f32 0.0, %v3179
    %v3181 = vpop.f32.mrb[0].mxu0
    %v3182 = vpop.f32.mrb[0].mxu0
    %v3183 = vadd.f32 0.0, %v3182
    %v3184 = vpop.f32.mrb[0].mxu0
    %3185 = vmatprep.mubr.bf16.mxu0 0
    %3186 = vmatmul.mubr.bf16.gmra.mrb[0].mxu0 %v2986
    %v3187 = vpop.f32.mrb[0].mxu0
    %v3188 = vadd.f32 0.0, %v3187
    %v3189 = vpop.f32.mrb[0].mxu0
    %v3190 = vpop.f32.mrb[0].mxu0
    %v3191 = vadd.f32 0.0, %v3190
    %v3192 = vpop.f32.mrb[0].mxu0
    %3193 = vdwg.mxu0
    %v3194 = vadd.f32 %v2811, %v3084
    %v3195 = vadd.f32 %v2812, %v3087
    %v3196 = vadd.f32 %v2813, %v3092
    %v3197 = vadd.f32 %v2814, %v3095
    %v3198 = vadd.f32 %v2815, %v3100
    %v3199 = vadd.f32 %v2816, %v3103
    %v3200 = vadd.f32 %v2817, %v3108
    %v3201 = vadd.f32 %v2818, %v3111
    %v3202 = vadd.f32 %v2819, %v3116
    %v3203 = vadd.f32 %v2820, %v3119
    %v3204 = vadd.f32 %v2821, %v3124
    %v3205 = vadd.f32 %v2822, %v3127
    %v3206 = vadd.f32 %v2823, %v3132
    %v3207 = vadd.f32 %v2824, %v3135
    %v3208 = vadd.f32 %v2825, %v3140
    %v3209 = vadd.f32 %v2826, %v3143
    %v3210 = vadd.f32 %v2827, %v3148
    %v3211 = vadd.f32 %v2828, %v3151
    %v3212 = vadd.f32 %v2829, %v3156
    %v3213 = vadd.f32 %v2830, %v3159
    %v3214 = vadd.f32 %v2831, %v3164
    %v3215 = vadd.f32 %v2832, %v3167
    %v3216 = vadd.f32 %v2833, %v3172
    %v3217 = vadd.f32 %v2834, %v3175
    %v3218 = vadd.f32 %v2835, %v3180
    %v3219 = vadd.f32 %v2836, %v3183
    %v3220 = vadd.f32 %v2837, %v3188
    %v3221 = vadd.f32 %v2838, %v3191
    %v3222 = vld [vmem:[#allocation2 + $0x70] sm:$0xff]
    %s3223 = scalar_lea.vmem %s3, 128
    %v3224 = vld [vmem:[%s3223] sm:$0xf]
    %v3225 = vld [vmem:[%s3223 + $0x4] sm:$0xf]
    %v3226 = vld [vmem:[%s3223 + $0x8] sm:$0xf]
    %v3227 = vld [vmem:[%s3223 + $0xc] sm:$0xf]
    %v3228 = vld [vmem:[%s3223 + $0x10] sm:$0xf]
    %v3229 = vld [vmem:[%s3223 + $0x14] sm:$0xf]
    %v3230 = vld [vmem:[%s3223 + $0x18] sm:$0xf]
    %v3231 = vld [vmem:[%s3223 + $0x1c] sm:$0xf]
    %v3232 = vld [vmem:[%s3223 + $0x20] sm:$0xf]
    %v3233 = vld [vmem:[%s3223 + $0x24] sm:$0xf]
    %v3234 = vld [vmem:[%s3223 + $0x28] sm:$0xf]
    %v3235 = vld [vmem:[%s3223 + $0x2c] sm:$0xf]
    %v3236 = vld [vmem:[%s3223 + $0x30] sm:$0xf]
    %v3237 = vld [vmem:[%s3223 + $0x34] sm:$0xf]
    %v3238 = vld [vmem:[%s3223 + $0x38] sm:$0xf]
    %v3239 = vld [vmem:[%s3223 + $0x3c] sm:$0xf]
    %v3256 = vunpack.c.l.b16 %v3224
    %v3257 = vunpack.c.l.b16 %v3225
    %v3258 = vunpack.c.l.b16 %v3226
    %v3259 = vunpack.c.l.b16 %v3227
    %v3260 = vunpack.c.l.b16 %v3228
    %v3261 = vunpack.c.l.b16 %v3229
    %v3262 = vunpack.c.l.b16 %v3230
    %v3263 = vunpack.c.l.b16 %v3231
    %v3264 = vunpack.c.l.b16 %v3232
    %v3265 = vunpack.c.l.b16 %v3233
    %v3266 = vunpack.c.l.b16 %v3234
    %v3267 = vunpack.c.l.b16 %v3235
    %v3268 = vunpack.c.l.b16 %v3236
    %v3269 = vunpack.c.l.b16 %v3237
    %v3270 = vunpack.c.l.b16 %v3238
    %v3271 = vunpack.c.l.b16 %v3239
    %v3272 = vpack.c.b16 %v3257, %v3256
    %v3273 = vpack.c.b16 %v3259, %v3258
    %v3274 = vpack.c.b16 %v3261, %v3260
    %v3275 = vpack.c.b16 %v3263, %v3262
    %v3276 = vpack.c.b16 %v3265, %v3264
    %v3277 = vpack.c.b16 %v3267, %v3266
    %v3278 = vpack.c.b16 %v3269, %v3268
    %v3279 = vpack.c.b16 %v3271, %v3270
    %3288 = vmatprep.subr.bf16.mxu0 0
    %3289 = vmatpush1.bf16.msra.mxu0 %v3272
    %3290 = vmatprep.subr.bf16.mxu0 0
    %3291 = vmatpush1.bf16.msra.mxu0 %v3273
    %3292 = vmatprep.subr.bf16.mxu0 0
    %3293 = vmatpush1.bf16.msra.mxu0 %v3274
    %3294 = vmatprep.subr.bf16.mxu0 0
    %3295 = vmatpush1.bf16.msra.mxu0 %v3275
    %3296 = vmatprep.subr.bf16.mxu0 0
    %3297 = vmatpush1.bf16.msra.mxu0 %v3276
    %3298 = vmatprep.subr.bf16.mxu0 0
    %3299 = vmatpush1.bf16.msra.mxu0 %v3277
    %3300 = vmatprep.subr.bf16.mxu0 0
    %3301 = vmatpush1.bf16.msra.mxu0 %v3278
    %3302 = vmatprep.subr.bf16.mxu0 0
    %3303 = vmatpush1.bf16.msra.mxu0 %v3279
    %3304 = vmatprep.subr.bf16.mxu0 0
    %3305 = vmatpush1.bf16.msra.mxu0 0
    %3306 = vmatprep.subr.bf16.mxu0 0
    %3307 = vmatpush1.bf16.msra.mxu0 0
    %3308 = vmatprep.subr.bf16.mxu0 0
    %3309 = vmatpush1.bf16.msra.mxu0 0
    %3310 = vmatprep.subr.bf16.mxu0 0
    %3311 = vmatpush1.bf16.msra.mxu0 0
    %3312 = vmatprep.subr.bf16.mxu0 0
    %3313 = vmatpush1.bf16.msra.mxu0 0
    %3314 = vmatprep.subr.bf16.mxu0 0
    %3315 = vmatpush1.bf16.msra.mxu0 0
    %3316 = vmatprep.subr.bf16.mxu0 0
    %3317 = vmatpush1.bf16.msra.mxu0 0
    %3318 = vmatprep.subr.bf16.mxu0 0
    %3319 = vmatpush1.bf16.msra.mxu0 0
    %3320 = vmatprep.mubr.bf16.mxu0 0
    %3321 = vmatmul.mubr.bf16.gmra.mrb[0].mxu0 %v2840
    %v3322 = vpop.f32.mrb[0].mxu0
    %v3323 = vadd.f32 0.0, %v3322
    %v3324 = vpop.f32.mrb[0].mxu0
    %v3325 = vpop.f32.mrb[0].mxu0
    %v3326 = vadd.f32 0.0, %v3325
    %v3327 = vpop.f32.mrb[0].mxu0
    %3328 = vmatprep.mubr.bf16.mxu0 0
    %3329 = vmatmul.mubr.bf16.gmra.mrb[0].mxu0 %v2841
    %v3330 = vpop.f32.mrb[0].mxu0
    %v3331 = vadd.f32 0.0, %v3330
    %v3332 = vpop.f32.mrb[0].mxu0
    %v3333 = vpop.f32.mrb[0].mxu0
    %v3334 = vadd.f32 0.0, %v3333
    %v3335 = vpop.f32.mrb[0].mxu0
    %3336 = vmatprep.mubr.bf16.mxu0 0
    %3337 = vmatmul.mubr.bf16.gmra.mrb[0].mxu0 %v2842
    %v3338 = vpop.f32.mrb[0].mxu0
    %v3339 = vadd.f32 0.0, %v3338
    %v3340 = vpop.f32.mrb[0].mxu0
    %v3341 = vpop.f32.mrb[0].mxu0
    %v3342 = vadd.f32 0.0, %v3341
    %v3343 = vpop.f32.mrb[0].mxu0
    %3344 = vmatprep.mubr.bf16.mxu0 0
    %3345 = vmatmul.mubr.bf16.gmra.mrb[0].mxu0 %v2843
    %v3346 = vpop.f32.mrb[0].mxu0
    %v3347 = vadd.f32 0.0, %v3346
    %v3348 = vpop.f32.mrb[0].mxu0
    %v3349 = vpop.f32.mrb[0].mxu0
    %v3350 = vadd.f32 0.0, %v3349
    %v3351 = vpop.f32.mrb[0].mxu0
    %3352 = vmatprep.mubr.bf16.mxu0 0
    %3353 = vmatmul.mubr.bf16.gmra.mrb[0].mxu0 %v2844
    %v3354 = vpop.f32.mrb[0].mxu0
    %v3355 = vadd.f32 0.0, %v3354
    %v3356 = vpop.f32.mrb[0].mxu0
    %v3357 = vpop.f32.mrb[0].mxu0
    %v3358 = vadd.f32 0.0, %v3357
    %v3359 = vpop.f32.mrb[0].mxu0
    %3360 = vmatprep.mubr.bf16.mxu0 0
    %3361 = vmatmul.mubr.bf16.gmra.mrb[0].mxu0 %v2845
    %v3362 = vpop.f32.mrb[0].mxu0
    %v3363 = vadd.f32 0.0, %v3362
    %v3364 = vpop.f32.mrb[0].mxu0
    %v3365 = vpop.f32.mrb[0].mxu0
    %v3366 = vadd.f32 0.0, %v3365
    %v3367 = vpop.f32.mrb[0].mxu0
    %3368 = vmatprep.mubr.bf16.mxu0 0
    %3369 = vmatmul.mubr.bf16.gmra.mrb[0].mxu0 %v2846
    %v3370 = vpop.f32.mrb[0].mxu0
    %v3371 = vadd.f32 0.0, %v3370
    %v3372 = vpop.f32.mrb[0].mxu0
    %v3373 = vpop.f32.mrb[0].mxu0
    %v3374 = vadd.f32 0.0, %v3373
    %v3375 = vpop.f32.mrb[0].mxu0
    %3376 = vmatprep.mubr.bf16.mxu0 0
    %3377 = vmatmul.mubr.bf16.gmra.mrb[0].mxu0 %v2847
    %v3378 = vpop.f32.mrb[0].mxu0
    %v3379 = vadd.f32 0.0, %v3378
    %v3380 = vpop.f32.mrb[0].mxu0
    %v3381 = vpop.f32.mrb[0].mxu0
    %v3382 = vadd.f32 0.0, %v3381
    %v3383 = vpop.f32.mrb[0].mxu0
    %3384 = vmatprep.mubr.bf16.mxu0 0
    %3385 = vmatmul.mubr.bf16.gmra.mrb[0].mxu0 %v2848
    %v3386 = vpop.f32.mrb[0].mxu0
    %v3387 = vadd.f32 0.0, %v3386
    %v3388 = vpop.f32.mrb[0].mxu0
    %v3389 = vpop.f32.mrb[0].mxu0
    %v3390 = vadd.f32 0.0, %v3389
    %v3391 = vpop.f32.mrb[0].mxu0
    %3392 = vmatprep.mubr.bf16.mxu0 0
    %3393 = vmatmul.mubr.bf16.gmra.mrb[0].mxu0 %v2849
    %v3394 = vpop.f32.mrb[0].mxu0
    %v3395 = vadd.f32 0.0, %v3394
    %v3396 = vpop.f32.mrb[0].mxu0
    %v3397 = vpop.f32.mrb[0].mxu0
    %v3398 = vadd.f32 0.0, %v3397
    %v3399 = vpop.f32.mrb[0].mxu0
    %3400 = vmatprep.mubr.bf16.mxu0 0
    %3401 = vmatmul.mubr.bf16.gmra.mrb[0].mxu0 %v2850
    %v3402 = vpop.f32.mrb[0].mxu0
    %v3403 = vadd.f32 0.0, %v3402
    %v3404 = vpop.f32.mrb[0].mxu0
    %v3405 = vpop.f32.mrb[0].mxu0
    %v3406 = vadd.f32 0.0, %v3405
    %v3407 = vpop.f32.mrb[0].mxu0
    %3408 = vmatprep.mubr.bf16.mxu0 0
    %3409 = vmatmul.mubr.bf16.gmra.mrb[0].mxu0 %v2851
    %v3410 = vpop.f32.mrb[0].mxu0
    %v3411 = vadd.f32 0.0, %v3410
    %v3412 = vpop.f32.mrb[0].mxu0
    %v3413 = vpop.f32.mrb[0].mxu0
    %v3414 = vadd.f32 0.0, %v3413
    %v3415 = vpop.f32.mrb[0].mxu0
    %3416 = vmatprep.mubr.bf16.mxu0 0
    %3417 = vmatmul.mubr.bf16.gmra.mrb[0].mxu0 %v2852
    %v3418 = vpop.f32.mrb[0].mxu0
    %v3419 = vadd.f32 0.0, %v3418
    %v3420 = vpop.f32.mrb[0].mxu0
    %v3421 = vpop.f32.mrb[0].mxu0
    %v3422 = vadd.f32 0.0, %v3421
    %v3423 = vpop.f32.mrb[0].mxu0
    %3424 = vmatprep.mubr.bf16.mxu0 0
    %3425 = vmatmul.mubr.bf16.gmra.mrb[0].mxu0 %v3222
    %v3426 = vpop.f32.mrb[0].mxu0
    %v3427 = vadd.f32 0.0, %v3426
    %v3428 = vpop.f32.mrb[0].mxu0
    %v3429 = vpop.f32.mrb[0].mxu0
    %v3430 = vadd.f32 0.0, %v3429
    %v3431 = vpop.f32.mrb[0].mxu0
    %3432 = vdwg.mxu0
    %v3433 = vadd.f32 %v3194, %v3323
    %v3434 = vadd.f32 %v3195, %v3326
    %v3435 = vadd.f32 %v3196, %v3331
    %v3436 = vadd.f32 %v3197, %v3334
    %v3437 = vadd.f32 %v3198, %v3339
    %v3438 = vadd.f32 %v3199, %v3342
    %v3439 = vadd.f32 %v3200, %v3347
    %v3440 = vadd.f32 %v3201, %v3350
    %v3441 = vadd.f32 %v3202, %v3355
    %v3442 = vadd.f32 %v3203, %v3358
    %v3443 = vadd.f32 %v3204, %v3363
    %v3444 = vadd.f32 %v3205, %v3366
    %v3445 = vadd.f32 %v3206, %v3371
    %v3446 = vadd.f32 %v3207, %v3374
    %v3447 = vadd.f32 %v3208, %v3379
    %v3448 = vadd.f32 %v3209, %v3382
    %v3449 = vadd.f32 %v3210, %v3387
    %v3450 = vadd.f32 %v3211, %v3390
    %v3451 = vadd.f32 %v3212, %v3395
    %v3452 = vadd.f32 %v3213, %v3398
    %v3453 = vadd.f32 %v3214, %v3403
    %v3454 = vadd.f32 %v3215, %v3406
    %v3455 = vadd.f32 %v3216, %v3411
    %v3456 = vadd.f32 %v3217, %v3414
    %v3457 = vadd.f32 %v3218, %v3419
    %v3458 = vadd.f32 %v3219, %v3422
    %v3459 = vadd.f32 %v3220, %v3427
    %v3460 = vadd.f32 %v3221, %v3430
    %v3461 = vld [vmem:[#allocation2 + $0x8] sm:$0xff]
    %v3462 = vld [vmem:[#allocation2 + $0x10] sm:$0xff]
    %v3463 = vld [vmem:[#allocation2 + $0x18] sm:$0xff]
    %v3464 = vld [vmem:[#allocation2 + $0x20] sm:$0xff]
    %v3465 = vld [vmem:[#allocation2 + $0x28] sm:$0xff]
    %v3466 = vld [vmem:[#allocation2 + $0x30] sm:$0xff]
    %v3467 = vld [vmem:[#allocation2 + $0x38] sm:$0xff]
    %v3468 = vld [vmem:[#allocation2 + $0x40] sm:$0xff]
    %v3469 = vld [vmem:[#allocation2 + $0x48] sm:$0xff]
    %v3470 = vld [vmem:[#allocation2 + $0x50] sm:$0xff]
    %v3471 = vld [vmem:[#allocation2 + $0x58] sm:$0xff]
    %v3472 = vld [vmem:[#allocation2 + $0x60] sm:$0xff]
    %v3473 = vld [vmem:[#allocation2 + $0x68] sm:$0xff]
    %v3474 = vld [vmem:[#allocation2 + $0x70] sm:$0xff]
    %v3475 = vld [vmem:[#allocation2 + $0x78] sm:$0x1]
    %s3476 = scalar_lea.vmem %s3, 192
    %v3477 = vld [vmem:[%s3476] sm:$0xf]
    %v3478 = vld [vmem:[%s3476 + $0x4] sm:$0xf]
    %v3479 = vld [vmem:[%s3476 + $0x8] sm:$0xf]
    %v3480 = vld [vmem:[%s3476 + $0xc] sm:$0xf]
    %v3481 = vld [vmem:[%s3476 + $0x10] sm:$0xf]
    %v3482 = vld [vmem:[%s3476 + $0x14] sm:$0xf]
    %v3483 = vld [vmem:[%s3476 + $0x18] sm:$0xf]
    %v3484 = vld [vmem:[%s3476 + $0x1c] sm:$0xf]
    %v3485 = vld [vmem:[%s3476 + $0x20] sm:$0xf]
    %v3486 = vld [vmem:[%s3476 + $0x24] sm:$0xf]
    %v3487 = vld [vmem:[%s3476 + $0x28] sm:$0xf]
    %v3488 = vld [vmem:[%s3476 + $0x2c] sm:$0xf]
    %v3489 = vld [vmem:[%s3476 + $0x30] sm:$0xf]
    %v3490 = vld [vmem:[%s3476 + $0x34] sm:$0xf]
    %v3491 = vld [vmem:[%s3476 + $0x38] sm:$0xf]
    %v3492 = vld [vmem:[%s3476 + $0x3c] sm:$0xf]
    %v3494 = vshrl.u32 %v3461, 16
    %v3496 = vshll.u32 %v3461, 16
    %v3498 = vrot.slane %v3496, 1
    %v3499 = vor.u32 %v3494, %v3498
    %v3501 = vshll.u32 %v3462, 16
    %v3503 = vrot.slane %v3501, 1
    %v3504 = vsel %vm725, %v3499, %v3503
    %v3505 = vshrl.u32 %v3462, 16
    %v3507 = vor.u32 %v3505, %v3503
    %v3509 = vshll.u32 %v3463, 16
    %v3511 = vrot.slane %v3509, 1
    %v3512 = vsel %vm725, %v3507, %v3511
    %v3513 = vshrl.u32 %v3463, 16
    %v3515 = vor.u32 %v3513, %v3511
    %v3517 = vshll.u32 %v3464, 16
    %v3519 = vrot.slane %v3517, 1
    %v3520 = vsel %vm725, %v3515, %v3519
    %v3521 = vshrl.u32 %v3464, 16
    %v3523 = vor.u32 %v3521, %v3519
    %v3525 = vshll.u32 %v3465, 16
    %v3527 = vrot.slane %v3525, 1
    %v3528 = vsel %vm725, %v3523, %v3527
    %v3529 = vshrl.u32 %v3465, 16
    %v3531 = vor.u32 %v3529, %v3527
    %v3533 = vshll.u32 %v3466, 16
    %v3535 = vrot.slane %v3533, 1
    %v3536 = vsel %vm725, %v3531, %v3535
    %v3537 = vshrl.u32 %v3466, 16
    %v3539 = vor.u32 %v3537, %v3535
    %v3541 = vshll.u32 %v3467, 16
    %v3543 = vrot.slane %v3541, 1
    %v3544 = vsel %vm725, %v3539, %v3543
    %v3545 = vshrl.u32 %v3467, 16
    %v3547 = vor.u32 %v3545, %v3543
    %v3549 = vshll.u32 %v3468, 16
    %v3551 = vrot.slane %v3549, 1
    %v3552 = vsel %vm725, %v3547, %v3551
    %v3553 = vshrl.u32 %v3468, 16
    %v3555 = vor.u32 %v3553, %v3551
    %v3557 = vshll.u32 %v3469, 16
    %v3559 = vrot.slane %v3557, 1
    %v3560 = vsel %vm725, %v3555, %v3559
    %v3561 = vshrl.u32 %v3469, 16
    %v3563 = vor.u32 %v3561, %v3559
    %v3565 = vshll.u32 %v3470, 16
    %v3567 = vrot.slane %v3565, 1
    %v3568 = vsel %vm725, %v3563, %v3567
    %v3569 = vshrl.u32 %v3470, 16
    %v3571 = vor.u32 %v3569, %v3567
    %v3573 = vshll.u32 %v3471, 16
    %v3575 = vrot.slane %v3573, 1
    %v3576 = vsel %vm725, %v3571, %v3575
    %v3577 = vshrl.u32 %v3471, 16
    %v3579 = vor.u32 %v3577, %v3575
    %v3581 = vshll.u32 %v3472, 16
    %v3583 = vrot.slane %v3581, 1
    %v3584 = vsel %vm725, %v3579, %v3583
    %v3585 = vshrl.u32 %v3472, 16
    %v3587 = vor.u32 %v3585, %v3583
    %v3589 = vshll.u32 %v3473, 16
    %v3591 = vrot.slane %v3589, 1
    %v3592 = vsel %vm725, %v3587, %v3591
    %v3593 = vshrl.u32 %v3473, 16
    %v3595 = vor.u32 %v3593, %v3591
    %v3597 = vshll.u32 %v3474, 16
    %v3599 = vrot.slane %v3597, 1
    %v3600 = vsel %vm725, %v3595, %v3599
    %v3601 = vshrl.u32 %v3474, 16
    %v3603 = vor.u32 %v3601, %v3599
    %v3605 = vshll.u32 %v3475, 16
    %v3607 = vrot.slane %v3605, 1
    %v3608 = vsel %vm725, %v3603, %v3607
    %v3639 = vunpack.c.l.b16 %v3477
    %v3640 = vunpack.c.l.b16 %v3478
    %v3641 = vunpack.c.l.b16 %v3479
    %v3642 = vunpack.c.l.b16 %v3480
    %v3643 = vunpack.c.l.b16 %v3481
    %v3644 = vunpack.c.l.b16 %v3482
    %v3645 = vunpack.c.l.b16 %v3483
    %v3646 = vunpack.c.l.b16 %v3484
    %v3647 = vunpack.c.l.b16 %v3485
    %v3648 = vunpack.c.l.b16 %v3486
    %v3649 = vunpack.c.l.b16 %v3487
    %v3650 = vunpack.c.l.b16 %v3488
    %v3651 = vunpack.c.l.b16 %v3489
    %v3652 = vunpack.c.l.b16 %v3490
    %v3653 = vunpack.c.l.b16 %v3491
    %v3654 = vunpack.c.l.b16 %v3492
    %v3655 = vpack.c.b16 %v3640, %v3639
    %v3656 = vpack.c.b16 %v3642, %v3641
    %v3657 = vpack.c.b16 %v3644, %v3643
    %v3658 = vpack.c.b16 %v3646, %v3645
    %v3659 = vpack.c.b16 %v3648, %v3647
    %v3660 = vpack.c.b16 %v3650, %v3649
    %v3661 = vpack.c.b16 %v3652, %v3651
    %v3662 = vpack.c.b16 %v3654, %v3653
    %3671 = vmatprep.subr.bf16.mxu0 0
    %3672 = vmatpush1.bf16.msra.mxu0 %v3655
    %3673 = vmatprep.subr.bf16.mxu0 0
    %3674 = vmatpush1.bf16.msra.mxu0 %v3656
    %3675 = vmatprep.subr.bf16.mxu0 0
    %3676 = vmatpush1.bf16.msra.mxu0 %v3657
    %3677 = vmatprep.subr.bf16.mxu0 0
    %3678 = vmatpush1.bf16.msra.mxu0 %v3658
    %3679 = vmatprep.subr.bf16.mxu0 0
    %3680 = vmatpush1.bf16.msra.mxu0 %v3659
    %3681 = vmatprep.subr.bf16.mxu0 0
    %3682 = vmatpush1.bf16.msra.mxu0 %v3660
    %3683 = vmatprep.subr.bf16.mxu0 0
    %3684 = vmatpush1.bf16.msra.mxu0 %v3661
    %3685 = vmatprep.subr.bf16.mxu0 0
    %3686 = vmatpush1.bf16.msra.mxu0 %v3662
    %3687 = vmatprep.subr.bf16.mxu0 0
    %3688 = vmatpush1.bf16.msra.mxu0 0
    %3689 = vmatprep.subr.bf16.mxu0 0
    %3690 = vmatpush1.bf16.msra.mxu0 0
    %3691 = vmatprep.subr.bf16.mxu0 0
    %3692 = vmatpush1.bf16.msra.mxu0 0
    %3693 = vmatprep.subr.bf16.mxu0 0
    %3694 = vmatpush1.bf16.msra.mxu0 0
    %3695 = vmatprep.subr.bf16.mxu0 0
    %3696 = vmatpush1.bf16.msra.mxu0 0
    %3697 = vmatprep.subr.bf16.mxu0 0
    %3698 = vmatpush1.bf16.msra.mxu0 0
    %3699 = vmatprep.subr.bf16.mxu0 0
    %3700 = vmatpush1.bf16.msra.mxu0 0
    %3701 = vmatprep.subr.bf16.mxu0 0
    %3702 = vmatpush1.bf16.msra.mxu0 0
    %3703 = vmatprep.mubr.bf16.mxu0 0
    %3704 = vmatmul.mubr.bf16.gmra.mrb[0].mxu0 %v3504
    %v3705 = vpop.f32.mrb[0].mxu0
    %v3706 = vadd.f32 0.0, %v3705
    %v3707 = vpop.f32.mrb[0].mxu0
    %v3708 = vpop.f32.mrb[0].mxu0
    %v3709 = vadd.f32 0.0, %v3708
    %v3710 = vpop.f32.mrb[0].mxu0
    %3711 = vmatprep.mubr.bf16.mxu0 0
    %3712 = vmatmul.mubr.bf16.gmra.mrb[0].mxu0 %v3512
    %v3713 = vpop.f32.mrb[0].mxu0
    %v3714 = vadd.f32 0.0, %v3713
    %v3715 = vpop.f32.mrb[0].mxu0
    %v3716 = vpop.f32.mrb[0].mxu0
    %v3717 = vadd.f32 0.0, %v3716
    %v3718 = vpop.f32.mrb[0].mxu0
    %3719 = vmatprep.mubr.bf16.mxu0 0
    %3720 = vmatmul.mubr.bf16.gmra.mrb[0].mxu0 %v3520
    %v3721 = vpop.f32.mrb[0].mxu0
    %v3722 = vadd.f32 0.0, %v3721
    %v3723 = vpop.f32.mrb[0].mxu0
    %v3724 = vpop.f32.mrb[0].mxu0
    %v3725 = vadd.f32 0.0, %v3724
    %v3726 = vpop.f32.mrb[0].mxu0
    %3727 = vmatprep.mubr.bf16.mxu0 0
    %3728 = vmatmul.mubr.bf16.gmra.mrb[0].mxu0 %v3528
    %v3729 = vpop.f32.mrb[0].mxu0
    %v3730 = vadd.f32 0.0, %v3729
    %v3731 = vpop.f32.mrb[0].mxu0
    %v3732 = vpop.f32.mrb[0].mxu0
    %v3733 = vadd.f32 0.0, %v3732
    %v3734 = vpop.f32.mrb[0].mxu0
    %3735 = vmatprep.mubr.bf16.mxu0 0
    %3736 = vmatmul.mubr.bf16.gmra.mrb[0].mxu0 %v3536
    %v3737 = vpop.f32.mrb[0].mxu0
    %v3738 = vadd.f32 0.0, %v3737
    %v3739 = vpop.f32.mrb[0].mxu0
    %v3740 = vpop.f32.mrb[0].mxu0
    %v3741 = vadd.f32 0.0, %v3740
    %v3742 = vpop.f32.mrb[0].mxu0
    %3743 = vmatprep.mubr.bf16.mxu0 0
    %3744 = vmatmul.mubr.bf16.gmra.mrb[0].mxu0 %v3544
    %v3745 = vpop.f32.mrb[0].mxu0
    %v3746 = vadd.f32 0.0, %v3745
    %v3747 = vpop.f32.mrb[0].mxu0
    %v3748 = vpop.f32.mrb[0].mxu0
    %v3749 = vadd.f32 0.0, %v3748
    %v3750 = vpop.f32.mrb[0].mxu0
    %3751 = vmatprep.mubr.bf16.mxu0 0
    %3752 = vmatmul.mubr.bf16.gmra.mrb[0].mxu0 %v3552
    %v3753 = vpop.f32.mrb[0].mxu0
    %v3754 = vadd.f32 0.0, %v3753
    %v3755 = vpop.f32.mrb[0].mxu0
    %v3756 = vpop.f32.mrb[0].mxu0
    %v3757 = vadd.f32 0.0, %v3756
    %v3758 = vpop.f32.mrb[0].mxu0
    %3759 = vmatprep.mubr.bf16.mxu0 0
    %3760 = vmatmul.mubr.bf16.gmra.mrb[0].mxu0 %v3560
    %v3761 = vpop.f32.mrb[0].mxu0
    %v3762 = vadd.f32 0.0, %v3761
    %v3763 = vpop.f32.mrb[0].mxu0
    %v3764 = vpop.f32.mrb[0].mxu0
    %v3765 = vadd.f32 0.0, %v3764
    %v3766 = vpop.f32.mrb[0].mxu0
    %3767 = vmatprep.mubr.bf16.mxu0 0
    %3768 = vmatmul.mubr.bf16.gmra.mrb[0].mxu0 %v3568
    %v3769 = vpop.f32.mrb[0].mxu0
    %v3770 = vadd.f32 0.0, %v3769
    %v3771 = vpop.f32.mrb[0].mxu0
    %v3772 = vpop.f32.mrb[0].mxu0
    %v3773 = vadd.f32 0.0, %v3772
    %v3774 = vpop.f32.mrb[0].mxu0
    %3775 = vmatprep.mubr.bf16.mxu0 0
    %3776 = vmatmul.mubr.bf16.gmra.mrb[0].mxu0 %v3576
    %v3777 = vpop.f32.mrb[0].mxu0
    %v3778 = vadd.f32 0.0, %v3777
    %v3779 = vpop.f32.mrb[0].mxu0
    %v3780 = vpop.f32.mrb[0].mxu0
    %v3781 = vadd.f32 0.0, %v3780
    %v3782 = vpop.f32.mrb[0].mxu0
    %3783 = vmatprep.mubr.bf16.mxu0 0
    %3784 = vmatmul.mubr.bf16.gmra.mrb[0].mxu0 %v3584
    %v3785 = vpop.f32.mrb[0].mxu0
    %v3786 = vadd.f32 0.0, %v3785
    %v3787 = vpop.f32.mrb[0].mxu0
    %v3788 = vpop.f32.mrb[0].mxu0
    %v3789 = vadd.f32 0.0, %v3788
    %v3790 = vpop.f32.mrb[0].mxu0
    %3791 = vmatprep.mubr.bf16.mxu0 0
    %3792 = vmatmul.mubr.bf16.gmra.mrb[0].mxu0 %v3592
    %v3793 = vpop.f32.mrb[0].mxu0
    %v3794 = vadd.f32 0.0, %v3793
    %v3795 = vpop.f32.mrb[0].mxu0
    %v3796 = vpop.f32.mrb[0].mxu0
    %v3797 = vadd.f32 0.0, %v3796
    %v3798 = vpop.f32.mrb[0].mxu0
    %3799 = vmatprep.mubr.bf16.mxu0 0
    %3800 = vmatmul.mubr.bf16.gmra.mrb[0].mxu0 %v3600
    %v3801 = vpop.f32.mrb[0].mxu0
    %v3802 = vadd.f32 0.0, %v3801
    %v3803 = vpop.f32.mrb[0].mxu0
    %v3804 = vpop.f32.mrb[0].mxu0
    %v3805 = vadd.f32 0.0, %v3804
    %v3806 = vpop.f32.mrb[0].mxu0
    %3807 = vmatprep.mubr.bf16.mxu0 0
    %3808 = vmatmul.mubr.bf16.gmra.mrb[0].mxu0 %v3608
    %v3809 = vpop.f32.mrb[0].mxu0
    %v3810 = vadd.f32 0.0, %v3809
    %v3811 = vpop.f32.mrb[0].mxu0
    %v3812 = vpop.f32.mrb[0].mxu0
    %v3813 = vadd.f32 0.0, %v3812
    %v3814 = vpop.f32.mrb[0].mxu0
    %3815 = vdwg.mxu0
    %v3816 = vadd.f32 %v3433, %v3706
    %v3817 = vadd.f32 %v3434, %v3709
    %v3818 = vadd.f32 %v3435, %v3714
    %v3819 = vadd.f32 %v3436, %v3717
    %v3820 = vadd.f32 %v3437, %v3722
    %v3821 = vadd.f32 %v3438, %v3725
    %v3822 = vadd.f32 %v3439, %v3730
    %v3823 = vadd.f32 %v3440, %v3733
    %v3824 = vadd.f32 %v3441, %v3738
    %v3825 = vadd.f32 %v3442, %v3741
    %v3826 = vadd.f32 %v3443, %v3746
    %v3827 = vadd.f32 %v3444, %v3749
    %v3828 = vadd.f32 %v3445, %v3754
    %v3829 = vadd.f32 %v3446, %v3757
    %v3830 = vadd.f32 %v3447, %v3762
    %v3831 = vadd.f32 %v3448, %v3765
    %v3832 = vadd.f32 %v3449, %v3770
    %v3833 = vadd.f32 %v3450, %v3773
    %v3834 = vadd.f32 %v3451, %v3778
    %v3835 = vadd.f32 %v3452, %v3781
    %v3836 = vadd.f32 %v3453, %v3786
    %v3837 = vadd.f32 %v3454, %v3789
    %v3838 = vadd.f32 %v3455, %v3794
    %v3839 = vadd.f32 %v3456, %v3797
    %v3840 = vadd.f32 %v3457, %v3802
    %v3841 = vadd.f32 %v3458, %v3805
    %v3842 = vadd.f32 %v3459, %v3810
    %v3843 = vadd.f32 %v3460, %v3813
    %v3844 = vmax.f32 %v3816, 0.0
    %v3845 = vmax.f32 %v3817, 0.0
    %v3846 = vmax.f32 %v3818, 0.0
    %v3847 = vmax.f32 %v3819, 0.0
    %v3848 = vmax.f32 %v3820, 0.0
    %v3849 = vmax.f32 %v3821, 0.0
    %v3850 = vmax.f32 %v3822, 0.0
    %v3851 = vmax.f32 %v3823, 0.0
    %v3852 = vmax.f32 %v3824, 0.0
    %v3853 = vmax.f32 %v3825, 0.0
    %v3854 = vmax.f32 %v3826, 0.0
    %v3855 = vmax.f32 %v3827, 0.0
    %v3856 = vmax.f32 %v3828, 0.0
    %v3857 = vmax.f32 %v3829, 0.0
    %v3858 = vmax.f32 %v3830, 0.0
    %v3859 = vmax.f32 %v3831, 0.0
    %v3860 = vmax.f32 %v3832, 0.0
    %v3861 = vmax.f32 %v3833, 0.0
    %v3862 = vmax.f32 %v3834, 0.0
    %v3863 = vmax.f32 %v3835, 0.0
    %v3864 = vmax.f32 %v3836, 0.0
    %v3865 = vmax.f32 %v3837, 0.0
    %v3866 = vmax.f32 %v3838, 0.0
    %v3867 = vmax.f32 %v3839, 0.0
    %v3868 = vmax.f32 %v3840, 0.0
    %v3869 = vmax.f32 %v3841, 0.0
    %v3870 = vmax.f32 %v3842, 0.0
    %v3871 = vmax.f32 %v3843, 0.0
    %v3872 = vpack.c.bf16 %v3845, %v3844
    %v3873 = vpack.c.bf16 %v3847, %v3846
    %v3874 = vpack.c.bf16 %v3849, %v3848
    %v3875 = vpack.c.bf16 %v3851, %v3850
    %v3876 = vpack.c.bf16 %v3853, %v3852
    %v3877 = vpack.c.bf16 %v3855, %v3854
    %v3878 = vpack.c.bf16 %v3857, %v3856
    %v3879 = vpack.c.bf16 %v3859, %v3858
    %v3880 = vpack.c.bf16 %v3861, %v3860
    %v3881 = vpack.c.bf16 %v3863, %v3862
    %v3882 = vpack.c.bf16 %v3865, %v3864
    %v3883 = vpack.c.bf16 %v3867, %v3866
    %v3884 = vpack.c.bf16 %v3869, %v3868
    %v3885 = vpack.c.bf16 %v3871, %v3870
    %v3900 = vunpack.c.l.b16 %v3872
    %v3901 = vunpack.c.h.b16 %v3872
    %v3902 = vunpack.c.l.b16 %v3873
    %v3903 = vunpack.c.h.b16 %v3873
    %v3904 = vunpack.c.l.b16 %v3874
    %v3905 = vunpack.c.h.b16 %v3874
    %v3906 = vunpack.c.l.b16 %v3875
    %v3907 = vunpack.c.h.b16 %v3875
    %v3908 = vunpack.c.l.b16 %v3876
    %v3909 = vunpack.c.h.b16 %v3876
    %v3910 = vunpack.c.l.b16 %v3877
    %v3911 = vunpack.c.h.b16 %v3877
    %v3912 = vunpack.c.l.b16 %v3878
    %v3913 = vunpack.c.h.b16 %v3878
    %v3914 = vunpack.c.l.b16 %v3879
    %v3915 = vunpack.c.h.b16 %v3879
    %v3916 = vunpack.c.l.b16 %v3880
    %v3917 = vunpack.c.h.b16 %v3880
    %v3918 = vunpack.c.l.b16 %v3881
    %v3919 = vunpack.c.h.b16 %v3881
    %v3920 = vunpack.c.l.b16 %v3882
    %v3921 = vunpack.c.h.b16 %v3882
    %v3922 = vunpack.c.l.b16 %v3883
    %v3923 = vunpack.c.h.b16 %v3883
    %v3924 = vunpack.c.l.b16 %v3884
    %v3925 = vunpack.c.h.b16 %v3884
    %v3926 = vunpack.c.l.b16 %v3885
    %v3927 = vunpack.c.h.b16 %v3885
    %v3928 = vpack.c.b16 %v3900, %v3900
    %v3929 = vpack.c.b16 %v3901, %v3901
    %v3930 = vpack.c.b16 %v3902, %v3902
    %v3931 = vpack.c.b16 %v3903, %v3903
    %v3932 = vpack.c.b16 %v3904, %v3904
    %v3933 = vpack.c.b16 %v3905, %v3905
    %v3934 = vpack.c.b16 %v3906, %v3906
    %v3935 = vpack.c.b16 %v3907, %v3907
    %v3936 = vpack.c.b16 %v3908, %v3908
    %v3937 = vpack.c.b16 %v3909, %v3909
    %v3938 = vpack.c.b16 %v3910, %v3910
    %v3939 = vpack.c.b16 %v3911, %v3911
    %v3940 = vpack.c.b16 %v3912, %v3912
    %v3941 = vpack.c.b16 %v3913, %v3913
    %v3942 = vpack.c.b16 %v3914, %v3914
    %v3943 = vpack.c.b16 %v3915, %v3915
    %v3944 = vpack.c.b16 %v3916, %v3916
    %v3945 = vpack.c.b16 %v3917, %v3917
    %v3946 = vpack.c.b16 %v3918, %v3918
    %v3947 = vpack.c.b16 %v3919, %v3919
    %v3948 = vpack.c.b16 %v3920, %v3920
    %v3949 = vpack.c.b16 %v3921, %v3921
    %v3950 = vpack.c.b16 %v3922, %v3922
    %v3951 = vpack.c.b16 %v3923, %v3923
    %v3952 = vpack.c.b16 %v3924, %v3924
    %v3953 = vpack.c.b16 %v3925, %v3925
    %v3954 = vpack.c.b16 %v3926, %v3926
    %v3955 = vpack.c.b16 %v3927, %v3927
    %vm3984 = vcmask 519168
    %3985 = vst.msk [vmem:[#allocation3] sm:$0xf] %vm3984, %v3928
    %3986 = vst.msk [vmem:[#allocation3 + $0x8] sm:$0xf] %vm3984, %v3929
    %3987 = vst.msk [vmem:[#allocation3 + $0x10] sm:$0xf] %vm3984, %v3930
    %3988 = vst.msk [vmem:[#allocation3 + $0x18] sm:$0xf] %vm3984, %v3931
    %3989 = vst.msk [vmem:[#allocation3 + $0x20] sm:$0xf] %vm3984, %v3932
    %3990 = vst.msk [vmem:[#allocation3 + $0x28] sm:$0xf] %vm3984, %v3933
    %3991 = vst.msk [vmem:[#allocation3 + $0x30] sm:$0xf] %vm3984, %v3934
    %3992 = vst.msk [vmem:[#allocation3 + $0x38] sm:$0xf] %vm3984, %v3935
    %3993 = vst.msk [vmem:[#allocation3 + $0x40] sm:$0xf] %vm3984, %v3936
    %3994 = vst.msk [vmem:[#allocation3 + $0x48] sm:$0xf] %vm3984, %v3937
    %3995 = vst.msk [vmem:[#allocation3 + $0x50] sm:$0xf] %vm3984, %v3938
    %3996 = vst.msk [vmem:[#allocation3 + $0x58] sm:$0xf] %vm3984, %v3939
    %3997 = vst.msk [vmem:[#allocation3 + $0x60] sm:$0xf] %vm3984, %v3940
    %3998 = vst.msk [vmem:[#allocation3 + $0x68] sm:$0xf] %vm3984, %v3941
    %3999 = vst.msk [vmem:[#allocation3 + $0x70] sm:$0xf] %vm3984, %v3942
    %4000 = vst.msk [vmem:[#allocation3 + $0x78] sm:$0xf] %vm3984, %v3943
    %4001 = vst.msk [vmem:[#allocation3 + $0x80] sm:$0xf] %vm3984, %v3944
    %4002 = vst.msk [vmem:[#allocation3 + $0x88] sm:$0xf] %vm3984, %v3945
    %4003 = vst.msk [vmem:[#allocation3 + $0x90] sm:$0xf] %vm3984, %v3946
    %4004 = vst.msk [vmem:[#allocation3 + $0x98] sm:$0xf] %vm3984, %v3947
    %4005 = vst.msk [vmem:[#allocation3 + $0xa0] sm:$0xf] %vm3984, %v3948
    %4006 = vst.msk [vmem:[#allocation3 + $0xa8] sm:$0xf] %vm3984, %v3949
    %4007 = vst.msk [vmem:[#allocation3 + $0xb0] sm:$0xf] %vm3984, %v3950
    %4008 = vst.msk [vmem:[#allocation3 + $0xb8] sm:$0xf] %vm3984, %v3951
    %4009 = vst.msk [vmem:[#allocation3 + $0xc0] sm:$0xf] %vm3984, %v3952
    %4010 = vst.msk [vmem:[#allocation3 + $0xc8] sm:$0xf] %vm3984, %v3953
    %4011 = vst.msk [vmem:[#allocation3 + $0xd0] sm:$0xf] %vm3984, %v3954
    %4012 = vst.msk [vmem:[#allocation3 + $0xd8] sm:$0xf] %vm3984, %v3955
    %4013 = vst.msk [vmem:[#allocation3 + $0xe0] sm:$0xf] %vm3984, 0
    %v4014 = vld [vmem:[#allocation3] sm:$0xf]
    %v4015 = vld [vmem:[#allocation3 + $0x8] sm:$0xf]
    %v4016 = vld [vmem:[#allocation3 + $0x10] sm:$0xf]
    %v4017 = vld [vmem:[#allocation3 + $0x18] sm:$0xf]
    %v4018 = vld [vmem:[#allocation3 + $0x20] sm:$0xf]
    %v4019 = vld [vmem:[#allocation3 + $0x28] sm:$0xf]
    %v4020 = vld [vmem:[#allocation3 + $0x30] sm:$0xf]
    %v4021 = vld [vmem:[#allocation3 + $0x38] sm:$0xf]
    %v4022 = vld [vmem:[#allocation3 + $0x40] sm:$0xf]
    %v4023 = vld [vmem:[#allocation3 + $0x48] sm:$0xf]
    %v4024 = vld [vmem:[#allocation3 + $0x50] sm:$0xf]
    %v4025 = vld [vmem:[#allocation3 + $0x58] sm:$0xf]
    %v4026 = vld [vmem:[#allocation3 + $0x60] sm:$0xf]
    %v4027 = vld [vmem:[#allocation3 + $0x68] sm:$0xf]
    %v4028 = vld [vmem:[#allocation3 + $0x70] sm:$0xf]
    %v4029 = vld [vmem:[#allocation3 + $0x78] sm:$0xf]
    %v4030 = vld [vmem:[#allocation3 + $0x80] sm:$0xf]
    %v4031 = vld [vmem:[#allocation3 + $0x88] sm:$0xf]
    %v4032 = vld [vmem:[#allocation3 + $0x90] sm:$0xf]
    %v4033 = vld [vmem:[#allocation3 + $0x98] sm:$0xf]
    %v4034 = vld [vmem:[#allocation3 + $0xa0] sm:$0xf]
    %v4035 = vld [vmem:[#allocation3 + $0xa8] sm:$0xf]
    %v4036 = vld [vmem:[#allocation3 + $0xb0] sm:$0xf]
    %v4037 = vld [vmem:[#allocation3 + $0xb8] sm:$0xf]
    %v4038 = vld [vmem:[#allocation3 + $0xc0] sm:$0xf]
    %v4039 = vld [vmem:[#allocation3 + $0xc8] sm:$0xf]
    %v4040 = vld [vmem:[#allocation3 + $0xd0] sm:$0xf]
    %v4041 = vld [vmem:[#allocation3 + $0xd8] sm:$0xf]
    %v4042 = vld [vmem:[#allocation3 + $0xe0] sm:$0x1]
    %vm4043 = vsmask.f32 3328
    %vm4044 = vsmask.f32 7440
    %vm4045 = vmor %vm4043, %vm4044
    %v4047 = vshrl.u32 %v4014, 16
    %v4049 = vrot.slane %v4047, 4
    %v4050 = vshll.u32 %v4014, 16
    %v4052 = vrot.slane %v4050, 5
    %v4053 = vor.u32 %v4049, %v4052
    %v4054 = vrot.slane %v4053, 4
    %v4056 = vshll.u32 %v4015, 16
    %v4058 = vrot.slane %v4056, 5
    %v4059 = vsel %vm4045, %v4054, %v4058
    %v4060 = vshrl.u32 %v4015, 16
    %v4062 = vrot.slane %v4060, 4
    %v4063 = vor.u32 %v4062, %v4058
    %v4064 = vrot.slane %v4063, 4
    %v4066 = vshll.u32 %v4016, 16
    %v4068 = vrot.slane %v4066, 5
    %v4069 = vsel %vm4045, %v4064, %v4068
    %v4070 = vshrl.u32 %v4016, 16
    %v4072 = vrot.slane %v4070, 4
    %v4073 = vor.u32 %v4072, %v4068
    %v4074 = vrot.slane %v4073, 4
    %v4076 = vshll.u32 %v4017, 16
    %v4078 = vrot.slane %v4076, 5
    %v4079 = vsel %vm4045, %v4074, %v4078
    %v4080 = vshrl.u32 %v4017, 16
    %v4082 = vrot.slane %v4080, 4
    %v4083 = vor.u32 %v4082, %v4078
    %v4084 = vrot.slane %v4083, 4
    %v4086 = vshll.u32 %v4018, 16
    %v4088 = vrot.slane %v4086, 5
    %v4089 = vsel %vm4045, %v4084, %v4088
    %v4090 = vshrl.u32 %v4018, 16
    %v4092 = vrot.slane %v4090, 4
    %v4093 = vor.u32 %v4092, %v4088
    %v4094 = vrot.slane %v4093, 4
    %v4096 = vshll.u32 %v4019, 16
    %v4098 = vrot.slane %v4096, 5
    %v4099 = vsel %vm4045, %v4094, %v4098
    %v4100 = vshrl.u32 %v4019, 16
    %v4102 = vrot.slane %v4100, 4
    %v4103 = vor.u32 %v4102, %v4098
    %v4104 = vrot.slane %v4103, 4
    %v4106 = vshll.u32 %v4020, 16
    %v4108 = vrot.slane %v4106, 5
    %v4109 = vsel %vm4045, %v4104, %v4108
    %v4110 = vshrl.u32 %v4020, 16
    %v4112 = vrot.slane %v4110, 4
    %v4113 = vor.u32 %v4112, %v4108
    %v4114 = vrot.slane %v4113, 4
    %v4116 = vshll.u32 %v4021, 16
    %v4118 = vrot.slane %v4116, 5
    %v4119 = vsel %vm4045, %v4114, %v4118
    %v4120 = vshrl.u32 %v4021, 16
    %v4122 = vrot.slane %v4120, 4
    %v4123 = vor.u32 %v4122, %v4118
    %v4124 = vrot.slane %v4123, 4
    %v4126 = vshll.u32 %v4022, 16
    %v4128 = vrot.slane %v4126, 5
    %v4129 = vsel %vm4045, %v4124, %v4128
    %v4130 = vshrl.u32 %v4022, 16
    %v4132 = vrot.slane %v4130, 4
    %v4133 = vor.u32 %v4132, %v4128
    %v4134 = vrot.slane %v4133, 4
    %v4136 = vshll.u32 %v4023, 16
    %v4138 = vrot.slane %v4136, 5
    %v4139 = vsel %vm4045, %v4134, %v4138
    %v4140 = vshrl.u32 %v4023, 16
    %v4142 = vrot.slane %v4140, 4
    %v4143 = vor.u32 %v4142, %v4138
    %v4144 = vrot.slane %v4143, 4
    %v4146 = vshll.u32 %v4024, 16
    %v4148 = vrot.slane %v4146, 5
    %v4149 = vsel %vm4045, %v4144, %v4148
    %v4150 = vshrl.u32 %v4024, 16
    %v4152 = vrot.slane %v4150, 4
    %v4153 = vor.u32 %v4152, %v4148
    %v4154 = vrot.slane %v4153, 4
    %v4156 = vshll.u32 %v4025, 16
    %v4158 = vrot.slane %v4156, 5
    %v4159 = vsel %vm4045, %v4154, %v4158
    %v4160 = vshrl.u32 %v4025, 16
    %v4162 = vrot.slane %v4160, 4
    %v4163 = vor.u32 %v4162, %v4158
    %v4164 = vrot.slane %v4163, 4
    %v4166 = vshll.u32 %v4026, 16
    %v4168 = vrot.slane %v4166, 5
    %v4169 = vsel %vm4045, %v4164, %v4168
    %v4170 = vshrl.u32 %v4026, 16
    %v4172 = vrot.slane %v4170, 4
    %v4173 = vor.u32 %v4172, %v4168
    %v4174 = vrot.slane %v4173, 4
    %v4176 = vshll.u32 %v4027, 16
    %v4178 = vrot.slane %v4176, 5
    %v4179 = vsel %vm4045, %v4174, %v4178
    %v4180 = vshrl.u32 %v4027, 16
    %v4182 = vrot.slane %v4180, 4
    %v4183 = vor.u32 %v4182, %v4178
    %v4184 = vrot.slane %v4183, 4
    %v4186 = vshll.u32 %v4028, 16
    %v4188 = vrot.slane %v4186, 5
    %v4189 = vsel %vm4045, %v4184, %v4188
    %v4190 = vshrl.u32 %v4028, 16
    %v4192 = vrot.slane %v4190, 4
    %v4193 = vor.u32 %v4192, %v4188
    %v4194 = vrot.slane %v4193, 4
    %v4196 = vshll.u32 %v4029, 16
    %v4198 = vrot.slane %v4196, 5
    %v4199 = vsel %vm4045, %v4194, %v4198
    %v4200 = vshrl.u32 %v4029, 16
    %v4202 = vrot.slane %v4200, 4
    %v4203 = vor.u32 %v4202, %v4198
    %v4204 = vrot.slane %v4203, 4
    %v4206 = vshll.u32 %v4030, 16
    %v4208 = vrot.slane %v4206, 5
    %v4209 = vsel %vm4045, %v4204, %v4208
    %v4210 = vshrl.u32 %v4030, 16
    %v4212 = vrot.slane %v4210, 4
    %v4213 = vor.u32 %v4212, %v4208
    %v4214 = vrot.slane %v4213, 4
    %v4216 = vshll.u32 %v4031, 16
    %v4218 = vrot.slane %v4216, 5
    %v4219 = vsel %vm4045, %v4214, %v4218
    %v4220 = vshrl.u32 %v4031, 16
    %v4222 = vrot.slane %v4220, 4
    %v4223 = vor.u32 %v4222, %v4218
    %v4224 = vrot.slane %v4223, 4
    %v4226 = vshll.u32 %v4032, 16
    %v4228 = vrot.slane %v4226, 5
    %v4229 = vsel %vm4045, %v4224, %v4228
    %v4230 = vshrl.u32 %v4032, 16
    %v4232 = vrot.slane %v4230, 4
    %v4233 = vor.u32 %v4232, %v4228
    %v4234 = vrot.slane %v4233, 4
    %v4236 = vshll.u32 %v4033, 16
    %v4238 = vrot.slane %v4236, 5
    %v4239 = vsel %vm4045, %v4234, %v4238
    %v4240 = vshrl.u32 %v4033, 16
    %v4242 = vrot.slane %v4240, 4
    %v4243 = vor.u32 %v4242, %v4238
    %v4244 = vrot.slane %v4243, 4
    %v4246 = vshll.u32 %v4034, 16
    %v4248 = vrot.slane %v4246, 5
    %v4249 = vsel %vm4045, %v4244, %v4248
    %v4250 = vshrl.u32 %v4034, 16
    %v4252 = vrot.slane %v4250, 4
    %v4253 = vor.u32 %v4252, %v4248
    %v4254 = vrot.slane %v4253, 4
    %v4256 = vshll.u32 %v4035, 16
    %v4258 = vrot.slane %v4256, 5
    %v4259 = vsel %vm4045, %v4254, %v4258
    %v4260 = vshrl.u32 %v4035, 16
    %v4262 = vrot.slane %v4260, 4
    %v4263 = vor.u32 %v4262, %v4258
    %v4264 = vrot.slane %v4263, 4
    %v4266 = vshll.u32 %v4036, 16
    %v4268 = vrot.slane %v4266, 5
    %v4269 = vsel %vm4045, %v4264, %v4268
    %v4270 = vshrl.u32 %v4036, 16
    %v4272 = vrot.slane %v4270, 4
    %v4273 = vor.u32 %v4272, %v4268
    %v4274 = vrot.slane %v4273, 4
    %v4276 = vshll.u32 %v4037, 16
    %v4278 = vrot.slane %v4276, 5
    %v4279 = vsel %vm4045, %v4274, %v4278
    %v4280 = vshrl.u32 %v4037, 16
    %v4282 = vrot.slane %v4280, 4
    %v4283 = vor.u32 %v4282, %v4278
    %v4284 = vrot.slane %v4283, 4
    %v4286 = vshll.u32 %v4038, 16
    %v4288 = vrot.slane %v4286, 5
    %v4289 = vsel %vm4045, %v4284, %v4288
    %v4290 = vshrl.u32 %v4038, 16
    %v4292 = vrot.slane %v4290, 4
    %v4293 = vor.u32 %v4292, %v4288
    %v4294 = vrot.slane %v4293, 4
    %v4296 = vshll.u32 %v4039, 16
    %v4298 = vrot.slane %v4296, 5
    %v4299 = vsel %vm4045, %v4294, %v4298
    %v4300 = vshrl.u32 %v4039, 16
    %v4302 = vrot.slane %v4300, 4
    %v4303 = vor.u32 %v4302, %v4298
    %v4304 = vrot.slane %v4303, 4
    %v4306 = vshll.u32 %v4040, 16
    %v4308 = vrot.slane %v4306, 5
    %v4309 = vsel %vm4045, %v4304, %v4308
    %v4310 = vshrl.u32 %v4040, 16
    %v4312 = vrot.slane %v4310, 4
    %v4313 = vor.u32 %v4312, %v4308
    %v4314 = vrot.slane %v4313, 4
    %v4316 = vshll.u32 %v4041, 16
    %v4318 = vrot.slane %v4316, 5
    %v4319 = vsel %vm4045, %v4314, %v4318
    %v4320 = vshrl.u32 %v4041, 16
    %v4322 = vrot.slane %v4320, 4
    %v4323 = vor.u32 %v4322, %v4318
    %v4324 = vrot.slane %v4323, 4
    %v4326 = vshll.u32 %v4042, 16
    %v4328 = vrot.slane %v4326, 5
    %v4329 = vsel %vm4045, %v4324, %v4328
    %4330 = vrot.lane.b32.xlu0 %v4059, 64
    %v4331 = vpop.permute.xlu0 %4330
    %4332 = vrot.lane.b32.xlu0 %v4069, 64
    %v4333 = vpop.permute.xlu0 %4332
    %4334 = vrot.lane.b32.xlu0 %v4079, 64
    %v4335 = vpop.permute.xlu0 %4334
    %4336 = vrot.lane.b32.xlu0 %v4089, 64
    %v4337 = vpop.permute.xlu0 %4336
    %4338 = vrot.lane.b32.xlu0 %v4099, 64
    %v4339 = vpop.permute.xlu0 %4338
    %4340 = vrot.lane.b32.xlu0 %v4109, 64
    %v4341 = vpop.permute.xlu0 %4340
    %4342 = vrot.lane.b32.xlu0 %v4119, 64
    %v4343 = vpop.permute.xlu0 %4342
    %4344 = vrot.lane.b32.xlu0 %v4129, 64
    %v4345 = vpop.permute.xlu0 %4344
    %4346 = vrot.lane.b32.xlu0 %v4139, 64
    %v4347 = vpop.permute.xlu0 %4346
    %4348 = vrot.lane.b32.xlu0 %v4149, 64
    %v4349 = vpop.permute.xlu0 %4348
    %4350 = vrot.lane.b32.xlu0 %v4159, 64
    %v4351 = vpop.permute.xlu0 %4350
    %4352 = vrot.lane.b32.xlu0 %v4169, 64
    %v4353 = vpop.permute.xlu0 %4352
    %4354 = vrot.lane.b32.xlu0 %v4179, 64
    %v4355 = vpop.permute.xlu0 %4354
    %4356 = vrot.lane.b32.xlu0 %v4189, 64
    %v4357 = vpop.permute.xlu0 %4356
    %4358 = vrot.lane.b32.xlu0 %v4199, 64
    %v4359 = vpop.permute.xlu0 %4358
    %4360 = vrot.lane.b32.xlu0 %v4209, 64
    %v4361 = vpop.permute.xlu0 %4360
    %4362 = vrot.lane.b32.xlu0 %v4219, 64
    %v4363 = vpop.permute.xlu0 %4362
    %4364 = vrot.lane.b32.xlu0 %v4229, 64
    %v4365 = vpop.permute.xlu0 %4364
    %4366 = vrot.lane.b32.xlu0 %v4239, 64
    %v4367 = vpop.permute.xlu0 %4366
    %4368 = vrot.lane.b32.xlu0 %v4249, 64
    %v4369 = vpop.permute.xlu0 %4368
    %4370 = vrot.lane.b32.xlu0 %v4259, 64
    %v4371 = vpop.permute.xlu0 %4370
    %4372 = vrot.lane.b32.xlu0 %v4269, 64
    %v4373 = vpop.permute.xlu0 %4372
    %4374 = vrot.lane.b32.xlu0 %v4279, 64
    %v4375 = vpop.permute.xlu0 %4374
    %4376 = vrot.lane.b32.xlu0 %v4289, 64
    %v4377 = vpop.permute.xlu0 %4376
    %4378 = vrot.lane.b32.xlu0 %v4299, 64
    %v4379 = vpop.permute.xlu0 %4378
    %4380 = vrot.lane.b32.xlu0 %v4309, 64
    %v4381 = vpop.permute.xlu0 %4380
    %4382 = vrot.lane.b32.xlu0 %v4319, 64
    %v4383 = vpop.permute.xlu0 %4382
    %4384 = vrot.lane.b32.xlu0 %v4329, 64
    %v4385 = vpop.permute.xlu0 %4384
    %vm4414 = vcmask 1043968
    %4415 = vst.msk [vmem:[#allocation3] sm:$0xf] %vm4414, %v4331
    %4416 = vst.msk [vmem:[#allocation3 + $0x8] sm:$0xf] %vm4414, %v4333
    %4417 = vst.msk [vmem:[#allocation3 + $0x10] sm:$0xf] %vm4414, %v4335
    %4418 = vst.msk [vmem:[#allocation3 + $0x18] sm:$0xf] %vm4414, %v4337
    %4419 = vst.msk [vmem:[#allocation3 + $0x20] sm:$0xf] %vm4414, %v4339
    %4420 = vst.msk [vmem:[#allocation3 + $0x28] sm:$0xf] %vm4414, %v4341
    %4421 = vst.msk [vmem:[#allocation3 + $0x30] sm:$0xf] %vm4414, %v4343
    %4422 = vst.msk [vmem:[#allocation3 + $0x38] sm:$0xf] %vm4414, %v4345
    %4423 = vst.msk [vmem:[#allocation3 + $0x40] sm:$0xf] %vm4414, %v4347
    %4424 = vst.msk [vmem:[#allocation3 + $0x48] sm:$0xf] %vm4414, %v4349
    %4425 = vst.msk [vmem:[#allocation3 + $0x50] sm:$0xf] %vm4414, %v4351
    %4426 = vst.msk [vmem:[#allocation3 + $0x58] sm:$0xf] %vm4414, %v4353
    %4427 = vst.msk [vmem:[#allocation3 + $0x60] sm:$0xf] %vm4414, %v4355
    %4428 = vst.msk [vmem:[#allocation3 + $0x68] sm:$0xf] %vm4414, %v4357
    %4429 = vst.msk [vmem:[#allocation3 + $0x70] sm:$0xf] %vm4414, %v4359
    %4430 = vst.msk [vmem:[#allocation3 + $0x78] sm:$0xf] %vm4414, %v4361
    %4431 = vst.msk [vmem:[#allocation3 + $0x80] sm:$0xf] %vm4414, %v4363
    %4432 = vst.msk [vmem:[#allocation3 + $0x88] sm:$0xf] %vm4414, %v4365
    %4433 = vst.msk [vmem:[#allocation3 + $0x90] sm:$0xf] %vm4414, %v4367
    %4434 = vst.msk [vmem:[#allocation3 + $0x98] sm:$0xf] %vm4414, %v4369
    %4435 = vst.msk [vmem:[#allocation3 + $0xa0] sm:$0xf] %vm4414, %v4371
    %4436 = vst.msk [vmem:[#allocation3 + $0xa8] sm:$0xf] %vm4414, %v4373
    %4437 = vst.msk [vmem:[#allocation3 + $0xb0] sm:$0xf] %vm4414, %v4375
    %4438 = vst.msk [vmem:[#allocation3 + $0xb8] sm:$0xf] %vm4414, %v4377
    %4439 = vst.msk [vmem:[#allocation3 + $0xc0] sm:$0xf] %vm4414, %v4379
    %4440 = vst.msk [vmem:[#allocation3 + $0xc8] sm:$0xf] %vm4414, %v4381
    %4441 = vst.msk [vmem:[#allocation3 + $0xd0] sm:$0xf] %vm4414, %v4383
    %4442 = vst.msk [vmem:[#allocation3 + $0xd8] sm:$0xf] %vm4414, %v4385
    %v4443 = vld [vmem:[#allocation3] sm:$0xe]
    %v4444 = vld [vmem:[#allocation3 + $0x8] sm:$0xf]
    %v4445 = vld [vmem:[#allocation3 + $0x10] sm:$0xf]
    %v4446 = vld [vmem:[#allocation3 + $0x18] sm:$0xf]
    %v4447 = vld [vmem:[#allocation3 + $0x20] sm:$0xf]
    %v4448 = vld [vmem:[#allocation3 + $0x28] sm:$0xf]
    %v4449 = vld [vmem:[#allocation3 + $0x30] sm:$0xf]
    %v4450 = vld [vmem:[#allocation3 + $0x38] sm:$0xf]
    %v4451 = vld [vmem:[#allocation3 + $0x40] sm:$0xf]
    %v4452 = vld [vmem:[#allocation3 + $0x48] sm:$0xf]
    %v4453 = vld [vmem:[#allocation3 + $0x50] sm:$0xf]
    %v4454 = vld [vmem:[#allocation3 + $0x58] sm:$0xf]
    %v4455 = vld [vmem:[#allocation3 + $0x60] sm:$0xf]
    %v4456 = vld [vmem:[#allocation3 + $0x68] sm:$0xf]
    %v4457 = vld [vmem:[#allocation3 + $0x70] sm:$0xf]
    %v4458 = vld [vmem:[#allocation3 + $0x78] sm:$0xf]
    %v4459 = vld [vmem:[#allocation3 + $0x80] sm:$0xf]
    %v4460 = vld [vmem:[#allocation3 + $0x88] sm:$0xf]
    %v4461 = vld [vmem:[#allocation3 + $0x90] sm:$0xf]
    %v4462 = vld [vmem:[#allocation3 + $0x98] sm:$0xf]
    %v4463 = vld [vmem:[#allocation3 + $0xa0] sm:$0xf]
    %v4464 = vld [vmem:[#allocation3 + $0xa8] sm:$0xf]
    %v4465 = vld [vmem:[#allocation3 + $0xb0] sm:$0xf]
    %v4466 = vld [vmem:[#allocation3 + $0xb8] sm:$0xf]
    %v4467 = vld [vmem:[#allocation3 + $0xc0] sm:$0xf]
    %v4468 = vld [vmem:[#allocation3 + $0xc8] sm:$0xf]
    %v4469 = vld [vmem:[#allocation3 + $0xd0] sm:$0xf]
    %v4470 = vld [vmem:[#allocation3 + $0xd8] sm:$0xf]
    %v4471 = vld [vmem:[#allocation3 + $0xe0] sm:$0x1]
    %vm4501 = vcmask 1042432
    %vm4502 = vcmask 1046532
    %vm4503 = vmor %vm4501, %vm4502
    %v4504 = vrot.slane %v4443, 5
    %v4505 = vrot.slane %v4504, 4
    %v4506 = vrot.slane %v4444, 5
    %v4507 = vsel %vm4503, %v4505, %v4506
    %v4508 = vrot.slane %v4506, 4
    %v4509 = vrot.slane %v4445, 5
    %v4510 = vsel %vm4503, %v4508, %v4509
    %v4511 = vrot.slane %v4509, 4
    %v4512 = vrot.slane %v4446, 5
    %v4513 = vsel %vm4503, %v4511, %v4512
    %v4514 = vrot.slane %v4512, 4
    %v4515 = vrot.slane %v4447, 5
    %v4516 = vsel %vm4503, %v4514, %v4515
    %v4517 = vrot.slane %v4515, 4
    %v4518 = vrot.slane %v4448, 5
    %v4519 = vsel %vm4503, %v4517, %v4518
    %v4520 = vrot.slane %v4518, 4
    %v4521 = vrot.slane %v4449, 5
    %v4522 = vsel %vm4503, %v4520, %v4521
    %v4523 = vrot.slane %v4521, 4
    %v4524 = vrot.slane %v4450, 5
    %v4525 = vsel %vm4503, %v4523, %v4524
    %v4526 = vrot.slane %v4524, 4
    %v4527 = vrot.slane %v4451, 5
    %v4528 = vsel %vm4503, %v4526, %v4527
    %v4529 = vrot.slane %v4527, 4
    %v4530 = vrot.slane %v4452, 5
    %v4531 = vsel %vm4503, %v4529, %v4530
    %v4532 = vrot.slane %v4530, 4
    %v4533 = vrot.slane %v4453, 5
    %v4534 = vsel %vm4503, %v4532, %v4533
    %v4535 = vrot.slane %v4533, 4
    %v4536 = vrot.slane %v4454, 5
    %v4537 = vsel %vm4503, %v4535, %v4536
    %v4538 = vrot.slane %v4536, 4
    %v4539 = vrot.slane %v4455, 5
    %v4540 = vsel %vm4503, %v4538, %v4539
    %v4541 = vrot.slane %v4539, 4
    %v4542 = vrot.slane %v4456, 5
    %v4543 = vsel %vm4503, %v4541, %v4542
    %v4544 = vrot.slane %v4542, 4
    %v4545 = vrot.slane %v4457, 5
    %v4546 = vsel %vm4503, %v4544, %v4545
    %v4547 = vrot.slane %v4545, 4
    %v4548 = vrot.slane %v4458, 5
    %v4549 = vsel %vm4503, %v4547, %v4548
    %v4550 = vrot.slane %v4548, 4
    %v4551 = vrot.slane %v4459, 5
    %v4552 = vsel %vm4503, %v4550, %v4551
    %v4553 = vrot.slane %v4551, 4
    %v4554 = vrot.slane %v4460, 5
    %v4555 = vsel %vm4503, %v4553, %v4554
    %v4556 = vrot.slane %v4554, 4
    %v4557 = vrot.slane %v4461, 5
    %v4558 = vsel %vm4503, %v4556, %v4557
    %v4559 = vrot.slane %v4557, 4
    %v4560 = vrot.slane %v4462, 5
    %v4561 = vsel %vm4503, %v4559, %v4560
    %v4562 = vrot.slane %v4560, 4
    %v4563 = vrot.slane %v4463, 5
    %v4564 = vsel %vm4503, %v4562, %v4563
    %v4565 = vrot.slane %v4563, 4
    %v4566 = vrot.slane %v4464, 5
    %v4567 = vsel %vm4503, %v4565, %v4566
    %v4568 = vrot.slane %v4566, 4
    %v4569 = vrot.slane %v4465, 5
    %v4570 = vsel %vm4503, %v4568, %v4569
    %v4571 = vrot.slane %v4569, 4
    %v4572 = vrot.slane %v4466, 5
    %v4573 = vsel %vm4503, %v4571, %v4572
    %v4574 = vrot.slane %v4572, 4
    %v4575 = vrot.slane %v4467, 5
    %v4576 = vsel %vm4503, %v4574, %v4575
    %v4577 = vrot.slane %v4575, 4
    %v4578 = vrot.slane %v4468, 5
    %v4579 = vsel %vm4503, %v4577, %v4578
    %v4580 = vrot.slane %v4578, 4
    %v4581 = vrot.slane %v4469, 5
    %v4582 = vsel %vm4503, %v4580, %v4581
    %v4583 = vrot.slane %v4581, 4
    %v4584 = vrot.slane %v4470, 5
    %v4585 = vsel %vm4503, %v4583, %v4584
    %v4586 = vrot.slane %v4584, 4
    %v4587 = vrot.slane %v4471, 5
    %v4588 = vsel %vm4503, %v4586, %v4587
    %4617 = vst.msk [vmem:[#allocation3 + $0x4] sm:$0xf] %vm3984, %v4507
    %4618 = vst.msk [vmem:[#allocation3 + $0xc] sm:$0xf] %vm3984, %v4510
    %4619 = vst.msk [vmem:[#allocation3 + $0x14] sm:$0xf] %vm3984, %v4513
    %4620 = vst.msk [vmem:[#allocation3 + $0x1c] sm:$0xf] %vm3984, %v4516
    %4621 = vst.msk [vmem:[#allocation3 + $0x24] sm:$0xf] %vm3984, %v4519
    %4622 = vst.msk [vmem:[#allocation3 + $0x2c] sm:$0xf] %vm3984, %v4522
    %4623 = vst.msk [vmem:[#allocation3 + $0x34] sm:$0xf] %vm3984, %v4525
    %4624 = vst.msk [vmem:[#allocation3 + $0x3c] sm:$0xf] %vm3984, %v4528
    %4625 = vst.msk [vmem:[#allocation3 + $0x44] sm:$0xf] %vm3984, %v4531
    %4626 = vst.msk [vmem:[#allocation3 + $0x4c] sm:$0xf] %vm3984, %v4534
    %4627 = vst.msk [vmem:[#allocation3 + $0x54] sm:$0xf] %vm3984, %v4537
    %4628 = vst.msk [vmem:[#allocation3 + $0x5c] sm:$0xf] %vm3984, %v4540
    %4629 = vst.msk [vmem:[#allocation3 + $0x64] sm:$0xf] %vm3984, %v4543
    %4630 = vst.msk [vmem:[#allocation3 + $0x6c] sm:$0xf] %vm3984, %v4546
    %4631 = vst.msk [vmem:[#allocation3 + $0x74] sm:$0xf] %vm3984, %v4549
    %4632 = vst.msk [vmem:[#allocation3 + $0x7c] sm:$0xf] %vm3984, %v4552
    %4633 = vst.msk [vmem:[#allocation3 + $0x84] sm:$0xf] %vm3984, %v4555
    %4634 = vst.msk [vmem:[#allocation3 + $0x8c] sm:$0xf] %vm3984, %v4558
    %4635 = vst.msk [vmem:[#allocation3 + $0x94] sm:$0xf] %vm3984, %v4561
    %4636 = vst.msk [vmem:[#allocation3 + $0x9c] sm:$0xf] %vm3984, %v4564
    %4637 = vst.msk [vmem:[#allocation3 + $0xa4] sm:$0xf] %vm3984, %v4567
    %4638 = vst.msk [vmem:[#allocation3 + $0xac] sm:$0xf] %vm3984, %v4570
    %4639 = vst.msk [vmem:[#allocation3 + $0xb4] sm:$0xf] %vm3984, %v4573
    %4640 = vst.msk [vmem:[#allocation3 + $0xbc] sm:$0xf] %vm3984, %v4576
    %4641 = vst.msk [vmem:[#allocation3 + $0xc4] sm:$0xf] %vm3984, %v4579
    %4642 = vst.msk [vmem:[#allocation3 + $0xcc] sm:$0xf] %vm3984, %v4582
    %4643 = vst.msk [vmem:[#allocation3 + $0xd4] sm:$0xf] %vm3984, %v4585
    %4644 = vst.msk [vmem:[#allocation3 + $0xdc] sm:$0xf] %vm3984, %v4588
    %v4645 = vld [vmem:[%s6] sm:$0x1]
    %v4647 = vlaneseq
    %v4648 = vshrl.u32 %v4647, 7
    %v4649 = vsub.s32 0, %v4648
    %v4650 = vrot.slane %v4645, %v4649
    %v4652 = vld [vmem:[#allocation3] sm:$0xff]
    %v4653 = vld [vmem:[#allocation3 + $0x8] sm:$0xff]
    %v4654 = vld [vmem:[#allocation3 + $0x10] sm:$0xff]
    %v4655 = vld [vmem:[#allocation3 + $0x18] sm:$0xff]
    %v4656 = vld [vmem:[#allocation3 + $0x20] sm:$0xff]
    %v4657 = vld [vmem:[#allocation3 + $0x28] sm:$0xff]
    %v4658 = vld [vmem:[#allocation3 + $0x30] sm:$0xff]
    %v4659 = vld [vmem:[#allocation3 + $0x38] sm:$0xff]
    %v4660 = vld [vmem:[#allocation3 + $0x40] sm:$0xff]
    %v4661 = vld [vmem:[#allocation3 + $0x48] sm:$0xff]
    %v4662 = vld [vmem:[#allocation3 + $0x50] sm:$0xff]
    %v4663 = vld [vmem:[#allocation3 + $0x58] sm:$0xff]
    %v4664 = vld [vmem:[#allocation3 + $0x60] sm:$0xff]
    %v4665 = vld [vmem:[#allocation3 + $0x68] sm:$0xff]
    %v4666 = vld [vmem:[#allocation3 + $0x70] sm:$0xff]
    %v4667 = vld [vmem:[#allocation3 + $0x78] sm:$0xff]
    %v4668 = vld [vmem:[#allocation3 + $0x80] sm:$0xff]
    %v4669 = vld [vmem:[#allocation3 + $0x88] sm:$0xff]
    %v4670 = vld [vmem:[#allocation3 + $0x90] sm:$0xff]
    %v4671 = vld [vmem:[#allocation3 + $0x98] sm:$0xff]
    %v4672 = vld [vmem:[#allocation3 + $0xa0] sm:$0xff]
    %v4673 = vld [vmem:[#allocation3 + $0xa8] sm:$0xff]
    %v4674 = vld [vmem:[#allocation3 + $0xb0] sm:$0xff]
    %v4675 = vld [vmem:[#allocation3 + $0xb8] sm:$0xff]
    %v4676 = vld [vmem:[%s5] sm:$0xf]
    %v4677 = vld [vmem:[%s5 + $0x4] sm:$0xf]
    %v4678 = vld [vmem:[%s5 + $0x8] sm:$0xf]
    %v4679 = vld [vmem:[%s5 + $0xc] sm:$0xf]
    %v4680 = vld [vmem:[%s5 + $0x10] sm:$0xf]
    %v4681 = vld [vmem:[%s5 + $0x14] sm:$0xf]
    %v4682 = vld [vmem:[%s5 + $0x18] sm:$0xf]
    %v4683 = vld [vmem:[%s5 + $0x1c] sm:$0xf]
    %v4684 = vld [vmem:[%s5 + $0x20] sm:$0xf]
    %v4685 = vld [vmem:[%s5 + $0x24] sm:$0xf]
    %v4686 = vld [vmem:[%s5 + $0x28] sm:$0xf]
    %v4687 = vld [vmem:[%s5 + $0x2c] sm:$0xf]
    %v4688 = vld [vmem:[%s5 + $0x30] sm:$0xf]
    %v4689 = vld [vmem:[%s5 + $0x34] sm:$0xf]
    %v4690 = vld [vmem:[%s5 + $0x38] sm:$0xf]
    %v4691 = vld [vmem:[%s5 + $0x3c] sm:$0xf]
    %v4692 = vld [vmem:[%s5 + $0x40] sm:$0xf]
    %v4693 = vld [vmem:[%s5 + $0x44] sm:$0xf]
    %v4694 = vld [vmem:[%s5 + $0x48] sm:$0xf]
    %v4695 = vld [vmem:[%s5 + $0x4c] sm:$0xf]
    %v4696 = vld [vmem:[%s5 + $0x50] sm:$0xf]
    %v4697 = vld [vmem:[%s5 + $0x54] sm:$0xf]
    %v4698 = vld [vmem:[%s5 + $0x58] sm:$0xf]
    %v4699 = vld [vmem:[%s5 + $0x5c] sm:$0xf]
    %v4724 = vunpack.c.l.b16 %v4652
    %v4725 = vunpack.c.h.b16 %v4652
    %v4726 = vunpack.c.l.b16 %v4653
    %v4727 = vunpack.c.h.b16 %v4653
    %v4728 = vunpack.c.l.b16 %v4654
    %v4729 = vunpack.c.h.b16 %v4654
    %v4730 = vunpack.c.l.b16 %v4655
    %v4731 = vunpack.c.h.b16 %v4655
    %v4732 = vunpack.c.l.b16 %v4656
    %v4733 = vunpack.c.h.b16 %v4656
    %v4734 = vunpack.c.l.b16 %v4657
    %v4735 = vunpack.c.h.b16 %v4657
    %v4736 = vunpack.c.l.b16 %v4658
    %v4737 = vunpack.c.h.b16 %v4658
    %v4738 = vunpack.c.l.b16 %v4659
    %v4739 = vunpack.c.h.b16 %v4659
    %v4740 = vunpack.c.l.b16 %v4660
    %v4741 = vunpack.c.h.b16 %v4660
    %v4742 = vunpack.c.l.b16 %v4661
    %v4743 = vunpack.c.h.b16 %v4661
    %v4744 = vunpack.c.l.b16 %v4662
    %v4745 = vunpack.c.h.b16 %v4662
    %v4746 = vunpack.c.l.b16 %v4663
    %v4747 = vunpack.c.h.b16 %v4663
    %v4748 = vunpack.c.l.b16 %v4664
    %v4749 = vunpack.c.h.b16 %v4664
    %v4750 = vunpack.c.l.b16 %v4665
    %v4751 = vunpack.c.h.b16 %v4665
    %v4752 = vunpack.c.l.b16 %v4666
    %v4753 = vunpack.c.h.b16 %v4666
    %v4754 = vunpack.c.l.b16 %v4667
    %v4755 = vunpack.c.h.b16 %v4667
    %v4756 = vunpack.c.l.b16 %v4668
    %v4757 = vunpack.c.h.b16 %v4668
    %v4758 = vunpack.c.l.b16 %v4669
    %v4759 = vunpack.c.h.b16 %v4669
    %v4760 = vunpack.c.l.b16 %v4670
    %v4761 = vunpack.c.h.b16 %v4670
    %v4762 = vunpack.c.l.b16 %v4671
    %v4763 = vunpack.c.h.b16 %v4671
    %v4764 = vunpack.c.l.b16 %v4672
    %v4765 = vunpack.c.h.b16 %v4672
    %v4766 = vunpack.c.l.b16 %v4673
    %v4767 = vunpack.c.h.b16 %v4673
    %v4768 = vunpack.c.l.b16 %v4674
    %v4769 = vunpack.c.h.b16 %v4674
    %v4770 = vunpack.c.l.b16 %v4675
    %v4771 = vunpack.c.h.b16 %v4675
    %v4772 = vpack.c.b16 %v4726, %v4724
    %v4773 = vpack.c.b16 %v4727, %v4725
    %v4774 = vpack.c.b16 %v4730, %v4728
    %v4775 = vpack.c.b16 %v4731, %v4729
    %v4776 = vpack.c.b16 %v4734, %v4732
    %v4777 = vpack.c.b16 %v4735, %v4733
    %v4778 = vpack.c.b16 %v4738, %v4736
    %v4779 = vpack.c.b16 %v4739, %v4737
    %v4780 = vpack.c.b16 %v4742, %v4740
    %v4781 = vpack.c.b16 %v4743, %v4741
    %v4782 = vpack.c.b16 %v4746, %v4744
    %v4783 = vpack.c.b16 %v4747, %v4745
    %v4784 = vpack.c.b16 %v4750, %v4748
    %v4785 = vpack.c.b16 %v4751, %v4749
    %v4786 = vpack.c.b16 %v4754, %v4752
    %v4787 = vpack.c.b16 %v4755, %v4753
    %v4788 = vpack.c.b16 %v4758, %v4756
    %v4789 = vpack.c.b16 %v4759, %v4757
    %v4790 = vpack.c.b16 %v4762, %v4760
    %v4791 = vpack.c.b16 %v4763, %v4761
    %v4792 = vpack.c.b16 %v4766, %v4764
    %v4793 = vpack.c.b16 %v4767, %v4765
    %v4794 = vpack.c.b16 %v4770, %v4768
    %v4795 = vpack.c.b16 %v4771, %v4769
    %v4832 = vunpack.c.l.b16 %v4676
    %v4833 = vunpack.c.l.b16 %v4677
    %v4834 = vunpack.c.l.b16 %v4678
    %v4835 = vunpack.c.l.b16 %v4679
    %v4836 = vunpack.c.l.b16 %v4680
    %v4837 = vunpack.c.l.b16 %v4681
    %v4838 = vunpack.c.l.b16 %v4682
    %v4839 = vunpack.c.l.b16 %v4683
    %v4840 = vunpack.c.l.b16 %v4684
    %v4841 = vunpack.c.l.b16 %v4685
    %v4842 = vunpack.c.l.b16 %v4686
    %v4843 = vunpack.c.l.b16 %v4687
    %v4844 = vunpack.c.l.b16 %v4688
    %v4845 = vunpack.c.l.b16 %v4689
    %v4846 = vunpack.c.l.b16 %v4690
    %v4847 = vunpack.c.l.b16 %v4691
    %v4848 = vunpack.c.l.b16 %v4692
    %v4849 = vunpack.c.l.b16 %v4693
    %v4850 = vunpack.c.l.b16 %v4694
    %v4851 = vunpack.c.l.b16 %v4695
    %v4852 = vunpack.c.l.b16 %v4696
    %v4853 = vunpack.c.l.b16 %v4697
    %v4854 = vunpack.c.l.b16 %v4698
    %v4855 = vunpack.c.l.b16 %v4699
    %v4856 = vpack.c.b16 %v4833, %v4832
    %v4857 = vpack.c.b16 %v4835, %v4834
    %v4858 = vpack.c.b16 %v4837, %v4836
    %v4859 = vpack.c.b16 %v4839, %v4838
    %v4860 = vpack.c.b16 %v4841, %v4840
    %v4861 = vpack.c.b16 %v4843, %v4842
    %v4862 = vpack.c.b16 %v4845, %v4844
    %v4863 = vpack.c.b16 %v4847, %v4846
    %v4864 = vpack.c.b16 %v4849, %v4848
    %v4865 = vpack.c.b16 %v4851, %v4850
    %v4866 = vpack.c.b16 %v4853, %v4852
    %v4867 = vpack.c.b16 %v4855, %v4854
    %vm4880 = vcmask 523264
    %v4882 = vsel %vm4880, %v4773, 0
    %v4885 = vsel %vm4880, %v4775, 0
    %v4888 = vsel %vm4880, %v4777, 0
    %v4891 = vsel %vm4880, %v4779, 0
    %v4894 = vsel %vm4880, %v4781, 0
    %v4897 = vsel %vm4880, %v4783, 0
    %v4900 = vsel %vm4880, %v4785, 0
    %v4903 = vsel %vm4880, %v4787, 0
    %v4906 = vsel %vm4880, %v4789, 0
    %v4909 = vsel %vm4880, %v4791, 0
    %v4912 = vsel %vm4880, %v4793, 0
    %v4915 = vsel %vm4880, %v4795, 0
    %4917 = vmatprep.subr.bf16.mxu0 0
    %4918 = vmatpush1.bf16.msra.mxu0 %v4856
    %4919 = vmatprep.subr.bf16.mxu0 0
    %4920 = vmatpush1.bf16.msra.mxu0 %v4857
    %4921 = vmatprep.subr.bf16.mxu0 0
    %4922 = vmatpush1.bf16.msra.mxu0 %v4858
    %4923 = vmatprep.subr.bf16.mxu0 0
    %4924 = vmatpush1.bf16.msra.mxu0 %v4859
    %4925 = vmatprep.subr.bf16.mxu0 0
    %4926 = vmatpush1.bf16.msra.mxu0 %v4860
    %4927 = vmatprep.subr.bf16.mxu0 0
    %4928 = vmatpush1.bf16.msra.mxu0 %v4861
    %4929 = vmatprep.subr.bf16.mxu0 0
    %4930 = vmatpush1.bf16.msra.mxu0 %v4862
    %4931 = vmatprep.subr.bf16.mxu0 0
    %4932 = vmatpush1.bf16.msra.mxu0 %v4863
    %4933 = vmatprep.subr.bf16.mxu0 0
    %4934 = vmatpush1.bf16.msra.mxu0 %v4864
    %4935 = vmatprep.subr.bf16.mxu0 0
    %4936 = vmatpush1.bf16.msra.mxu0 %v4865
    %4937 = vmatprep.subr.bf16.mxu0 0
    %4938 = vmatpush1.bf16.msra.mxu0 %v4866
    %4939 = vmatprep.subr.bf16.mxu0 0
    %4940 = vmatpush1.bf16.msra.mxu0 %v4867
    %4941 = vmatprep.subr.bf16.mxu0 0
    %4942 = vmatpush1.bf16.msra.mxu0 0
    %4943 = vmatprep.subr.bf16.mxu0 0
    %4944 = vmatpush1.bf16.msra.mxu0 0
    %4945 = vmatprep.subr.bf16.mxu0 0
    %4946 = vmatpush1.bf16.msra.mxu0 0
    %4947 = vmatprep.subr.bf16.mxu0 0
    %4948 = vmatpush1.bf16.msra.mxu0 0
    %4949 = vmatprep.mubr.bf16.mxu0 %v4882
    %4950 = vmatmul.mubr.bf16.gmra.mrb[0].mxu0 %v4772
    %v4951 = vpop.f32.mrb[0].mxu0
    %v4952 = vadd.f32 0.0, %v4951
    %v4953 = vpop.f32.mrb[0].mxu0
    %v4954 = vpop.f32.mrb[0].mxu0
    %v4955 = vadd.f32 0.0, %v4954
    %v4956 = vpop.f32.mrb[0].mxu0
    %4957 = vmatprep.mubr.bf16.mxu0 %v4885
    %4958 = vmatmul.mubr.bf16.gmra.mrb[0].mxu0 %v4774
    %v4959 = vpop.f32.mrb[0].mxu0
    %v4960 = vadd.f32 0.0, %v4959
    %v4961 = vpop.f32.mrb[0].mxu0
    %v4962 = vpop.f32.mrb[0].mxu0
    %v4963 = vadd.f32 0.0, %v4962
    %v4964 = vpop.f32.mrb[0].mxu0
    %4965 = vmatprep.mubr.bf16.mxu0 %v4888
    %4966 = vmatmul.mubr.bf16.gmra.mrb[0].mxu0 %v4776
    %v4967 = vpop.f32.mrb[0].mxu0
    %v4968 = vadd.f32 0.0, %v4967
    %v4969 = vpop.f32.mrb[0].mxu0
    %v4970 = vpop.f32.mrb[0].mxu0
    %v4971 = vadd.f32 0.0, %v4970
    %v4972 = vpop.f32.mrb[0].mxu0
    %4973 = vmatprep.mubr.bf16.mxu0 %v4891
    %4974 = vmatmul.mubr.bf16.gmra.mrb[0].mxu0 %v4778
    %v4975 = vpop.f32.mrb[0].mxu0
    %v4976 = vadd.f32 0.0, %v4975
    %v4977 = vpop.f32.mrb[0].mxu0
    %v4978 = vpop.f32.mrb[0].mxu0
    %v4979 = vadd.f32 0.0, %v4978
    %v4980 = vpop.f32.mrb[0].mxu0
    %4981 = vmatprep.mubr.bf16.mxu0 %v4894
    %4982 = vmatmul.mubr.bf16.gmra.mrb[0].mxu0 %v4780
    %v4983 = vpop.f32.mrb[0].mxu0
    %v4984 = vadd.f32 0.0, %v4983
    %v4985 = vpop.f32.mrb[0].mxu0
    %v4986 = vpop.f32.mrb[0].mxu0
    %v4987 = vadd.f32 0.0, %v4986
    %v4988 = vpop.f32.mrb[0].mxu0
    %4989 = vmatprep.mubr.bf16.mxu0 %v4897
    %4990 = vmatmul.mubr.bf16.gmra.mrb[0].mxu0 %v4782
    %v4991 = vpop.f32.mrb[0].mxu0
    %v4992 = vadd.f32 0.0, %v4991
    %v4993 = vpop.f32.mrb[0].mxu0
    %v4994 = vpop.f32.mrb[0].mxu0
    %v4995 = vadd.f32 0.0, %v4994
    %v4996 = vpop.f32.mrb[0].mxu0
    %4997 = vmatprep.mubr.bf16.mxu0 %v4900
    %4998 = vmatmul.mubr.bf16.gmra.mrb[0].mxu0 %v4784
    %v4999 = vpop.f32.mrb[0].mxu0
    %v5000 = vadd.f32 0.0, %v4999
    %v5001 = vpop.f32.mrb[0].mxu0
    %v5002 = vpop.f32.mrb[0].mxu0
    %v5003 = vadd.f32 0.0, %v5002
    %v5004 = vpop.f32.mrb[0].mxu0
    %5005 = vmatprep.mubr.bf16.mxu0 %v4903
    %5006 = vmatmul.mubr.bf16.gmra.mrb[0].mxu0 %v4786
    %v5007 = vpop.f32.mrb[0].mxu0
    %v5008 = vadd.f32 0.0, %v5007
    %v5009 = vpop.f32.mrb[0].mxu0
    %v5010 = vpop.f32.mrb[0].mxu0
    %v5011 = vadd.f32 0.0, %v5010
    %v5012 = vpop.f32.mrb[0].mxu0
    %5013 = vmatprep.mubr.bf16.mxu0 %v4906
    %5014 = vmatmul.mubr.bf16.gmra.mrb[0].mxu0 %v4788
    %v5015 = vpop.f32.mrb[0].mxu0
    %v5016 = vadd.f32 0.0, %v5015
    %v5017 = vpop.f32.mrb[0].mxu0
    %v5018 = vpop.f32.mrb[0].mxu0
    %v5019 = vadd.f32 0.0, %v5018
    %v5020 = vpop.f32.mrb[0].mxu0
    %5021 = vmatprep.mubr.bf16.mxu0 %v4909
    %5022 = vmatmul.mubr.bf16.gmra.mrb[0].mxu0 %v4790
    %v5023 = vpop.f32.mrb[0].mxu0
    %v5024 = vadd.f32 0.0, %v5023
    %v5025 = vpop.f32.mrb[0].mxu0
    %v5026 = vpop.f32.mrb[0].mxu0
    %v5027 = vadd.f32 0.0, %v5026
    %v5028 = vpop.f32.mrb[0].mxu0
    %5029 = vmatprep.mubr.bf16.mxu0 %v4912
    %5030 = vmatmul.mubr.bf16.gmra.mrb[0].mxu0 %v4792
    %v5031 = vpop.f32.mrb[0].mxu0
    %v5032 = vadd.f32 0.0, %v5031
    %v5033 = vpop.f32.mrb[0].mxu0
    %v5034 = vpop.f32.mrb[0].mxu0
    %v5035 = vadd.f32 0.0, %v5034
    %v5036 = vpop.f32.mrb[0].mxu0
    %5037 = vmatprep.mubr.bf16.mxu0 %v4915
    %5038 = vmatmul.mubr.bf16.gmra.mrb[0].mxu0 %v4794
    %v5039 = vpop.f32.mrb[0].mxu0
    %v5040 = vadd.f32 0.0, %v5039
    %v5041 = vpop.f32.mrb[0].mxu0
    %v5042 = vpop.f32.mrb[0].mxu0
    %v5043 = vadd.f32 0.0, %v5042
    %v5044 = vpop.f32.mrb[0].mxu0
    %5045 = vdwg.mxu0
    %v5046 = vadd.f32 %v4650, %v4952
    %v5047 = vadd.f32 %v4650, %v4955
    %v5048 = vadd.f32 %v4650, %v4960
    %v5049 = vadd.f32 %v4650, %v4963
    %v5050 = vadd.f32 %v4650, %v4968
    %v5051 = vadd.f32 %v4650, %v4971
    %v5052 = vadd.f32 %v4650, %v4976
    %v5053 = vadd.f32 %v4650, %v4979
    %v5054 = vadd.f32 %v4650, %v4984
    %v5055 = vadd.f32 %v4650, %v4987
    %v5056 = vadd.f32 %v4650, %v4992
    %v5057 = vadd.f32 %v4650, %v4995
    %v5058 = vadd.f32 %v4650, %v5000
    %v5059 = vadd.f32 %v4650, %v5003
    %v5060 = vadd.f32 %v4650, %v5008
    %v5061 = vadd.f32 %v4650, %v5011
    %v5062 = vadd.f32 %v4650, %v5016
    %v5063 = vadd.f32 %v4650, %v5019
    %v5064 = vadd.f32 %v4650, %v5024
    %v5065 = vadd.f32 %v4650, %v5027
    %v5066 = vadd.f32 %v4650, %v5032
    %v5067 = vadd.f32 %v4650, %v5035
    %v5068 = vadd.f32 %v4650, %v5040
    %v5069 = vadd.f32 %v4650, %v5043
    %v5070 = vld [vmem:[#allocation3 + $0x10] sm:$0xff]
    %v5071 = vld [vmem:[#allocation3 + $0x18] sm:$0xff]
    %v5072 = vld [vmem:[#allocation3 + $0x20] sm:$0xff]
    %v5073 = vld [vmem:[#allocation3 + $0x28] sm:$0xff]
    %v5074 = vld [vmem:[#allocation3 + $0x30] sm:$0xff]
    %v5075 = vld [vmem:[#allocation3 + $0x38] sm:$0xff]
    %v5076 = vld [vmem:[#allocation3 + $0x40] sm:$0xff]
    %v5077 = vld [vmem:[#allocation3 + $0x48] sm:$0xff]
    %v5078 = vld [vmem:[#allocation3 + $0x50] sm:$0xff]
    %v5079 = vld [vmem:[#allocation3 + $0x58] sm:$0xff]
    %v5080 = vld [vmem:[#allocation3 + $0x60] sm:$0xff]
    %v5081 = vld [vmem:[#allocation3 + $0x68] sm:$0xff]
    %v5082 = vld [vmem:[#allocation3 + $0x70] sm:$0xff]
    %v5083 = vld [vmem:[#allocation3 + $0x78] sm:$0xff]
    %v5084 = vld [vmem:[#allocation3 + $0x80] sm:$0xff]
    %v5085 = vld [vmem:[#allocation3 + $0x88] sm:$0xff]
    %v5086 = vld [vmem:[#allocation3 + $0x90] sm:$0xff]
    %v5087 = vld [vmem:[#allocation3 + $0x98] sm:$0xff]
    %v5088 = vld [vmem:[#allocation3 + $0xa0] sm:$0xff]
    %v5089 = vld [vmem:[#allocation3 + $0xa8] sm:$0xff]
    %v5090 = vld [vmem:[#allocation3 + $0xb0] sm:$0xff]
    %v5091 = vld [vmem:[#allocation3 + $0xb8] sm:$0xff]
    %v5092 = vld [vmem:[#allocation3 + $0xc0] sm:$0xff]
    %v5093 = vld [vmem:[#allocation3 + $0xc8] sm:$0xff]
    %s5094 = scalar_lea.vmem %s5, 96
    %v5095 = vld [vmem:[%s5094] sm:$0xf]
    %v5096 = vld [vmem:[%s5094 + $0x4] sm:$0xf]
    %v5097 = vld [vmem:[%s5094 + $0x8] sm:$0xf]
    %v5098 = vld [vmem:[%s5094 + $0xc] sm:$0xf]
    %v5099 = vld [vmem:[%s5094 + $0x10] sm:$0xf]
    %v5100 = vld [vmem:[%s5094 + $0x14] sm:$0xf]
    %v5101 = vld [vmem:[%s5094 + $0x18] sm:$0xf]
    %v5102 = vld [vmem:[%s5094 + $0x1c] sm:$0xf]
    %v5103 = vld [vmem:[%s5094 + $0x20] sm:$0xf]
    %v5104 = vld [vmem:[%s5094 + $0x24] sm:$0xf]
    %v5105 = vld [vmem:[%s5094 + $0x28] sm:$0xf]
    %v5106 = vld [vmem:[%s5094 + $0x2c] sm:$0xf]
    %v5107 = vld [vmem:[%s5094 + $0x30] sm:$0xf]
    %v5108 = vld [vmem:[%s5094 + $0x34] sm:$0xf]
    %v5109 = vld [vmem:[%s5094 + $0x38] sm:$0xf]
    %v5110 = vld [vmem:[%s5094 + $0x3c] sm:$0xf]
    %v5111 = vld [vmem:[%s5094 + $0x40] sm:$0xf]
    %v5112 = vld [vmem:[%s5094 + $0x44] sm:$0xf]
    %v5113 = vld [vmem:[%s5094 + $0x48] sm:$0xf]
    %v5114 = vld [vmem:[%s5094 + $0x4c] sm:$0xf]
    %v5115 = vld [vmem:[%s5094 + $0x50] sm:$0xf]
    %v5116 = vld [vmem:[%s5094 + $0x54] sm:$0xf]
    %v5117 = vld [vmem:[%s5094 + $0x58] sm:$0xf]
    %v5118 = vld [vmem:[%s5094 + $0x5c] sm:$0xf]
    %v5143 = vunpack.c.l.b16 %v5070
    %v5144 = vunpack.c.h.b16 %v5070
    %v5145 = vunpack.c.l.b16 %v5071
    %v5146 = vunpack.c.h.b16 %v5071
    %v5147 = vunpack.c.l.b16 %v5072
    %v5148 = vunpack.c.h.b16 %v5072
    %v5149 = vunpack.c.l.b16 %v5073
    %v5150 = vunpack.c.h.b16 %v5073
    %v5151 = vunpack.c.l.b16 %v5074
    %v5152 = vunpack.c.h.b16 %v5074
    %v5153 = vunpack.c.l.b16 %v5075
    %v5154 = vunpack.c.h.b16 %v5075
    %v5155 = vunpack.c.l.b16 %v5076
    %v5156 = vunpack.c.h.b16 %v5076
    %v5157 = vunpack.c.l.b16 %v5077
    %v5158 = vunpack.c.h.b16 %v5077
    %v5159 = vunpack.c.l.b16 %v5078
    %v5160 = vunpack.c.h.b16 %v5078
    %v5161 = vunpack.c.l.b16 %v5079
    %v5162 = vunpack.c.h.b16 %v5079
    %v5163 = vunpack.c.l.b16 %v5080
    %v5164 = vunpack.c.h.b16 %v5080
    %v5165 = vunpack.c.l.b16 %v5081
    %v5166 = vunpack.c.h.b16 %v5081
    %v5167 = vunpack.c.l.b16 %v5082
    %v5168 = vunpack.c.h.b16 %v5082
    %v5169 = vunpack.c.l.b16 %v5083
    %v5170 = vunpack.c.h.b16 %v5083
    %v5171 = vunpack.c.l.b16 %v5084
    %v5172 = vunpack.c.h.b16 %v5084
    %v5173 = vunpack.c.l.b16 %v5085
    %v5174 = vunpack.c.h.b16 %v5085
    %v5175 = vunpack.c.l.b16 %v5086
    %v5176 = vunpack.c.h.b16 %v5086
    %v5177 = vunpack.c.l.b16 %v5087
    %v5178 = vunpack.c.h.b16 %v5087
    %v5179 = vunpack.c.l.b16 %v5088
    %v5180 = vunpack.c.h.b16 %v5088
    %v5181 = vunpack.c.l.b16 %v5089
    %v5182 = vunpack.c.h.b16 %v5089
    %v5183 = vunpack.c.l.b16 %v5090
    %v5184 = vunpack.c.h.b16 %v5090
    %v5185 = vunpack.c.l.b16 %v5091
    %v5186 = vunpack.c.h.b16 %v5091
    %v5187 = vunpack.c.l.b16 %v5092
    %v5188 = vunpack.c.h.b16 %v5092
    %v5189 = vunpack.c.l.b16 %v5093
    %v5190 = vunpack.c.h.b16 %v5093
    %v5191 = vpack.c.b16 %v5145, %v5143
    %v5192 = vpack.c.b16 %v5146, %v5144
    %v5193 = vpack.c.b16 %v5149, %v5147
    %v5194 = vpack.c.b16 %v5150, %v5148
    %v5195 = vpack.c.b16 %v5153, %v5151
    %v5196 = vpack.c.b16 %v5154, %v5152
    %v5197 = vpack.c.b16 %v5157, %v5155
    %v5198 = vpack.c.b16 %v5158, %v5156
    %v5199 = vpack.c.b16 %v5161, %v5159
    %v5200 = vpack.c.b16 %v5162, %v5160
    %v5201 = vpack.c.b16 %v5165, %v5163
    %v5202 = vpack.c.b16 %v5166, %v5164
    %v5203 = vpack.c.b16 %v5169, %v5167
    %v5204 = vpack.c.b16 %v5170, %v5168
    %v5205 = vpack.c.b16 %v5173, %v5171
    %v5206 = vpack.c.b16 %v5174, %v5172
    %v5207 = vpack.c.b16 %v5177, %v5175
    %v5208 = vpack.c.b16 %v5178, %v5176
    %v5209 = vpack.c.b16 %v5181, %v5179
    %v5210 = vpack.c.b16 %v5182, %v5180
    %v5211 = vpack.c.b16 %v5185, %v5183
    %v5212 = vpack.c.b16 %v5186, %v5184
    %v5213 = vpack.c.b16 %v5189, %v5187
    %v5214 = vpack.c.b16 %v5190, %v5188
    %v5251 = vunpack.c.l.b16 %v5095
    %v5252 = vunpack.c.l.b16 %v5096
    %v5253 = vunpack.c.l.b16 %v5097
    %v5254 = vunpack.c.l.b16 %v5098
    %v5255 = vunpack.c.l.b16 %v5099
    %v5256 = vunpack.c.l.b16 %v5100
    %v5257 = vunpack.c.l.b16 %v5101
    %v5258 = vunpack.c.l.b16 %v5102
    %v5259 = vunpack.c.l.b16 %v5103
    %v5260 = vunpack.c.l.b16 %v5104
    %v5261 = vunpack.c.l.b16 %v5105
    %v5262 = vunpack.c.l.b16 %v5106
    %v5263 = vunpack.c.l.b16 %v5107
    %v5264 = vunpack.c.l.b16 %v5108
    %v5265 = vunpack.c.l.b16 %v5109
    %v5266 = vunpack.c.l.b16 %v5110
    %v5267 = vunpack.c.l.b16 %v5111
    %v5268 = vunpack.c.l.b16 %v5112
    %v5269 = vunpack.c.l.b16 %v5113
    %v5270 = vunpack.c.l.b16 %v5114
    %v5271 = vunpack.c.l.b16 %v5115
    %v5272 = vunpack.c.l.b16 %v5116
    %v5273 = vunpack.c.l.b16 %v5117
    %v5274 = vunpack.c.l.b16 %v5118
    %v5275 = vpack.c.b16 %v5252, %v5251
    %v5276 = vpack.c.b16 %v5254, %v5253
    %v5277 = vpack.c.b16 %v5256, %v5255
    %v5278 = vpack.c.b16 %v5258, %v5257
    %v5279 = vpack.c.b16 %v5260, %v5259
    %v5280 = vpack.c.b16 %v5262, %v5261
    %v5281 = vpack.c.b16 %v5264, %v5263
    %v5282 = vpack.c.b16 %v5266, %v5265
    %v5283 = vpack.c.b16 %v5268, %v5267
    %v5284 = vpack.c.b16 %v5270, %v5269
    %v5285 = vpack.c.b16 %v5272, %v5271
    %v5286 = vpack.c.b16 %v5274, %v5273
    %v5300 = vsel %vm4880, %v5192, 0
    %v5303 = vsel %vm4880, %v5194, 0
    %v5306 = vsel %vm4880, %v5196, 0
    %v5309 = vsel %vm4880, %v5198, 0
    %v5312 = vsel %vm4880, %v5200, 0
    %v5315 = vsel %vm4880, %v5202, 0
    %v5318 = vsel %vm4880, %v5204, 0
    %v5321 = vsel %vm4880, %v5206, 0
    %v5324 = vsel %vm4880, %v5208, 0
    %v5327 = vsel %vm4880, %v5210, 0
    %v5330 = vsel %vm4880, %v5212, 0
    %v5333 = vsel %vm4880, %v5214, 0
    %5335 = vmatprep.subr.bf16.mxu0 0
    %5336 = vmatpush1.bf16.msra.mxu0 %v5275
    %5337 = vmatprep.subr.bf16.mxu0 0
    %5338 = vmatpush1.bf16.msra.mxu0 %v5276
    %5339 = vmatprep.subr.bf16.mxu0 0
    %5340 = vmatpush1.bf16.msra.mxu0 %v5277
    %5341 = vmatprep.subr.bf16.mxu0 0
    %5342 = vmatpush1.bf16.msra.mxu0 %v5278
    %5343 = vmatprep.subr.bf16.mxu0 0
    %5344 = vmatpush1.bf16.msra.mxu0 %v5279
    %5345 = vmatprep.subr.bf16.mxu0 0
    %5346 = vmatpush1.bf16.msra.mxu0 %v5280
    %5347 = vmatprep.subr.bf16.mxu0 0
    %5348 = vmatpush1.bf16.msra.mxu0 %v5281
    %5349 = vmatprep.subr.bf16.mxu0 0
    %5350 = vmatpush1.bf16.msra.mxu0 %v5282
    %5351 = vmatprep.subr.bf16.mxu0 0
    %5352 = vmatpush1.bf16.msra.mxu0 %v5283
    %5353 = vmatprep.subr.bf16.mxu0 0
    %5354 = vmatpush1.bf16.msra.mxu0 %v5284
    %5355 = vmatprep.subr.bf16.mxu0 0
    %5356 = vmatpush1.bf16.msra.mxu0 %v5285
    %5357 = vmatprep.subr.bf16.mxu0 0
    %5358 = vmatpush1.bf16.msra.mxu0 %v5286
    %5359 = vmatprep.subr.bf16.mxu0 0
    %5360 = vmatpush1.bf16.msra.mxu0 0
    %5361 = vmatprep.subr.bf16.mxu0 0
    %5362 = vmatpush1.bf16.msra.mxu0 0
    %5363 = vmatprep.subr.bf16.mxu0 0
    %5364 = vmatpush1.bf16.msra.mxu0 0
    %5365 = vmatprep.subr.bf16.mxu0 0
    %5366 = vmatpush1.bf16.msra.mxu0 0
    %5367 = vmatprep.mubr.bf16.mxu0 %v5300
    %5368 = vmatmul.mubr.bf16.gmra.mrb[0].mxu0 %v5191
    %v5369 = vpop.f32.mrb[0].mxu0
    %v5370 = vadd.f32 0.0, %v5369
    %v5371 = vpop.f32.mrb[0].mxu0
    %v5372 = vpop.f32.mrb[0].mxu0
    %v5373 = vadd.f32 0.0, %v5372
    %v5374 = vpop.f32.mrb[0].mxu0
    %5375 = vmatprep.mubr.bf16.mxu0 %v5303
    %5376 = vmatmul.mubr.bf16.gmra.mrb[0].mxu0 %v5193
    %v5377 = vpop.f32.mrb[0].mxu0
    %v5378 = vadd.f32 0.0, %v5377
    %v5379 = vpop.f32.mrb[0].mxu0
    %v5380 = vpop.f32.mrb[0].mxu0
    %v5381 = vadd.f32 0.0, %v5380
    %v5382 = vpop.f32.mrb[0].mxu0
    %5383 = vmatprep.mubr.bf16.mxu0 %v5306
    %5384 = vmatmul.mubr.bf16.gmra.mrb[0].mxu0 %v5195
    %v5385 = vpop.f32.mrb[0].mxu0
    %v5386 = vadd.f32 0.0, %v5385
    %v5387 = vpop.f32.mrb[0].mxu0
    %v5388 = vpop.f32.mrb[0].mxu0
    %v5389 = vadd.f32 0.0, %v5388
    %v5390 = vpop.f32.mrb[0].mxu0
    %5391 = vmatprep.mubr.bf16.mxu0 %v5309
    %5392 = vmatmul.mubr.bf16.gmra.mrb[0].mxu0 %v5197
    %v5393 = vpop.f32.mrb[0].mxu0
    %v5394 = vadd.f32 0.0, %v5393
    %v5395 = vpop.f32.mrb[0].mxu0
    %v5396 = vpop.f32.mrb[0].mxu0
    %v5397 = vadd.f32 0.0, %v5396
    %v5398 = vpop.f32.mrb[0].mxu0
    %5399 = vmatprep.mubr.bf16.mxu0 %v5312
    %5400 = vmatmul.mubr.bf16.gmra.mrb[0].mxu0 %v5199
    %v5401 = vpop.f32.mrb[0].mxu0
    %v5402 = vadd.f32 0.0, %v5401
    %v5403 = vpop.f32.mrb[0].mxu0
    %v5404 = vpop.f32.mrb[0].mxu0
    %v5405 = vadd.f32 0.0, %v5404
    %v5406 = vpop.f32.mrb[0].mxu0
    %5407 = vmatprep.mubr.bf16.mxu0 %v5315
    %5408 = vmatmul.mubr.bf16.gmra.mrb[0].mxu0 %v5201
    %v5409 = vpop.f32.mrb[0].mxu0
    %v5410 = vadd.f32 0.0, %v5409
    %v5411 = vpop.f32.mrb[0].mxu0
    %v5412 = vpop.f32.mrb[0].mxu0
    %v5413 = vadd.f32 0.0, %v5412
    %v5414 = vpop.f32.mrb[0].mxu0
    %5415 = vmatprep.mubr.bf16.mxu0 %v5318
    %5416 = vmatmul.mubr.bf16.gmra.mrb[0].mxu0 %v5203
    %v5417 = vpop.f32.mrb[0].mxu0
    %v5418 = vadd.f32 0.0, %v5417
    %v5419 = vpop.f32.mrb[0].mxu0
    %v5420 = vpop.f32.mrb[0].mxu0
    %v5421 = vadd.f32 0.0, %v5420
    %v5422 = vpop.f32.mrb[0].mxu0
    %5423 = vmatprep.mubr.bf16.mxu0 %v5321
    %5424 = vmatmul.mubr.bf16.gmra.mrb[0].mxu0 %v5205
    %v5425 = vpop.f32.mrb[0].mxu0
    %v5426 = vadd.f32 0.0, %v5425
    %v5427 = vpop.f32.mrb[0].mxu0
    %v5428 = vpop.f32.mrb[0].mxu0
    %v5429 = vadd.f32 0.0, %v5428
    %v5430 = vpop.f32.mrb[0].mxu0
    %5431 = vmatprep.mubr.bf16.mxu0 %v5324
    %5432 = vmatmul.mubr.bf16.gmra.mrb[0].mxu0 %v5207
    %v5433 = vpop.f32.mrb[0].mxu0
    %v5434 = vadd.f32 0.0, %v5433
    %v5435 = vpop.f32.mrb[0].mxu0
    %v5436 = vpop.f32.mrb[0].mxu0
    %v5437 = vadd.f32 0.0, %v5436
    %v5438 = vpop.f32.mrb[0].mxu0
    %5439 = vmatprep.mubr.bf16.mxu0 %v5327
    %5440 = vmatmul.mubr.bf16.gmra.mrb[0].mxu0 %v5209
    %v5441 = vpop.f32.mrb[0].mxu0
    %v5442 = vadd.f32 0.0, %v5441
    %v5443 = vpop.f32.mrb[0].mxu0
    %v5444 = vpop.f32.mrb[0].mxu0
    %v5445 = vadd.f32 0.0, %v5444
    %v5446 = vpop.f32.mrb[0].mxu0
    %5447 = vmatprep.mubr.bf16.mxu0 %v5330
    %5448 = vmatmul.mubr.bf16.gmra.mrb[0].mxu0 %v5211
    %v5449 = vpop.f32.mrb[0].mxu0
    %v5450 = vadd.f32 0.0, %v5449
    %v5451 = vpop.f32.mrb[0].mxu0
    %v5452 = vpop.f32.mrb[0].mxu0
    %v5453 = vadd.f32 0.0, %v5452
    %v5454 = vpop.f32.mrb[0].mxu0
    %5455 = vmatprep.mubr.bf16.mxu0 %v5333
    %5456 = vmatmul.mubr.bf16.gmra.mrb[0].mxu0 %v5213
    %v5457 = vpop.f32.mrb[0].mxu0
    %v5458 = vadd.f32 0.0, %v5457
    %v5459 = vpop.f32.mrb[0].mxu0
    %v5460 = vpop.f32.mrb[0].mxu0
    %v5461 = vadd.f32 0.0, %v5460
    %v5462 = vpop.f32.mrb[0].mxu0
    %5463 = vdwg.mxu0
    %v5464 = vadd.f32 %v5046, %v5370
    %v5465 = vadd.f32 %v5047, %v5373
    %v5466 = vadd.f32 %v5048, %v5378
    %v5467 = vadd.f32 %v5049, %v5381
    %v5468 = vadd.f32 %v5050, %v5386
    %v5469 = vadd.f32 %v5051, %v5389
    %v5470 = vadd.f32 %v5052, %v5394
    %v5471 = vadd.f32 %v5053, %v5397
    %v5472 = vadd.f32 %v5054, %v5402
    %v5473 = vadd.f32 %v5055, %v5405
    %v5474 = vadd.f32 %v5056, %v5410
    %v5475 = vadd.f32 %v5057, %v5413
    %v5476 = vadd.f32 %v5058, %v5418
    %v5477 = vadd.f32 %v5059, %v5421
    %v5478 = vadd.f32 %v5060, %v5426
    %v5479 = vadd.f32 %v5061, %v5429
    %v5480 = vadd.f32 %v5062, %v5434
    %v5481 = vadd.f32 %v5063, %v5437
    %v5482 = vadd.f32 %v5064, %v5442
    %v5483 = vadd.f32 %v5065, %v5445
    %v5484 = vadd.f32 %v5066, %v5450
    %v5485 = vadd.f32 %v5067, %v5453
    %v5486 = vadd.f32 %v5068, %v5458
    %v5487 = vadd.f32 %v5069, %v5461
    %v5488 = vld [vmem:[#allocation3 + $0x20] sm:$0xff]
    %v5489 = vld [vmem:[#allocation3 + $0x28] sm:$0xff]
    %v5490 = vld [vmem:[#allocation3 + $0x30] sm:$0xff]
    %v5491 = vld [vmem:[#allocation3 + $0x38] sm:$0xff]
    %v5492 = vld [vmem:[#allocation3 + $0x40] sm:$0xff]
    %v5493 = vld [vmem:[#allocation3 + $0x48] sm:$0xff]
    %v5494 = vld [vmem:[#allocation3 + $0x50] sm:$0xff]
    %v5495 = vld [vmem:[#allocation3 + $0x58] sm:$0xff]
    %v5496 = vld [vmem:[#allocation3 + $0x60] sm:$0xff]
    %v5497 = vld [vmem:[#allocation3 + $0x68] sm:$0xff]
    %v5498 = vld [vmem:[#allocation3 + $0x70] sm:$0xff]
    %v5499 = vld [vmem:[#allocation3 + $0x78] sm:$0xff]
    %v5500 = vld [vmem:[#allocation3 + $0x80] sm:$0xff]
    %v5501 = vld [vmem:[#allocation3 + $0x88] sm:$0xff]
    %v5502 = vld [vmem:[#allocation3 + $0x90] sm:$0xff]
    %v5503 = vld [vmem:[#allocation3 + $0x98] sm:$0xff]
    %v5504 = vld [vmem:[#allocation3 + $0xa0] sm:$0xff]
    %v5505 = vld [vmem:[#allocation3 + $0xa8] sm:$0xff]
    %v5506 = vld [vmem:[#allocation3 + $0xb0] sm:$0xff]
    %v5507 = vld [vmem:[#allocation3 + $0xb8] sm:$0xff]
    %v5508 = vld [vmem:[#allocation3 + $0xc0] sm:$0xff]
    %v5509 = vld [vmem:[#allocation3 + $0xc8] sm:$0xff]
    %v5510 = vld [vmem:[#allocation3 + $0xd0] sm:$0xff]
    %v5511 = vld [vmem:[#allocation3 + $0xd8] sm:$0xff]
    %s5512 = scalar_lea.vmem %s5, 192
    %v5513 = vld [vmem:[%s5512] sm:$0xf]
    %v5514 = vld [vmem:[%s5512 + $0x4] sm:$0xf]
    %v5515 = vld [vmem:[%s5512 + $0x8] sm:$0xf]
    %v5516 = vld [vmem:[%s5512 + $0xc] sm:$0xf]
    %v5517 = vld [vmem:[%s5512 + $0x10] sm:$0xf]
    %v5518 = vld [vmem:[%s5512 + $0x14] sm:$0xf]
    %v5519 = vld [vmem:[%s5512 + $0x18] sm:$0xf]
    %v5520 = vld [vmem:[%s5512 + $0x1c] sm:$0xf]
    %v5521 = vld [vmem:[%s5512 + $0x20] sm:$0xf]
    %v5522 = vld [vmem:[%s5512 + $0x24] sm:$0xf]
    %v5523 = vld [vmem:[%s5512 + $0x28] sm:$0xf]
    %v5524 = vld [vmem:[%s5512 + $0x2c] sm:$0xf]
    %v5525 = vld [vmem:[%s5512 + $0x30] sm:$0xf]
    %v5526 = vld [vmem:[%s5512 + $0x34] sm:$0xf]
    %v5527 = vld [vmem:[%s5512 + $0x38] sm:$0xf]
    %v5528 = vld [vmem:[%s5512 + $0x3c] sm:$0xf]
    %v5529 = vld [vmem:[%s5512 + $0x40] sm:$0xf]
    %v5530 = vld [vmem:[%s5512 + $0x44] sm:$0xf]
    %v5531 = vld [vmem:[%s5512 + $0x48] sm:$0xf]
    %v5532 = vld [vmem:[%s5512 + $0x4c] sm:$0xf]
    %v5533 = vld [vmem:[%s5512 + $0x50] sm:$0xf]
    %v5534 = vld [vmem:[%s5512 + $0x54] sm:$0xf]
    %v5535 = vld [vmem:[%s5512 + $0x58] sm:$0xf]
    %v5536 = vld [vmem:[%s5512 + $0x5c] sm:$0xf]
    %v5561 = vunpack.c.l.b16 %v5488
    %v5562 = vunpack.c.h.b16 %v5488
    %v5563 = vunpack.c.l.b16 %v5489
    %v5564 = vunpack.c.h.b16 %v5489
    %v5565 = vunpack.c.l.b16 %v5490
    %v5566 = vunpack.c.h.b16 %v5490
    %v5567 = vunpack.c.l.b16 %v5491
    %v5568 = vunpack.c.h.b16 %v5491
    %v5569 = vunpack.c.l.b16 %v5492
    %v5570 = vunpack.c.h.b16 %v5492
    %v5571 = vunpack.c.l.b16 %v5493
    %v5572 = vunpack.c.h.b16 %v5493
    %v5573 = vunpack.c.l.b16 %v5494
    %v5574 = vunpack.c.h.b16 %v5494
    %v5575 = vunpack.c.l.b16 %v5495
    %v5576 = vunpack.c.h.b16 %v5495
    %v5577 = vunpack.c.l.b16 %v5496
    %v5578 = vunpack.c.h.b16 %v5496
    %v5579 = vunpack.c.l.b16 %v5497
    %v5580 = vunpack.c.h.b16 %v5497
    %v5581 = vunpack.c.l.b16 %v5498
    %v5582 = vunpack.c.h.b16 %v5498
    %v5583 = vunpack.c.l.b16 %v5499
    %v5584 = vunpack.c.h.b16 %v5499
    %v5585 = vunpack.c.l.b16 %v5500
    %v5586 = vunpack.c.h.b16 %v5500
    %v5587 = vunpack.c.l.b16 %v5501
    %v5588 = vunpack.c.h.b16 %v5501
    %v5589 = vunpack.c.l.b16 %v5502
    %v5590 = vunpack.c.h.b16 %v5502
    %v5591 = vunpack.c.l.b16 %v5503
    %v5592 = vunpack.c.h.b16 %v5503
    %v5593 = vunpack.c.l.b16 %v5504
    %v5594 = vunpack.c.h.b16 %v5504
    %v5595 = vunpack.c.l.b16 %v5505
    %v5596 = vunpack.c.h.b16 %v5505
    %v5597 = vunpack.c.l.b16 %v5506
    %v5598 = vunpack.c.h.b16 %v5506
    %v5599 = vunpack.c.l.b16 %v5507
    %v5600 = vunpack.c.h.b16 %v5507
    %v5601 = vunpack.c.l.b16 %v5508
    %v5602 = vunpack.c.h.b16 %v5508
    %v5603 = vunpack.c.l.b16 %v5509
    %v5604 = vunpack.c.h.b16 %v5509
    %v5605 = vunpack.c.l.b16 %v5510
    %v5606 = vunpack.c.h.b16 %v5510
    %v5607 = vunpack.c.l.b16 %v5511
    %v5608 = vunpack.c.h.b16 %v5511
    %v5609 = vpack.c.b16 %v5563, %v5561
    %v5610 = vpack.c.b16 %v5564, %v5562
    %v5611 = vpack.c.b16 %v5567, %v5565
    %v5612 = vpack.c.b16 %v5568, %v5566
    %v5613 = vpack.c.b16 %v5571, %v5569
    %v5614 = vpack.c.b16 %v5572, %v5570
    %v5615 = vpack.c.b16 %v5575, %v5573
    %v5616 = vpack.c.b16 %v5576, %v5574
    %v5617 = vpack.c.b16 %v5579, %v5577
    %v5618 = vpack.c.b16 %v5580, %v5578
    %v5619 = vpack.c.b16 %v5583, %v5581
    %v5620 = vpack.c.b16 %v5584, %v5582
    %v5621 = vpack.c.b16 %v5587, %v5585
    %v5622 = vpack.c.b16 %v5588, %v5586
    %v5623 = vpack.c.b16 %v5591, %v5589
    %v5624 = vpack.c.b16 %v5592, %v5590
    %v5625 = vpack.c.b16 %v5595, %v5593
    %v5626 = vpack.c.b16 %v5596, %v5594
    %v5627 = vpack.c.b16 %v5599, %v5597
    %v5628 = vpack.c.b16 %v5600, %v5598
    %v5629 = vpack.c.b16 %v5603, %v5601
    %v5630 = vpack.c.b16 %v5604, %v5602
    %v5631 = vpack.c.b16 %v5607, %v5605
    %v5632 = vpack.c.b16 %v5608, %v5606
    %v5669 = vunpack.c.l.b16 %v5513
    %v5670 = vunpack.c.l.b16 %v5514
    %v5671 = vunpack.c.l.b16 %v5515
    %v5672 = vunpack.c.l.b16 %v5516
    %v5673 = vunpack.c.l.b16 %v5517
    %v5674 = vunpack.c.l.b16 %v5518
    %v5675 = vunpack.c.l.b16 %v5519
    %v5676 = vunpack.c.l.b16 %v5520
    %v5677 = vunpack.c.l.b16 %v5521
    %v5678 = vunpack.c.l.b16 %v5522
    %v5679 = vunpack.c.l.b16 %v5523
    %v5680 = vunpack.c.l.b16 %v5524
    %v5681 = vunpack.c.l.b16 %v5525
    %v5682 = vunpack.c.l.b16 %v5526
    %v5683 = vunpack.c.l.b16 %v5527
    %v5684 = vunpack.c.l.b16 %v5528
    %v5685 = vunpack.c.l.b16 %v5529
    %v5686 = vunpack.c.l.b16 %v5530
    %v5687 = vunpack.c.l.b16 %v5531
    %v5688 = vunpack.c.l.b16 %v5532
    %v5689 = vunpack.c.l.b16 %v5533
    %v5690 = vunpack.c.l.b16 %v5534
    %v5691 = vunpack.c.l.b16 %v5535
    %v5692 = vunpack.c.l.b16 %v5536
    %v5693 = vpack.c.b16 %v5670, %v5669
    %v5694 = vpack.c.b16 %v5672, %v5671
    %v5695 = vpack.c.b16 %v5674, %v5673
    %v5696 = vpack.c.b16 %v5676, %v5675
    %v5697 = vpack.c.b16 %v5678, %v5677
    %v5698 = vpack.c.b16 %v5680, %v5679
    %v5699 = vpack.c.b16 %v5682, %v5681
    %v5700 = vpack.c.b16 %v5684, %v5683
    %v5701 = vpack.c.b16 %v5686, %v5685
    %v5702 = vpack.c.b16 %v5688, %v5687
    %v5703 = vpack.c.b16 %v5690, %v5689
    %v5704 = vpack.c.b16 %v5692, %v5691
    %v5718 = vsel %vm4880, %v5610, 0
    %v5721 = vsel %vm4880, %v5612, 0
    %v5724 = vsel %vm4880, %v5614, 0
    %v5727 = vsel %vm4880, %v5616, 0
    %v5730 = vsel %vm4880, %v5618, 0
    %v5733 = vsel %vm4880, %v5620, 0
    %v5736 = vsel %vm4880, %v5622, 0
    %v5739 = vsel %vm4880, %v5624, 0
    %v5742 = vsel %vm4880, %v5626, 0
    %v5745 = vsel %vm4880, %v5628, 0
    %v5748 = vsel %vm4880, %v5630, 0
    %v5751 = vsel %vm4880, %v5632, 0
    %5753 = vmatprep.subr.bf16.mxu0 0
    %5754 = vmatpush1.bf16.msra.mxu0 %v5693
    %5755 = vmatprep.subr.bf16.mxu0 0
    %5756 = vmatpush1.bf16.msra.mxu0 %v5694
    %5757 = vmatprep.subr.bf16.mxu0 0
    %5758 = vmatpush1.bf16.msra.mxu0 %v5695
    %5759 = vmatprep.subr.bf16.mxu0 0
    %5760 = vmatpush1.bf16.msra.mxu0 %v5696
    %5761 = vmatprep.subr.bf16.mxu0 0
    %5762 = vmatpush1.bf16.msra.mxu0 %v5697
    %5763 = vmatprep.subr.bf16.mxu0 0
    %5764 = vmatpush1.bf16.msra.mxu0 %v5698
    %5765 = vmatprep.subr.bf16.mxu0 0
    %5766 = vmatpush1.bf16.msra.mxu0 %v5699
    %5767 = vmatprep.subr.bf16.mxu0 0
    %5768 = vmatpush1.bf16.msra.mxu0 %v5700
    %5769 = vmatprep.subr.bf16.mxu0 0
    %5770 = vmatpush1.bf16.msra.mxu0 %v5701
    %5771 = vmatprep.subr.bf16.mxu0 0
    %5772 = vmatpush1.bf16.msra.mxu0 %v5702
    %5773 = vmatprep.subr.bf16.mxu0 0
    %5774 = vmatpush1.bf16.msra.mxu0 %v5703
    %5775 = vmatprep.subr.bf16.mxu0 0
    %5776 = vmatpush1.bf16.msra.mxu0 %v5704
    %5777 = vmatprep.subr.bf16.mxu0 0
    %5778 = vmatpush1.bf16.msra.mxu0 0
    %5779 = vmatprep.subr.bf16.mxu0 0
    %5780 = vmatpush1.bf16.msra.mxu0 0
    %5781 = vmatprep.subr.bf16.mxu0 0
    %5782 = vmatpush1.bf16.msra.mxu0 0
    %5783 = vmatprep.subr.bf16.mxu0 0
    %5784 = vmatpush1.bf16.msra.mxu0 0
    %5785 = vmatprep.mubr.bf16.mxu0 %v5718
    %5786 = vmatmul.mubr.bf16.gmra.mrb[0].mxu0 %v5609
    %v5787 = vpop.f32.mrb[0].mxu0
    %v5788 = vadd.f32 0.0, %v5787
    %v5789 = vpop.f32.mrb[0].mxu0
    %v5790 = vpop.f32.mrb[0].mxu0
    %v5791 = vadd.f32 0.0, %v5790
    %v5792 = vpop.f32.mrb[0].mxu0
    %5793 = vmatprep.mubr.bf16.mxu0 %v5721
    %5794 = vmatmul.mubr.bf16.gmra.mrb[0].mxu0 %v5611
    %v5795 = vpop.f32.mrb[0].mxu0
    %v5796 = vadd.f32 0.0, %v5795
    %v5797 = vpop.f32.mrb[0].mxu0
    %v5798 = vpop.f32.mrb[0].mxu0
    %v5799 = vadd.f32 0.0, %v5798
    %v5800 = vpop.f32.mrb[0].mxu0
    %5801 = vmatprep.mubr.bf16.mxu0 %v5724
    %5802 = vmatmul.mubr.bf16.gmra.mrb[0].mxu0 %v5613
    %v5803 = vpop.f32.mrb[0].mxu0
    %v5804 = vadd.f32 0.0, %v5803
    %v5805 = vpop.f32.mrb[0].mxu0
    %v5806 = vpop.f32.mrb[0].mxu0
    %v5807 = vadd.f32 0.0, %v5806
    %v5808 = vpop.f32.mrb[0].mxu0
    %5809 = vmatprep.mubr.bf16.mxu0 %v5727
    %5810 = vmatmul.mubr.bf16.gmra.mrb[0].mxu0 %v5615
    %v5811 = vpop.f32.mrb[0].mxu0
    %v5812 = vadd.f32 0.0, %v5811
    %v5813 = vpop.f32.mrb[0].mxu0
    %v5814 = vpop.f32.mrb[0].mxu0
    %v5815 = vadd.f32 0.0, %v5814
    %v5816 = vpop.f32.mrb[0].mxu0
    %5817 = vmatprep.mubr.bf16.mxu0 %v5730
    %5818 = vmatmul.mubr.bf16.gmra.mrb[0].mxu0 %v5617
    %v5819 = vpop.f32.mrb[0].mxu0
    %v5820 = vadd.f32 0.0, %v5819
    %v5821 = vpop.f32.mrb[0].mxu0
    %v5822 = vpop.f32.mrb[0].mxu0
    %v5823 = vadd.f32 0.0, %v5822
    %v5824 = vpop.f32.mrb[0].mxu0
    %5825 = vmatprep.mubr.bf16.mxu0 %v5733
    %5826 = vmatmul.mubr.bf16.gmra.mrb[0].mxu0 %v5619
    %v5827 = vpop.f32.mrb[0].mxu0
    %v5828 = vadd.f32 0.0, %v5827
    %v5829 = vpop.f32.mrb[0].mxu0
    %v5830 = vpop.f32.mrb[0].mxu0
    %v5831 = vadd.f32 0.0, %v5830
    %v5832 = vpop.f32.mrb[0].mxu0
    %5833 = vmatprep.mubr.bf16.mxu0 %v5736
    %5834 = vmatmul.mubr.bf16.gmra.mrb[0].mxu0 %v5621
    %v5835 = vpop.f32.mrb[0].mxu0
    %v5836 = vadd.f32 0.0, %v5835
    %v5837 = vpop.f32.mrb[0].mxu0
    %v5838 = vpop.f32.mrb[0].mxu0
    %v5839 = vadd.f32 0.0, %v5838
    %v5840 = vpop.f32.mrb[0].mxu0
    %5841 = vmatprep.mubr.bf16.mxu0 %v5739
    %5842 = vmatmul.mubr.bf16.gmra.mrb[0].mxu0 %v5623
    %v5843 = vpop.f32.mrb[0].mxu0
    %v5844 = vadd.f32 0.0, %v5843
    %v5845 = vpop.f32.mrb[0].mxu0
    %v5846 = vpop.f32.mrb[0].mxu0
    %v5847 = vadd.f32 0.0, %v5846
    %v5848 = vpop.f32.mrb[0].mxu0
    %5849 = vmatprep.mubr.bf16.mxu0 %v5742
    %5850 = vmatmul.mubr.bf16.gmra.mrb[0].mxu0 %v5625
    %v5851 = vpop.f32.mrb[0].mxu0
    %v5852 = vadd.f32 0.0, %v5851
    %v5853 = vpop.f32.mrb[0].mxu0
    %v5854 = vpop.f32.mrb[0].mxu0
    %v5855 = vadd.f32 0.0, %v5854
    %v5856 = vpop.f32.mrb[0].mxu0
    %5857 = vmatprep.mubr.bf16.mxu0 %v5745
    %5858 = vmatmul.mubr.bf16.gmra.mrb[0].mxu0 %v5627
    %v5859 = vpop.f32.mrb[0].mxu0
    %v5860 = vadd.f32 0.0, %v5859
    %v5861 = vpop.f32.mrb[0].mxu0
    %v5862 = vpop.f32.mrb[0].mxu0
    %v5863 = vadd.f32 0.0, %v5862
    %v5864 = vpop.f32.mrb[0].mxu0
    %5865 = vmatprep.mubr.bf16.mxu0 %v5748
    %5866 = vmatmul.mubr.bf16.gmra.mrb[0].mxu0 %v5629
    %v5867 = vpop.f32.mrb[0].mxu0
    %v5868 = vadd.f32 0.0, %v5867
    %v5869 = vpop.f32.mrb[0].mxu0
    %v5870 = vpop.f32.mrb[0].mxu0
    %v5871 = vadd.f32 0.0, %v5870
    %v5872 = vpop.f32.mrb[0].mxu0
    %5873 = vmatprep.mubr.bf16.mxu0 %v5751
    %5874 = vmatmul.mubr.bf16.gmra.mrb[0].mxu0 %v5631
    %v5875 = vpop.f32.mrb[0].mxu0
    %v5876 = vadd.f32 0.0, %v5875
    %v5877 = vpop.f32.mrb[0].mxu0
    %v5878 = vpop.f32.mrb[0].mxu0
    %v5879 = vadd.f32 0.0, %v5878
    %v5880 = vpop.f32.mrb[0].mxu0
    %5881 = vdwg.mxu0
    %v5882 = vadd.f32 %v5464, %v5788
    %v5883 = vadd.f32 %v5465, %v5791
    %v5884 = vadd.f32 %v5466, %v5796
    %v5885 = vadd.f32 %v5467, %v5799
    %v5886 = vadd.f32 %v5468, %v5804
    %v5887 = vadd.f32 %v5469, %v5807
    %v5888 = vadd.f32 %v5470, %v5812
    %v5889 = vadd.f32 %v5471, %v5815
    %v5890 = vadd.f32 %v5472, %v5820
    %v5891 = vadd.f32 %v5473, %v5823
    %v5892 = vadd.f32 %v5474, %v5828
    %v5893 = vadd.f32 %v5475, %v5831
    %v5894 = vadd.f32 %v5476, %v5836
    %v5895 = vadd.f32 %v5477, %v5839
    %v5896 = vadd.f32 %v5478, %v5844
    %v5897 = vadd.f32 %v5479, %v5847
    %v5898 = vadd.f32 %v5480, %v5852
    %v5899 = vadd.f32 %v5481, %v5855
    %v5900 = vadd.f32 %v5482, %v5860
    %v5901 = vadd.f32 %v5483, %v5863
    %v5902 = vadd.f32 %v5484, %v5868
    %v5903 = vadd.f32 %v5485, %v5871
    %v5904 = vadd.f32 %v5486, %v5876
    %v5905 = vadd.f32 %v5487, %v5879
    %v5906 = vmax.f32 %v5882, 0.0
    %v5907 = vmax.f32 %v5883, 0.0
    %v5908 = vmax.f32 %v5884, 0.0
    %v5909 = vmax.f32 %v5885, 0.0
    %v5910 = vmax.f32 %v5886, 0.0
    %v5911 = vmax.f32 %v5887, 0.0
    %v5912 = vmax.f32 %v5888, 0.0
    %v5913 = vmax.f32 %v5889, 0.0
    %v5914 = vmax.f32 %v5890, 0.0
    %v5915 = vmax.f32 %v5891, 0.0
    %v5916 = vmax.f32 %v5892, 0.0
    %v5917 = vmax.f32 %v5893, 0.0
    %v5918 = vmax.f32 %v5894, 0.0
    %v5919 = vmax.f32 %v5895, 0.0
    %v5920 = vmax.f32 %v5896, 0.0
    %v5921 = vmax.f32 %v5897, 0.0
    %v5922 = vmax.f32 %v5898, 0.0
    %v5923 = vmax.f32 %v5899, 0.0
    %v5924 = vmax.f32 %v5900, 0.0
    %v5925 = vmax.f32 %v5901, 0.0
    %v5926 = vmax.f32 %v5902, 0.0
    %v5927 = vmax.f32 %v5903, 0.0
    %v5928 = vmax.f32 %v5904, 0.0
    %v5929 = vmax.f32 %v5905, 0.0
    %v5930 = vld [vmem:[%s8] sm:$0x1]
    %v5931 = vlaneseq
    %v5932 = vand.u32 %v5931, 127
    %v5933 = vld [vmem:[%s7] sm:$0xf]
    %v5934 = vld [vmem:[%s7 + $0x4] sm:$0xf]
    %v5935 = vld [vmem:[%s7 + $0x8] sm:$0xf]
    %v5936 = vld [vmem:[%s7 + $0xc] sm:$0xf]
    %v5937 = vld [vmem:[%s7 + $0x10] sm:$0xf]
    %v5938 = vld [vmem:[%s7 + $0x14] sm:$0xf]
    %v5939 = vld [vmem:[%s7 + $0x18] sm:$0xf]
    %v5940 = vld [vmem:[%s7 + $0x1c] sm:$0xf]
    %v5941 = vld [vmem:[%s7 + $0x20] sm:$0xf]
    %v5942 = vld [vmem:[%s7 + $0x24] sm:$0xf]
    %v5943 = vld [vmem:[%s7 + $0x28] sm:$0xf]
    %v5944 = vld [vmem:[%s7 + $0x2c] sm:$0xf]
    %v5945 = vld [vmem:[%s7 + $0x30] sm:$0xf]
    %v5946 = vld [vmem:[%s7 + $0x34] sm:$0xf]
    %v5947 = vld [vmem:[%s7 + $0x38] sm:$0xf]
    %v5948 = vld [vmem:[%s7 + $0x3c] sm:$0xf]
    %v5949 = vld [vmem:[%s7 + $0x40] sm:$0xf]
    %v5950 = vld [vmem:[%s7 + $0x44] sm:$0xf]
    %v5951 = vld [vmem:[%s7 + $0x48] sm:$0xf]
    %v5952 = vld [vmem:[%s7 + $0x4c] sm:$0xf]
    %v5953 = vld [vmem:[%s7 + $0x50] sm:$0xf]
    %v5954 = vld [vmem:[%s7 + $0x54] sm:$0xf]
    %v5955 = vld [vmem:[%s7 + $0x58] sm:$0xf]
    %v5956 = vld [vmem:[%s7 + $0x5c] sm:$0xf]
    %v5957 = vunpack.c.l.bf16 %v5933
    %v5958 = vunpack.c.l.bf16 %v5934
    %v5959 = vunpack.c.l.bf16 %v5935
    %v5960 = vunpack.c.l.bf16 %v5936
    %v5961 = vunpack.c.l.bf16 %v5937
    %v5962 = vunpack.c.l.bf16 %v5938
    %v5963 = vunpack.c.l.bf16 %v5939
    %v5964 = vunpack.c.l.bf16 %v5940
    %v5965 = vunpack.c.l.bf16 %v5941
    %v5966 = vunpack.c.l.bf16 %v5942
    %v5967 = vunpack.c.l.bf16 %v5943
    %v5968 = vunpack.c.l.bf16 %v5944
    %v5969 = vunpack.c.l.bf16 %v5945
    %v5970 = vunpack.c.l.bf16 %v5946
    %v5971 = vunpack.c.l.bf16 %v5947
    %v5972 = vunpack.c.l.bf16 %v5948
    %v5973 = vunpack.c.l.bf16 %v5949
    %v5974 = vunpack.c.l.bf16 %v5950
    %v5975 = vunpack.c.l.bf16 %v5951
    %v5976 = vunpack.c.l.bf16 %v5952
    %v5977 = vunpack.c.l.bf16 %v5953
    %v5978 = vunpack.c.l.bf16 %v5954
    %v5979 = vunpack.c.l.bf16 %v5955
    %v5980 = vunpack.c.l.bf16 %v5956
    %v5981 = vmul.f32 %v5906, %v5957
    %v5982 = vmul.f32 %v5907, %v5958
    %v5983 = vmul.f32 %v5908, %v5959
    %v5984 = vmul.f32 %v5909, %v5960
    %v5985 = vmul.f32 %v5910, %v5961
    %v5986 = vmul.f32 %v5911, %v5962
    %v5987 = vmul.f32 %v5912, %v5963
    %v5988 = vmul.f32 %v5913, %v5964
    %v5989 = vmul.f32 %v5914, %v5965
    %v5990 = vmul.f32 %v5915, %v5966
    %v5991 = vmul.f32 %v5916, %v5967
    %v5992 = vmul.f32 %v5917, %v5968
    %v5993 = vmul.f32 %v5918, %v5969
    %v5994 = vmul.f32 %v5919, %v5970
    %v5995 = vmul.f32 %v5920, %v5971
    %v5996 = vmul.f32 %v5921, %v5972
    %v5997 = vmul.f32 %v5922, %v5973
    %v5998 = vmul.f32 %v5923, %v5974
    %v5999 = vmul.f32 %v5924, %v5975
    %v6000 = vmul.f32 %v5925, %v5976
    %v6001 = vmul.f32 %v5926, %v5977
    %v6002 = vmul.f32 %v5927, %v5978
    %v6003 = vmul.f32 %v5928, %v5979
    %v6004 = vmul.f32 %v5929, %v5980
    %v6005 = vsel %vm4880, %v5981, 0.0
    %v6006 = vsel %vm4880, %v5982, 0.0
    %v6007 = vadd.f32 %v6005, %v6006
    %v6008 = vsel %vm4880, %v5983, 0.0
    %v6009 = vadd.f32 %v6007, %v6008
    %v6010 = vsel %vm4880, %v5984, 0.0
    %v6011 = vadd.f32 %v6009, %v6010
    %v6012 = vsel %vm4880, %v5985, 0.0
    %v6013 = vadd.f32 %v6011, %v6012
    %v6014 = vsel %vm4880, %v5986, 0.0
    %v6015 = vadd.f32 %v6013, %v6014
    %v6016 = vsel %vm4880, %v5987, 0.0
    %v6017 = vadd.f32 %v6015, %v6016
    %v6018 = vsel %vm4880, %v5988, 0.0
    %v6019 = vadd.f32 %v6017, %v6018
    %v6020 = vsel %vm4880, %v5989, 0.0
    %v6021 = vadd.f32 %v6019, %v6020
    %v6022 = vsel %vm4880, %v5990, 0.0
    %v6023 = vadd.f32 %v6021, %v6022
    %v6024 = vsel %vm4880, %v5991, 0.0
    %v6025 = vadd.f32 %v6023, %v6024
    %v6026 = vsel %vm4880, %v5992, 0.0
    %v6027 = vadd.f32 %v6025, %v6026
    %v6028 = vsel %vm4880, %v5993, 0.0
    %v6029 = vadd.f32 %v6027, %v6028
    %v6030 = vsel %vm4880, %v5994, 0.0
    %v6031 = vadd.f32 %v6029, %v6030
    %v6032 = vsel %vm4880, %v5995, 0.0
    %v6033 = vadd.f32 %v6031, %v6032
    %v6034 = vsel %vm4880, %v5996, 0.0
    %v6035 = vadd.f32 %v6033, %v6034
    %v6036 = vsel %vm4880, %v5997, 0.0
    %v6037 = vadd.f32 %v6035, %v6036
    %v6038 = vsel %vm4880, %v5998, 0.0
    %v6039 = vadd.f32 %v6037, %v6038
    %v6040 = vsel %vm4880, %v5999, 0.0
    %v6041 = vadd.f32 %v6039, %v6040
    %v6042 = vsel %vm4880, %v6000, 0.0
    %v6043 = vadd.f32 %v6041, %v6042
    %v6044 = vsel %vm4880, %v6001, 0.0
    %v6045 = vadd.f32 %v6043, %v6044
    %v6046 = vsel %vm4880, %v6002, 0.0
    %v6047 = vadd.f32 %v6045, %v6046
    %v6048 = vsel %vm4880, %v6003, 0.0
    %v6049 = vadd.f32 %v6047, %v6048
    %v6050 = vsel %vm4880, %v6004, 0.0
    %v6051 = vadd.f32 %v6049, %v6050
    %6052 = vadd.xlane.f32.xlu0 %v6051
    %v6053 = vpop.xlane.xlu0 %6052
    %v6054 = vrot.slane %v6053, 4
    %v6055 = vadd.f32 %v6053, %v6054
    %v6056 = vrot.slane %v6055, 2
    %v6057 = vadd.f32 %v6055, %v6056
    %v6058 = vrot.slane %v6057, 1
    %v6059 = vadd.f32 %v6057, %v6058
    %s6060 = vtos %v6059
    %vm6061 = vcmp.eq.s32.totalorder %v5932, 0
    %v6062 = vstv %s6060
    %v6063 = vsel %vm6061, %v6062, 0.0
    %v6064 = vadd.f32 %v5930, %v6063
    %s6065 = scalar_lea.vmem %s7, 96
    %v6066 = vld [vmem:[%s6065] sm:$0xf]
    %v6067 = vld [vmem:[%s6065 + $0x4] sm:$0xf]
    %v6068 = vld [vmem:[%s6065 + $0x8] sm:$0xf]
    %v6069 = vld [vmem:[%s6065 + $0xc] sm:$0xf]
    %v6070 = vld [vmem:[%s6065 + $0x10] sm:$0xf]
    %v6071 = vld [vmem:[%s6065 + $0x14] sm:$0xf]
    %v6072 = vld [vmem:[%s6065 + $0x18] sm:$0xf]
    %v6073 = vld [vmem:[%s6065 + $0x1c] sm:$0xf]
    %v6074 = vld [vmem:[%s6065 + $0x20] sm:$0xf]
    %v6075 = vld [vmem:[%s6065 + $0x24] sm:$0xf]
    %v6076 = vld [vmem:[%s6065 + $0x28] sm:$0xf]
    %v6077 = vld [vmem:[%s6065 + $0x2c] sm:$0xf]
    %v6078 = vld [vmem:[%s6065 + $0x30] sm:$0xf]
    %v6079 = vld [vmem:[%s6065 + $0x34] sm:$0xf]
    %v6080 = vld [vmem:[%s6065 + $0x38] sm:$0xf]
    %v6081 = vld [vmem:[%s6065 + $0x3c] sm:$0xf]
    %v6082 = vld [vmem:[%s6065 + $0x40] sm:$0xf]
    %v6083 = vld [vmem:[%s6065 + $0x44] sm:$0xf]
    %v6084 = vld [vmem:[%s6065 + $0x48] sm:$0xf]
    %v6085 = vld [vmem:[%s6065 + $0x4c] sm:$0xf]
    %v6086 = vld [vmem:[%s6065 + $0x50] sm:$0xf]
    %v6087 = vld [vmem:[%s6065 + $0x54] sm:$0xf]
    %v6088 = vld [vmem:[%s6065 + $0x58] sm:$0xf]
    %v6089 = vld [vmem:[%s6065 + $0x5c] sm:$0xf]
    %v6090 = vunpack.c.l.bf16 %v6066
    %v6091 = vunpack.c.l.bf16 %v6067
    %v6092 = vunpack.c.l.bf16 %v6068
    %v6093 = vunpack.c.l.bf16 %v6069
    %v6094 = vunpack.c.l.bf16 %v6070
    %v6095 = vunpack.c.l.bf16 %v6071
    %v6096 = vunpack.c.l.bf16 %v6072
    %v6097 = vunpack.c.l.bf16 %v6073
    %v6098 = vunpack.c.l.bf16 %v6074
    %v6099 = vunpack.c.l.bf16 %v6075
    %v6100 = vunpack.c.l.bf16 %v6076
    %v6101 = vunpack.c.l.bf16 %v6077
    %v6102 = vunpack.c.l.bf16 %v6078
    %v6103 = vunpack.c.l.bf16 %v6079
    %v6104 = vunpack.c.l.bf16 %v6080
    %v6105 = vunpack.c.l.bf16 %v6081
    %v6106 = vunpack.c.l.bf16 %v6082
    %v6107 = vunpack.c.l.bf16 %v6083
    %v6108 = vunpack.c.l.bf16 %v6084
    %v6109 = vunpack.c.l.bf16 %v6085
    %v6110 = vunpack.c.l.bf16 %v6086
    %v6111 = vunpack.c.l.bf16 %v6087
    %v6112 = vunpack.c.l.bf16 %v6088
    %v6113 = vunpack.c.l.bf16 %v6089
    %v6114 = vmul.f32 %v5906, %v6090
    %v6115 = vmul.f32 %v5907, %v6091
    %v6116 = vmul.f32 %v5908, %v6092
    %v6117 = vmul.f32 %v5909, %v6093
    %v6118 = vmul.f32 %v5910, %v6094
    %v6119 = vmul.f32 %v5911, %v6095
    %v6120 = vmul.f32 %v5912, %v6096
    %v6121 = vmul.f32 %v5913, %v6097
    %v6122 = vmul.f32 %v5914, %v6098
    %v6123 = vmul.f32 %v5915, %v6099
    %v6124 = vmul.f32 %v5916, %v6100
    %v6125 = vmul.f32 %v5917, %v6101
    %v6126 = vmul.f32 %v5918, %v6102
    %v6127 = vmul.f32 %v5919, %v6103
    %v6128 = vmul.f32 %v5920, %v6104
    %v6129 = vmul.f32 %v5921, %v6105
    %v6130 = vmul.f32 %v5922, %v6106
    %v6131 = vmul.f32 %v5923, %v6107
    %v6132 = vmul.f32 %v5924, %v6108
    %v6133 = vmul.f32 %v5925, %v6109
    %v6134 = vmul.f32 %v5926, %v6110
    %v6135 = vmul.f32 %v5927, %v6111
    %v6136 = vmul.f32 %v5928, %v6112
    %v6137 = vmul.f32 %v5929, %v6113
    %v6138 = vsel %vm4880, %v6114, 0.0
    %v6139 = vsel %vm4880, %v6115, 0.0
    %v6140 = vadd.f32 %v6138, %v6139
    %v6141 = vsel %vm4880, %v6116, 0.0
    %v6142 = vadd.f32 %v6140, %v6141
    %v6143 = vsel %vm4880, %v6117, 0.0
    %v6144 = vadd.f32 %v6142, %v6143
    %v6145 = vsel %vm4880, %v6118, 0.0
    %v6146 = vadd.f32 %v6144, %v6145
    %v6147 = vsel %vm4880, %v6119, 0.0
    %v6148 = vadd.f32 %v6146, %v6147
    %v6149 = vsel %vm4880, %v6120, 0.0
    %v6150 = vadd.f32 %v6148, %v6149
    %v6151 = vsel %vm4880, %v6121, 0.0
    %v6152 = vadd.f32 %v6150, %v6151
    %v6153 = vsel %vm4880, %v6122, 0.0
    %v6154 = vadd.f32 %v6152, %v6153
    %v6155 = vsel %vm4880, %v6123, 0.0
    %v6156 = vadd.f32 %v6154, %v6155
    %v6157 = vsel %vm4880, %v6124, 0.0
    %v6158 = vadd.f32 %v6156, %v6157
    %v6159 = vsel %vm4880, %v6125, 0.0
    %v6160 = vadd.f32 %v6158, %v6159
    %v6161 = vsel %vm4880, %v6126, 0.0
    %v6162 = vadd.f32 %v6160, %v6161
    %v6163 = vsel %vm4880, %v6127, 0.0
    %v6164 = vadd.f32 %v6162, %v6163
    %v6165 = vsel %vm4880, %v6128, 0.0
    %v6166 = vadd.f32 %v6164, %v6165
    %v6167 = vsel %vm4880, %v6129, 0.0
    %v6168 = vadd.f32 %v6166, %v6167
    %v6169 = vsel %vm4880, %v6130, 0.0
    %v6170 = vadd.f32 %v6168, %v6169
    %v6171 = vsel %vm4880, %v6131, 0.0
    %v6172 = vadd.f32 %v6170, %v6171
    %v6173 = vsel %vm4880, %v6132, 0.0
    %v6174 = vadd.f32 %v6172, %v6173
    %v6175 = vsel %vm4880, %v6133, 0.0
    %v6176 = vadd.f32 %v6174, %v6175
    %v6177 = vsel %vm4880, %v6134, 0.0
    %v6178 = vadd.f32 %v6176, %v6177
    %v6179 = vsel %vm4880, %v6135, 0.0
    %v6180 = vadd.f32 %v6178, %v6179
    %v6181 = vsel %vm4880, %v6136, 0.0
    %v6182 = vadd.f32 %v6180, %v6181
    %v6183 = vsel %vm4880, %v6137, 0.0
    %v6184 = vadd.f32 %v6182, %v6183
    %6185 = vadd.xlane.f32.xlu0 %v6184
    %v6186 = vpop.xlane.xlu0 %6185
    %v6187 = vrot.slane %v6186, 4
    %v6188 = vadd.f32 %v6186, %v6187
    %v6189 = vrot.slane %v6188, 2
    %v6190 = vadd.f32 %v6188, %v6189
    %v6191 = vrot.slane %v6190, 1
    %v6192 = vadd.f32 %v6190, %v6191
    %s6193 = vtos %v6192
    %vm6194 = vcmp.eq.s32.totalorder %v5932, 1
    %v6195 = vstv %s6193
    %v6196 = vsel %vm6194, %v6195, 0.0
    %v6197 = vadd.f32 %v6064, %v6196
    %s6198 = scalar_lea.vmem %s7, 192
    %v6199 = vld [vmem:[%s6198] sm:$0xf]
    %v6200 = vld [vmem:[%s6198 + $0x4] sm:$0xf]
    %v6201 = vld [vmem:[%s6198 + $0x8] sm:$0xf]
    %v6202 = vld [vmem:[%s6198 + $0xc] sm:$0xf]
    %v6203 = vld [vmem:[%s6198 + $0x10] sm:$0xf]
    %v6204 = vld [vmem:[%s6198 + $0x14] sm:$0xf]
    %v6205 = vld [vmem:[%s6198 + $0x18] sm:$0xf]
    %v6206 = vld [vmem:[%s6198 + $0x1c] sm:$0xf]
    %v6207 = vld [vmem:[%s6198 + $0x20] sm:$0xf]
    %v6208 = vld [vmem:[%s6198 + $0x24] sm:$0xf]
    %v6209 = vld [vmem:[%s6198 + $0x28] sm:$0xf]
    %v6210 = vld [vmem:[%s6198 + $0x2c] sm:$0xf]
    %v6211 = vld [vmem:[%s6198 + $0x30] sm:$0xf]
    %v6212 = vld [vmem:[%s6198 + $0x34] sm:$0xf]
    %v6213 = vld [vmem:[%s6198 + $0x38] sm:$0xf]
    %v6214 = vld [vmem:[%s6198 + $0x3c] sm:$0xf]
    %v6215 = vld [vmem:[%s6198 + $0x40] sm:$0xf]
    %v6216 = vld [vmem:[%s6198 + $0x44] sm:$0xf]
    %v6217 = vld [vmem:[%s6198 + $0x48] sm:$0xf]
    %v6218 = vld [vmem:[%s6198 + $0x4c] sm:$0xf]
    %v6219 = vld [vmem:[%s6198 + $0x50] sm:$0xf]
    %v6220 = vld [vmem:[%s6198 + $0x54] sm:$0xf]
    %v6221 = vld [vmem:[%s6198 + $0x58] sm:$0xf]
    %v6222 = vld [vmem:[%s6198 + $0x5c] sm:$0xf]
    %v6223 = vunpack.c.l.bf16 %v6199
    %v6224 = vunpack.c.l.bf16 %v6200
    %v6225 = vunpack.c.l.bf16 %v6201
    %v6226 = vunpack.c.l.bf16 %v6202
    %v6227 = vunpack.c.l.bf16 %v6203
    %v6228 = vunpack.c.l.bf16 %v6204
    %v6229 = vunpack.c.l.bf16 %v6205
    %v6230 = vunpack.c.l.bf16 %v6206
    %v6231 = vunpack.c.l.bf16 %v6207
    %v6232 = vunpack.c.l.bf16 %v6208
    %v6233 = vunpack.c.l.bf16 %v6209
    %v6234 = vunpack.c.l.bf16 %v6210
    %v6235 = vunpack.c.l.bf16 %v6211
    %v6236 = vunpack.c.l.bf16 %v6212
    %v6237 = vunpack.c.l.bf16 %v6213
    %v6238 = vunpack.c.l.bf16 %v6214
    %v6239 = vunpack.c.l.bf16 %v6215
    %v6240 = vunpack.c.l.bf16 %v6216
    %v6241 = vunpack.c.l.bf16 %v6217
    %v6242 = vunpack.c.l.bf16 %v6218
    %v6243 = vunpack.c.l.bf16 %v6219
    %v6244 = vunpack.c.l.bf16 %v6220
    %v6245 = vunpack.c.l.bf16 %v6221
    %v6246 = vunpack.c.l.bf16 %v6222
    %v6247 = vmul.f32 %v5906, %v6223
    %v6248 = vmul.f32 %v5907, %v6224
    %v6249 = vmul.f32 %v5908, %v6225
    %v6250 = vmul.f32 %v5909, %v6226
    %v6251 = vmul.f32 %v5910, %v6227
    %v6252 = vmul.f32 %v5911, %v6228
    %v6253 = vmul.f32 %v5912, %v6229
    %v6254 = vmul.f32 %v5913, %v6230
    %v6255 = vmul.f32 %v5914, %v6231
    %v6256 = vmul.f32 %v5915, %v6232
    %v6257 = vmul.f32 %v5916, %v6233
    %v6258 = vmul.f32 %v5917, %v6234
    %v6259 = vmul.f32 %v5918, %v6235
    %v6260 = vmul.f32 %v5919, %v6236
    %v6261 = vmul.f32 %v5920, %v6237
    %v6262 = vmul.f32 %v5921, %v6238
    %v6263 = vmul.f32 %v5922, %v6239
    %v6264 = vmul.f32 %v5923, %v6240
    %v6265 = vmul.f32 %v5924, %v6241
    %v6266 = vmul.f32 %v5925, %v6242
    %v6267 = vmul.f32 %v5926, %v6243
    %v6268 = vmul.f32 %v5927, %v6244
    %v6269 = vmul.f32 %v5928, %v6245
    %v6270 = vmul.f32 %v5929, %v6246
    %v6271 = vsel %vm4880, %v6247, 0.0
    %v6272 = vsel %vm4880, %v6248, 0.0
    %v6273 = vadd.f32 %v6271, %v6272
    %v6274 = vsel %vm4880, %v6249, 0.0
    %v6275 = vadd.f32 %v6273, %v6274
    %v6276 = vsel %vm4880, %v6250, 0.0
    %v6277 = vadd.f32 %v6275, %v6276
    %v6278 = vsel %vm4880, %v6251, 0.0
    %v6279 = vadd.f32 %v6277, %v6278
    %v6280 = vsel %vm4880, %v6252, 0.0
    %v6281 = vadd.f32 %v6279, %v6280
    %v6282 = vsel %vm4880, %v6253, 0.0
    %v6283 = vadd.f32 %v6281, %v6282
    %v6284 = vsel %vm4880, %v6254, 0.0
    %v6285 = vadd.f32 %v6283, %v6284
    %v6286 = vsel %vm4880, %v6255, 0.0
    %v6287 = vadd.f32 %v6285, %v6286
    %v6288 = vsel %vm4880, %v6256, 0.0
    %v6289 = vadd.f32 %v6287, %v6288
    %v6290 = vsel %vm4880, %v6257, 0.0
    %v6291 = vadd.f32 %v6289, %v6290
    %v6292 = vsel %vm4880, %v6258, 0.0
    %v6293 = vadd.f32 %v6291, %v6292
    %v6294 = vsel %vm4880, %v6259, 0.0
    %v6295 = vadd.f32 %v6293, %v6294
    %v6296 = vsel %vm4880, %v6260, 0.0
    %v6297 = vadd.f32 %v6295, %v6296
    %v6298 = vsel %vm4880, %v6261, 0.0
    %v6299 = vadd.f32 %v6297, %v6298
    %v6300 = vsel %vm4880, %v6262, 0.0
    %v6301 = vadd.f32 %v6299, %v6300
    %v6302 = vsel %vm4880, %v6263, 0.0
    %v6303 = vadd.f32 %v6301, %v6302
    %v6304 = vsel %vm4880, %v6264, 0.0
    %v6305 = vadd.f32 %v6303, %v6304
    %v6306 = vsel %vm4880, %v6265, 0.0
    %v6307 = vadd.f32 %v6305, %v6306
    %v6308 = vsel %vm4880, %v6266, 0.0
    %v6309 = vadd.f32 %v6307, %v6308
    %v6310 = vsel %vm4880, %v6267, 0.0
    %v6311 = vadd.f32 %v6309, %v6310
    %v6312 = vsel %vm4880, %v6268, 0.0
    %v6313 = vadd.f32 %v6311, %v6312
    %v6314 = vsel %vm4880, %v6269, 0.0
    %v6315 = vadd.f32 %v6313, %v6314
    %v6316 = vsel %vm4880, %v6270, 0.0
    %v6317 = vadd.f32 %v6315, %v6316
    %6318 = vadd.xlane.f32.xlu0 %v6317
    %v6319 = vpop.xlane.xlu0 %6318
    %v6320 = vrot.slane %v6319, 4
    %v6321 = vadd.f32 %v6319, %v6320
    %v6322 = vrot.slane %v6321, 2
    %v6323 = vadd.f32 %v6321, %v6322
    %v6324 = vrot.slane %v6323, 1
    %v6325 = vadd.f32 %v6323, %v6324
    %s6326 = vtos %v6325
    %vm6327 = vcmp.eq.s32.totalorder %v5932, 2
    %v6328 = vstv %s6326
    %v6329 = vsel %vm6327, %v6328, 0.0
    %v6330 = vadd.f32 %v6197, %v6329
    %s6331 = scalar_lea.vmem %s7, 288
    %v6332 = vld [vmem:[%s6331] sm:$0xf]
    %v6333 = vld [vmem:[%s6331 + $0x4] sm:$0xf]
    %v6334 = vld [vmem:[%s6331 + $0x8] sm:$0xf]
    %v6335 = vld [vmem:[%s6331 + $0xc] sm:$0xf]
    %v6336 = vld [vmem:[%s6331 + $0x10] sm:$0xf]
    %v6337 = vld [vmem:[%s6331 + $0x14] sm:$0xf]
    %v6338 = vld [vmem:[%s6331 + $0x18] sm:$0xf]
    %v6339 = vld [vmem:[%s6331 + $0x1c] sm:$0xf]
    %v6340 = vld [vmem:[%s6331 + $0x20] sm:$0xf]
    %v6341 = vld [vmem:[%s6331 + $0x24] sm:$0xf]
    %v6342 = vld [vmem:[%s6331 + $0x28] sm:$0xf]
    %v6343 = vld [vmem:[%s6331 + $0x2c] sm:$0xf]
    %v6344 = vld [vmem:[%s6331 + $0x30] sm:$0xf]
    %v6345 = vld [vmem:[%s6331 + $0x34] sm:$0xf]
    %v6346 = vld [vmem:[%s6331 + $0x38] sm:$0xf]
    %v6347 = vld [vmem:[%s6331 + $0x3c] sm:$0xf]
    %v6348 = vld [vmem:[%s6331 + $0x40] sm:$0xf]
    %v6349 = vld [vmem:[%s6331 + $0x44] sm:$0xf]
    %v6350 = vld [vmem:[%s6331 + $0x48] sm:$0xf]
    %v6351 = vld [vmem:[%s6331 + $0x4c] sm:$0xf]
    %v6352 = vld [vmem:[%s6331 + $0x50] sm:$0xf]
    %v6353 = vld [vmem:[%s6331 + $0x54] sm:$0xf]
    %v6354 = vld [vmem:[%s6331 + $0x58] sm:$0xf]
    %v6355 = vld [vmem:[%s6331 + $0x5c] sm:$0xf]
    %v6356 = vunpack.c.l.bf16 %v6332
    %v6357 = vunpack.c.l.bf16 %v6333
    %v6358 = vunpack.c.l.bf16 %v6334
    %v6359 = vunpack.c.l.bf16 %v6335
    %v6360 = vunpack.c.l.bf16 %v6336
    %v6361 = vunpack.c.l.bf16 %v6337
    %v6362 = vunpack.c.l.bf16 %v6338
    %v6363 = vunpack.c.l.bf16 %v6339
    %v6364 = vunpack.c.l.bf16 %v6340
    %v6365 = vunpack.c.l.bf16 %v6341
    %v6366 = vunpack.c.l.bf16 %v6342
    %v6367 = vunpack.c.l.bf16 %v6343
    %v6368 = vunpack.c.l.bf16 %v6344
    %v6369 = vunpack.c.l.bf16 %v6345
    %v6370 = vunpack.c.l.bf16 %v6346
    %v6371 = vunpack.c.l.bf16 %v6347
    %v6372 = vunpack.c.l.bf16 %v6348
    %v6373 = vunpack.c.l.bf16 %v6349
    %v6374 = vunpack.c.l.bf16 %v6350
    %v6375 = vunpack.c.l.bf16 %v6351
    %v6376 = vunpack.c.l.bf16 %v6352
    %v6377 = vunpack.c.l.bf16 %v6353
    %v6378 = vunpack.c.l.bf16 %v6354
    %v6379 = vunpack.c.l.bf16 %v6355
    %v6380 = vmul.f32 %v5906, %v6356
    %v6381 = vmul.f32 %v5907, %v6357
    %v6382 = vmul.f32 %v5908, %v6358
    %v6383 = vmul.f32 %v5909, %v6359
    %v6384 = vmul.f32 %v5910, %v6360
    %v6385 = vmul.f32 %v5911, %v6361
    %v6386 = vmul.f32 %v5912, %v6362
    %v6387 = vmul.f32 %v5913, %v6363
    %v6388 = vmul.f32 %v5914, %v6364
    %v6389 = vmul.f32 %v5915, %v6365
    %v6390 = vmul.f32 %v5916, %v6366
    %v6391 = vmul.f32 %v5917, %v6367
    %v6392 = vmul.f32 %v5918, %v6368
    %v6393 = vmul.f32 %v5919, %v6369
    %v6394 = vmul.f32 %v5920, %v6370
    %v6395 = vmul.f32 %v5921, %v6371
    %v6396 = vmul.f32 %v5922, %v6372
    %v6397 = vmul.f32 %v5923, %v6373
    %v6398 = vmul.f32 %v5924, %v6374
    %v6399 = vmul.f32 %v5925, %v6375
    %v6400 = vmul.f32 %v5926, %v6376
    %v6401 = vmul.f32 %v5927, %v6377
    %v6402 = vmul.f32 %v5928, %v6378
    %v6403 = vmul.f32 %v5929, %v6379
    %v6404 = vsel %vm4880, %v6380, 0.0
    %v6405 = vsel %vm4880, %v6381, 0.0
    %v6406 = vadd.f32 %v6404, %v6405
    %v6407 = vsel %vm4880, %v6382, 0.0
    %v6408 = vadd.f32 %v6406, %v6407
    %v6409 = vsel %vm4880, %v6383, 0.0
    %v6410 = vadd.f32 %v6408, %v6409
    %v6411 = vsel %vm4880, %v6384, 0.0
    %v6412 = vadd.f32 %v6410, %v6411
    %v6413 = vsel %vm4880, %v6385, 0.0
    %v6414 = vadd.f32 %v6412, %v6413
    %v6415 = vsel %vm4880, %v6386, 0.0
    %v6416 = vadd.f32 %v6414, %v6415
    %v6417 = vsel %vm4880, %v6387, 0.0
    %v6418 = vadd.f32 %v6416, %v6417
    %v6419 = vsel %vm4880, %v6388, 0.0
    %v6420 = vadd.f32 %v6418, %v6419
    %v6421 = vsel %vm4880, %v6389, 0.0
    %v6422 = vadd.f32 %v6420, %v6421
    %v6423 = vsel %vm4880, %v6390, 0.0
    %v6424 = vadd.f32 %v6422, %v6423
    %v6425 = vsel %vm4880, %v6391, 0.0
    %v6426 = vadd.f32 %v6424, %v6425
    %v6427 = vsel %vm4880, %v6392, 0.0
    %v6428 = vadd.f32 %v6426, %v6427
    %v6429 = vsel %vm4880, %v6393, 0.0
    %v6430 = vadd.f32 %v6428, %v6429
    %v6431 = vsel %vm4880, %v6394, 0.0
    %v6432 = vadd.f32 %v6430, %v6431
    %v6433 = vsel %vm4880, %v6395, 0.0
    %v6434 = vadd.f32 %v6432, %v6433
    %v6435 = vsel %vm4880, %v6396, 0.0
    %v6436 = vadd.f32 %v6434, %v6435
    %v6437 = vsel %vm4880, %v6397, 0.0
    %v6438 = vadd.f32 %v6436, %v6437
    %v6439 = vsel %vm4880, %v6398, 0.0
    %v6440 = vadd.f32 %v6438, %v6439
    %v6441 = vsel %vm4880, %v6399, 0.0
    %v6442 = vadd.f32 %v6440, %v6441
    %v6443 = vsel %vm4880, %v6400, 0.0
    %v6444 = vadd.f32 %v6442, %v6443
    %v6445 = vsel %vm4880, %v6401, 0.0
    %v6446 = vadd.f32 %v6444, %v6445
    %v6447 = vsel %vm4880, %v6402, 0.0
    %v6448 = vadd.f32 %v6446, %v6447
    %v6449 = vsel %vm4880, %v6403, 0.0
    %v6450 = vadd.f32 %v6448, %v6449
    %6451 = vadd.xlane.f32.xlu0 %v6450
    %v6452 = vpop.xlane.xlu0 %6451
    %v6453 = vrot.slane %v6452, 4
    %v6454 = vadd.f32 %v6452, %v6453
    %v6455 = vrot.slane %v6454, 2
    %v6456 = vadd.f32 %v6454, %v6455
    %v6457 = vrot.slane %v6456, 1
    %v6458 = vadd.f32 %v6456, %v6457
    %s6459 = vtos %v6458
    %vm6460 = vcmp.eq.s32.totalorder %v5932, 3
    %v6461 = vstv %s6459
    %v6462 = vsel %vm6460, %v6461, 0.0
    %v6463 = vadd.f32 %v6330, %v6462
    %s6464 = scalar_lea.vmem %s7, 384
    %v6465 = vld [vmem:[%s6464] sm:$0xf]
    %v6466 = vld [vmem:[%s6464 + $0x4] sm:$0xf]
    %v6467 = vld [vmem:[%s6464 + $0x8] sm:$0xf]
    %v6468 = vld [vmem:[%s6464 + $0xc] sm:$0xf]
    %v6469 = vld [vmem:[%s6464 + $0x10] sm:$0xf]
    %v6470 = vld [vmem:[%s6464 + $0x14] sm:$0xf]
    %v6471 = vld [vmem:[%s6464 + $0x18] sm:$0xf]
    %v6472 = vld [vmem:[%s6464 + $0x1c] sm:$0xf]
    %v6473 = vld [vmem:[%s6464 + $0x20] sm:$0xf]
    %v6474 = vld [vmem:[%s6464 + $0x24] sm:$0xf]
    %v6475 = vld [vmem:[%s6464 + $0x28] sm:$0xf]
    %v6476 = vld [vmem:[%s6464 + $0x2c] sm:$0xf]
    %v6477 = vld [vmem:[%s6464 + $0x30] sm:$0xf]
    %v6478 = vld [vmem:[%s6464 + $0x34] sm:$0xf]
    %v6479 = vld [vmem:[%s6464 + $0x38] sm:$0xf]
    %v6480 = vld [vmem:[%s6464 + $0x3c] sm:$0xf]
    %v6481 = vld [vmem:[%s6464 + $0x40] sm:$0xf]
    %v6482 = vld [vmem:[%s6464 + $0x44] sm:$0xf]
    %v6483 = vld [vmem:[%s6464 + $0x48] sm:$0xf]
    %v6484 = vld [vmem:[%s6464 + $0x4c] sm:$0xf]
    %v6485 = vld [vmem:[%s6464 + $0x50] sm:$0xf]
    %v6486 = vld [vmem:[%s6464 + $0x54] sm:$0xf]
    %v6487 = vld [vmem:[%s6464 + $0x58] sm:$0xf]
    %v6488 = vld [vmem:[%s6464 + $0x5c] sm:$0xf]
    %v6489 = vunpack.c.l.bf16 %v6465
    %v6490 = vunpack.c.l.bf16 %v6466
    %v6491 = vunpack.c.l.bf16 %v6467
    %v6492 = vunpack.c.l.bf16 %v6468
    %v6493 = vunpack.c.l.bf16 %v6469
    %v6494 = vunpack.c.l.bf16 %v6470
    %v6495 = vunpack.c.l.bf16 %v6471
    %v6496 = vunpack.c.l.bf16 %v6472
    %v6497 = vunpack.c.l.bf16 %v6473
    %v6498 = vunpack.c.l.bf16 %v6474
    %v6499 = vunpack.c.l.bf16 %v6475
    %v6500 = vunpack.c.l.bf16 %v6476
    %v6501 = vunpack.c.l.bf16 %v6477
    %v6502 = vunpack.c.l.bf16 %v6478
    %v6503 = vunpack.c.l.bf16 %v6479
    %v6504 = vunpack.c.l.bf16 %v6480
    %v6505 = vunpack.c.l.bf16 %v6481
    %v6506 = vunpack.c.l.bf16 %v6482
    %v6507 = vunpack.c.l.bf16 %v6483
    %v6508 = vunpack.c.l.bf16 %v6484
    %v6509 = vunpack.c.l.bf16 %v6485
    %v6510 = vunpack.c.l.bf16 %v6486
    %v6511 = vunpack.c.l.bf16 %v6487
    %v6512 = vunpack.c.l.bf16 %v6488
    %v6513 = vmul.f32 %v5906, %v6489
    %v6514 = vmul.f32 %v5907, %v6490
    %v6515 = vmul.f32 %v5908, %v6491
    %v6516 = vmul.f32 %v5909, %v6492
    %v6517 = vmul.f32 %v5910, %v6493
    %v6518 = vmul.f32 %v5911, %v6494
    %v6519 = vmul.f32 %v5912, %v6495
    %v6520 = vmul.f32 %v5913, %v6496
    %v6521 = vmul.f32 %v5914, %v6497
    %v6522 = vmul.f32 %v5915, %v6498
    %v6523 = vmul.f32 %v5916, %v6499
    %v6524 = vmul.f32 %v5917, %v6500
    %v6525 = vmul.f32 %v5918, %v6501
    %v6526 = vmul.f32 %v5919, %v6502
    %v6527 = vmul.f32 %v5920, %v6503
    %v6528 = vmul.f32 %v5921, %v6504
    %v6529 = vmul.f32 %v5922, %v6505
    %v6530 = vmul.f32 %v5923, %v6506
    %v6531 = vmul.f32 %v5924, %v6507
    %v6532 = vmul.f32 %v5925, %v6508
    %v6533 = vmul.f32 %v5926, %v6509
    %v6534 = vmul.f32 %v5927, %v6510
    %v6535 = vmul.f32 %v5928, %v6511
    %v6536 = vmul.f32 %v5929, %v6512
    %v6537 = vsel %vm4880, %v6513, 0.0
    %v6538 = vsel %vm4880, %v6514, 0.0
    %v6539 = vadd.f32 %v6537, %v6538
    %v6540 = vsel %vm4880, %v6515, 0.0
    %v6541 = vadd.f32 %v6539, %v6540
    %v6542 = vsel %vm4880, %v6516, 0.0
    %v6543 = vadd.f32 %v6541, %v6542
    %v6544 = vsel %vm4880, %v6517, 0.0
    %v6545 = vadd.f32 %v6543, %v6544
    %v6546 = vsel %vm4880, %v6518, 0.0
    %v6547 = vadd.f32 %v6545, %v6546
    %v6548 = vsel %vm4880, %v6519, 0.0
    %v6549 = vadd.f32 %v6547, %v6548
    %v6550 = vsel %vm4880, %v6520, 0.0
    %v6551 = vadd.f32 %v6549, %v6550
    %v6552 = vsel %vm4880, %v6521, 0.0
    %v6553 = vadd.f32 %v6551, %v6552
    %v6554 = vsel %vm4880, %v6522, 0.0
    %v6555 = vadd.f32 %v6553, %v6554
    %v6556 = vsel %vm4880, %v6523, 0.0
    %v6557 = vadd.f32 %v6555, %v6556
    %v6558 = vsel %vm4880, %v6524, 0.0
    %v6559 = vadd.f32 %v6557, %v6558
    %v6560 = vsel %vm4880, %v6525, 0.0
    %v6561 = vadd.f32 %v6559, %v6560
    %v6562 = vsel %vm4880, %v6526, 0.0
    %v6563 = vadd.f32 %v6561, %v6562
    %v6564 = vsel %vm4880, %v6527, 0.0
    %v6565 = vadd.f32 %v6563, %v6564
    %v6566 = vsel %vm4880, %v6528, 0.0
    %v6567 = vadd.f32 %v6565, %v6566
    %v6568 = vsel %vm4880, %v6529, 0.0
    %v6569 = vadd.f32 %v6567, %v6568
    %v6570 = vsel %vm4880, %v6530, 0.0
    %v6571 = vadd.f32 %v6569, %v6570
    %v6572 = vsel %vm4880, %v6531, 0.0
    %v6573 = vadd.f32 %v6571, %v6572
    %v6574 = vsel %vm4880, %v6532, 0.0
    %v6575 = vadd.f32 %v6573, %v6574
    %v6576 = vsel %vm4880, %v6533, 0.0
    %v6577 = vadd.f32 %v6575, %v6576
    %v6578 = vsel %vm4880, %v6534, 0.0
    %v6579 = vadd.f32 %v6577, %v6578
    %v6580 = vsel %vm4880, %v6535, 0.0
    %v6581 = vadd.f32 %v6579, %v6580
    %v6582 = vsel %vm4880, %v6536, 0.0
    %v6583 = vadd.f32 %v6581, %v6582
    %6584 = vadd.xlane.f32.xlu0 %v6583
    %v6585 = vpop.xlane.xlu0 %6584
    %v6586 = vrot.slane %v6585, 4
    %v6587 = vadd.f32 %v6585, %v6586
    %v6588 = vrot.slane %v6587, 2
    %v6589 = vadd.f32 %v6587, %v6588
    %v6590 = vrot.slane %v6589, 1
    %v6591 = vadd.f32 %v6589, %v6590
    %s6592 = vtos %v6591
    %vm6593 = vcmp.eq.s32.totalorder %v5932, 4
    %v6594 = vstv %s6592
    %v6595 = vsel %vm6593, %v6594, 0.0
    %v6596 = vadd.f32 %v6463, %v6595
    %vm6597 = vcmask 32768
    %v6598 = vsel %vm6597, %v6596, -inf
    %6599 = vmax.xlane.f32.xlu0 %v6598
    %v6600 = vpop.xlane.xlu0 %6599
    %v6601 = vsub.f32 %v6596, %v6600
    %v6602 = vmul.f32 %v6601, 1.442695
    %v6603 = vpow.pop %v6602
    %v6604 = vsel %vm6597, %v6603, 0.0
    %6605 = vadd.xlane.f32.xlu0 %v6604
    %v6606 = vpop.xlane.xlu0 %6605
    %v6607 = vrcp.pop %v6606
    %v6608 = vmul.f32 %v6603, %v6607
    %6609 = vst.msk [vmem:[#allocation4] sm:$0x1] %vm6597, %v6608
    %6610 = vst.msk [vmem:[#allocation6] sm:$0x1] %vm6597, %v6596
    // Predicated region
    $region38: #{actor_net_forward.1} parent=1 // pred_check
      _
    $region39: #{actor_net_forward.1} parent=1 // pred_check_branch
      %6612 = sbr.rel (0) target = $region41
    $region40: #{actor_net_forward.1} parent=1 // pred_region
      %s6614 = ssub.s32 16, 16
      %6615 = vsyncadd [#allocation5], %s6614
      %s6617 = sshll.u32 [#allocation4], 4
      %s6618 = int_to_ptr.vmem [resolvable:$true] %s6617
      %6620 = dma.vmem_to_hbm [thread:$0]  %s6618, 16, %s9, [#allocation5]
    $region41: #{actor_net_forward.1} parent=1 // pred_fallthru
      _
    // Predicated region
    $region42: #{actor_net_forward.1} parent=1 // pred_check
      _
    $region43: #{actor_net_forward.1} parent=1 // pred_check_branch
      %6622 = sbr.rel (0) target = $region45
    $region44: #{actor_net_forward.1} parent=1 // pred_region
      %s6624 = ssub.s32 16, 16
      %6625 = vsyncadd [#allocation7], %s6624
      %s6627 = sshll.u32 [#allocation6], 4
      %s6628 = int_to_ptr.vmem [resolvable:$true] %s6627
      %6630 = dma.vmem_to_hbm [thread:$0]  %s6628, 16, %s10, [#allocation7]
    $region45: #{actor_net_forward.1} parent=1 // pred_fallthru
      _
    // Predicated region
    $region46: #{actor_net_forward.1} parent=1 // pred_check
      _
    $region47: #{actor_net_forward.1} parent=1 // pred_check_branch
      %6632 = sbr.rel (0) target = $region49
    $region48: #{actor_net_forward.1} parent=1 // pred_region
      %6633 = dma.done [#allocation5], 16
    $region49: #{actor_net_forward.1} parent=1 // pred_fallthru
      _
    // Predicated region
    $region50: #{actor_net_forward.1} parent=1 // pred_check
      _
    $region51: #{actor_net_forward.1} parent=1 // pred_check_branch
      %6635 = sbr.rel (0) target = $region53
    $region52: #{actor_net_forward.1} parent=1 // pred_region
      %6636 = dma.done [#allocation7], 16
    $region53: #{actor_net_forward.1} parent=1 // pred_fallthru
      _
    %6637 = vsyncpa [#allocation5], 1
    %6638 = vsyncpa [#allocation7], 1

</llo_original>
